<compile_context>
chip_gen: v5e
topology: v5e:2x2
jax: 0.10.0
libtpu: 0.0.40
codegen_flags: <defaults>
</compile_context>

<pallas_src>
import functools
import math

import jax
import jax.numpy as jnp
from jax.experimental import pallas as pl
from jax.experimental.pallas import tpu as pltpu

# ----------------------------- config (small) --------------------------------
EMBED_DIM     = 32     # CLIP joint embedding dim
IMAGE_RES     = 16
VISION_LAYERS = 2      # int -> VisionTransformer branch of CLIP.__init__
VISION_WIDTH  = 64
VISION_PATCH  = 8
VISION_HEADS  = max(VISION_WIDTH // 64, 1)   # = 1 (matches `vision_width // 64`)
CONTEXT_LEN   = 8
VOCAB_SIZE    = 50
T_WIDTH       = 32
T_HEADS       = 2
T_LAYERS      = 2

LN_EPS  = 1e-5
NEG_INF = -1e9


# ----------------------------- Pallas kernels --------------------------------
def _ln(x, g, b, eps=LN_EPS):
    mean = jnp.mean(x, axis=-1, keepdims=True)
    var = jnp.mean((x - mean) ** 2, axis=-1, keepdims=True)
    return (x - mean) * jax.lax.rsqrt(var + eps) * g + b


def _tower_kernel(*refs, layers, heads, width, use_pre_ln):
    """Fused transformer tower.

    refs = [x (R,W), mask (R,R), (pre_g, pre_b)?,
            per layer: ln1_g, ln1_b, qkv_w, qkv_b, proj_w, proj_b,
                       ln2_g, ln2_b, fc1_w, fc1_b, fc2_w, fc2_b,
            post_g, post_b, out_proj_w, o_ref (R,E)]
    All intermediates stay in VMEM; only o_ref hits HBM.
    """
    refs = list(refs)
    o_ref = refs.pop()
    it = iter(refs)
    x = next(it)[...]                 # [R, W] f32
    mask = next(it)[...]              # [R, R] additive mask (batch-block / causal)

    if use_pre_ln:
        pre_g = next(it)[...]
        pre_b = next(it)[...]
        x = _ln(x, pre_g, pre_b)

    dh = width // heads
    scale = 1.0 / math.sqrt(dh)

    for _ in range(layers):
        ln1_g = next(it)[...]; ln1_b = next(it)[...]
        qkv_w = next(it)[...]; qkv_b = next(it)[...]
        pw    = next(it)[...]; pb    = next(it)[...]
        ln2_g = next(it)[...]; ln2_b = next(it)[...]
        f1w   = next(it)[...]; f1b   = next(it)[...]
        f2w   = next(it)[...]; f2b   = next(it)[...]

        # --- attention -------------------------------------------------------
        h = _ln(x, ln1_g, ln1_b)
        qkv = jnp.dot(h, qkv_w, preferred_element_type=jnp.float32) + qkv_b  # [R,3W]
        head_outs = []
        for hh in range(heads):
            q = qkv[:, hh * dh:(hh + 1) * dh]
            k = qkv[:, width + hh * dh: width + (hh + 1) * dh]
            v = qkv[:, 2 * width + hh * dh: 2 * width + (hh + 1) * dh]
            # q @ k.T via dot_general (contract dim 1 of both) -> [R, R]
            s = jax.lax.dot_general(q, k, (((1,), (1,)), ((), ())),
                                    preferred_element_type=jnp.float32)
            s = s * scale + mask
            s = s - jnp.max(s, axis=-1, keepdims=True)
            p = jnp.exp(s)
            p = p * pl.reciprocal(jnp.sum(p, axis=-1, keepdims=True), approx=True)
            head_outs.append(jnp.dot(p, v, preferred_element_type=jnp.float32))
        attn = head_outs[0] if heads == 1 else jnp.concatenate(head_outs, axis=-1)
        x = x + jnp.dot(attn, pw, preferred_element_type=jnp.float32) + pb

        # --- MLP (quick_gelu) ------------------------------------------------
        h = _ln(x, ln2_g, ln2_b)
        h = jnp.dot(h, f1w, preferred_element_type=jnp.float32) + f1b
        h = h * (1.0 / (1.0 + jnp.exp(-1.702 * h)))       # quick_gelu
        x = x + jnp.dot(h, f2w, preferred_element_type=jnp.float32) + f2b

    post_g = next(it)[...]; post_b = next(it)[...]
    proj_w = next(it)[...]
    x = _ln(x, post_g, post_b)
    o_ref[...] = jnp.dot(x, proj_w,
                         preferred_element_type=jnp.float32).astype(o_ref.dtype)


def run_tower(x, mask, blocks, post_g, post_b, proj_w, *, heads, pre=None):
    """x: [R, W] -> [R, E]; whole tower in one pallas_call."""
    R, width = x.shape
    E = proj_w.shape[-1]
    args = [x, mask]
    if pre is not None:
        args += [pre[0].reshape(1, -1), pre[1].reshape(1, -1)]
    for blk in blocks:
        args += [blk["ln1_g"].reshape(1, -1), blk["ln1_b"].reshape(1, -1),
                 blk["qkv_w"],                blk["qkv_b"].reshape(1, -1),
                 blk["proj_w"],               blk["proj_b"].reshape(1, -1),
                 blk["ln2_g"].reshape(1, -1), blk["ln2_b"].reshape(1, -1),
                 blk["fc1_w"],                blk["fc1_b"].reshape(1, -1),
                 blk["fc2_w"],                blk["fc2_b"].reshape(1, -1)]
    args += [post_g.reshape(1, -1), post_b.reshape(1, -1), proj_w]

    kernel = functools.partial(_tower_kernel, layers=len(blocks), heads=heads,
                               width=width, use_pre_ln=pre is not None)
    # no grid: single invocation, full arrays in VMEM (all weights < ~300 KB).
    return pl.pallas_call(
        kernel,
        out_shape=jax.ShapeDtypeStruct((R, E), jnp.float32),
    )(*args)


def _linear_bias_kernel(x_ref, w_ref, b_ref, o_ref):
    o_ref[...] = (jnp.dot(x_ref[...], w_ref[...],
                          preferred_element_type=jnp.float32)
                  + b_ref[...]).astype(o_ref.dtype)


def linear_bias(x, w, b):
    M = x.shape[0]
    N = w.shape[1]
    return pl.pallas_call(
        _linear_bias_kernel,
        out_shape=jax.ShapeDtypeStruct((M, N), jnp.float32),
    )(x, w, b.reshape(1, N))


def _clip_logits_kernel(img_ref, txt_ref, scale_ref, li_ref):
    img = img_ref[...]
    txt = txt_ref[...]
    # matches torch x / x.norm(): no eps (upstream LN makes zero-norm impossible)
    img = img * jax.lax.rsqrt(jnp.sum(img * img, axis=-1, keepdims=True))
    txt = txt * jax.lax.rsqrt(jnp.sum(txt * txt, axis=-1, keepdims=True))
    scale = jnp.exp(scale_ref[0, 0])
    li_ref[...] = scale * jax.lax.dot_general(
        img, txt, (((1,), (1,)), ((), ())), preferred_element_type=jnp.float32)


def clip_logits(image_features, text_features, logit_scale):
    Bi = image_features.shape[0]
    Bt = text_features.shape[0]
    return pl.pallas_call(
        _clip_logits_kernel,
        out_shape=jax.ShapeDtypeStruct((Bi, Bt), jnp.float32),
    )(image_features, text_features, logit_scale)


# ----------------------------- model (glue) -----------------------------------
def build_mask(B, S, causal):
    """Additive mask over flattened [B*S, B*S] attention (block-diag per batch)."""
    batch_ids = jnp.repeat(jnp.arange(B), S)
    same = batch_ids[:, None] == batch_ids[None, :]
    if causal:
        pos = jnp.tile(jnp.arange(S), B)
        same = same & (pos[None, :] <= pos[:, None])
    return jnp.where(same, 0.0, NEG_INF).astype(jnp.float32)


def encode_image(image, vp):
    # image is NCHW like PyTorch; patch-embed conv (stride == kernel) == im2col matmul.
    B, C, H, W = image.shape
    P = VISION_PATCH
    hp, wp = H // P, W // P
    patches = image.reshape(B, C, hp, P, wp, P).transpose(0, 2, 4, 1, 3, 5)
    patches = patches.reshape(B * hp * wp, C * P * P)
    x = linear_bias(patches, vp["patch_w"], vp["patch_b"]).reshape(B, hp * wp, VISION_WIDTH)
    cls = jnp.broadcast_to(vp["cls_token"], (B, 1, VISION_WIDTH))
    x = jnp.concatenate([cls, x], axis=1) + vp["pos_embed"]
    S = x.shape[1]
    mask = build_mask(B, S, causal=False)
    feats = run_tower(x.reshape(B * S, VISION_WIDTH), mask, vp["blocks"],
                      vp["ln_post_g"], vp["ln_post_b"], vp["head_w"],
                      heads=VISION_HEADS, pre=(vp["ln_pre_g"], vp["ln_pre_b"]))
    # head (bias-free Linear) applied to every token in-kernel; select CLS here.
    return feats.reshape(B, S, EMBED_DIM)[:, 0, :]


def encode_text(text, tp):
    B, L = text.shape
    # TODO(synk): embedding gather kept in JAX (no clean small-vocab Pallas gather).
    x = tp["token_embedding"][text] + tp["positional_embedding"]
    mask = build_mask(B, L, causal=True)
    feats = run_tower(x.reshape(B * L, T_WIDTH), mask, tp["blocks"],
                      tp["ln_final_g"], tp["ln_final_b"], tp["text_projection"],
                      heads=T_HEADS, pre=None)
    feats = feats.reshape(B, L, EMBED_DIM)
    eot = jnp.argmax(text, axis=-1)          # CLIP's EOT = highest token id
    return feats[jnp.arange(B), eot]


@jax.jit
def clip_forward(image, text, params):
    image_features = encode_image(image, params["visual"])
    text_features = encode_text(text, params["text"])
    logits_per_image = clip_logits(image_features, text_features, params["logit_scale"])
    return logits_per_image, logits_per_image.T


# ----------------------------- parameter init ---------------------------------
def init_params(key):
    keys = iter(jax.random.split(key, 512))

    def nrm(shape, std):
        return std * jax.random.normal(next(keys), shape, jnp.float32)

    def make_block(width, attn_std, proj_std, fc_std):
        return dict(
            ln1_g=jnp.ones((width,), jnp.float32), ln1_b=jnp.zeros((width,), jnp.float32),
            qkv_w=nrm((width, 3 * width), attn_std), qkv_b=jnp.zeros((3 * width,), jnp.float32),
            proj_w=nrm((width, width), proj_std), proj_b=jnp.zeros((width,), jnp.float32),
            ln2_g=jnp.ones((width,), jnp.float32), ln2_b=jnp.zeros((width,), jnp.float32),
            fc1_w=nrm((width, 4 * width), fc_std), fc1_b=jnp.zeros((4 * width,), jnp.float32),
            fc2_w=nrm((4 * width, width), proj_std), fc2_b=jnp.zeros((width,), jnp.float32),
        )

    # vision tower (ViT) params
    v_std = VISION_WIDTH ** -0.5
    visual = dict(
        patch_w=nrm((3 * VISION_PATCH * VISION_PATCH, VISION_WIDTH), 0.02),
        patch_b=jnp.zeros((VISION_WIDTH,), jnp.float32),   # zeroed in initialize_parameters
        cls_token=nrm((1, 1, VISION_WIDTH), 0.02),
        pos_embed=nrm((1, (IMAGE_RES // VISION_PATCH) ** 2 + 1, VISION_WIDTH), 0.02),
        ln_pre_g=jnp.ones((VISION_WIDTH,), jnp.float32),
        ln_pre_b=jnp.zeros((VISION_WIDTH,), jnp.float32),
        blocks=[make_block(VISION_WIDTH, v_std,
                           v_std * (2 * VISION_LAYERS) ** -0.5,
                           (2 * VISION_WIDTH) ** -0.5) for _ in range(VISION_LAYERS)],
        ln_post_g=jnp.ones((VISION_WIDTH,), jnp.float32),
        ln_post_b=jnp.zeros((VISION_WIDTH,), jnp.float32),
        head_w=nrm((VISION_WIDTH, EMBED_DIM), v_std),       # Linear(..., bias=False)
    )

    # text tower params (stds per CLIP.initialize_parameters)
    proj_std = T_WIDTH ** -0.5 * (2 * T_LAYERS) ** -0.5
    attn_std = T_WIDTH ** -0.5
    fc_std = (2 * T_WIDTH) ** -0.5
    text = dict(
        token_embedding=nrm((VOCAB_SIZE, T_WIDTH), 0.02),
        positional_embedding=nrm((CONTEXT_LEN, T_WIDTH), 0.01),
        blocks=[make_block(T_WIDTH, attn_std, proj_std, fc_std) for _ in range(T_LAYERS)],
        ln_final_g=jnp.ones((T_WIDTH,), jnp.float32),
        ln_final_b=jnp.zeros((T_WIDTH,), jnp.float32),
        text_projection=nrm((T_WIDTH, EMBED_DIM), T_WIDTH ** -0.5),
    )

    logit_scale = jnp.full((1, 1), math.log(1.0 / 0.07), jnp.float32)
    return dict(visual=visual, text=text, logit_scale=logit_scale)


# ----------------------------- main -------------------------------------------
if __name__ == "__main__":
    root = jax.random.PRNGKey(0)
    k_param, k_img, k_txt = jax.random.split(root, 3)

    params = init_params(k_param)

    B = 2
    image = jax.random.normal(k_img, (B, 3, IMAGE_RES, IMAGE_RES), jnp.float32)
    text = jax.random.randint(k_txt, (B, CONTEXT_LEN), 1, VOCAB_SIZE, jnp.int32)

    logits_per_image, logits_per_text = clip_forward(image, text, params)
    jax.block_until_ready(logits_per_image)
    jax.block_until_ready(logits_per_text)

    assert logits_per_image.shape == (B, B)
    assert logits_per_text.shape == (B, B)
    assert bool(jnp.all(jnp.isfinite(logits_per_image)))
    print("KERNEL_OK")
</pallas_src>

<mosaic_0001>
module attributes {stable_mosaic.version = 11 : i64} {
  func.func @_linear_bias_kernel(%arg0: memref<8x192xf32, #tpu.memory_space<vmem>>, %arg1: memref<192x64xf32, #tpu.memory_space<vmem>>, %arg2: memref<1x64xf32, #tpu.memory_space<vmem>>, %arg3: memref<8x64xf32, #tpu.memory_space<vmem>>) attributes {dimension_semantics = [], scalar_prefetch = 0 : i64, scratch_operands = 0 : i64, tpu.core_type = #tpu.core_type<tc>} {
    %c0 = arith.constant 0 : index
    %c0_0 = arith.constant 0 : index
    %0 = vector.load %arg0[%c0, %c0_0] : memref<8x192xf32, #tpu.memory_space<vmem>>, vector<8x192xf32>
    %c0_1 = arith.constant 0 : index
    %c0_2 = arith.constant 0 : index
    %1 = vector.load %arg1[%c0_1, %c0_2] : memref<192x64xf32, #tpu.memory_space<vmem>>, vector<192x64xf32>
    %cst = arith.constant dense<0.000000e+00> : vector<8x64xf32>
    %2 = tpu.matmul %0, %1, %cst {dimension_numbers = #tpu.dot_dimension_numbers<[1], [0], [0], [1], [0, 0, 1, 1], [], []>} : vector<8x192xf32>, vector<192x64xf32>, vector<8x64xf32> -> vector<8x64xf32>
    %c0_3 = arith.constant 0 : index
    %c0_4 = arith.constant 0 : index
    %3 = vector.load %arg2[%c0_3, %c0_4] : memref<1x64xf32, #tpu.memory_space<vmem>>, vector<1x64xf32>
    %4 = vector.broadcast %3 : vector<1x64xf32> to vector<8x64xf32>
    %5 = arith.addf %2, %4 : vector<8x64xf32>
    %c0_5 = arith.constant 0 : index
    %c0_6 = arith.constant 0 : index
    %6 = vector.load %arg3[%c0_5, %c0_6] : memref<8x64xf32, #tpu.memory_space<vmem>>, vector<8x64xf32>
    tpu.vector_store %arg3[%c0_5, %c0_6], %5 {strides = array<i32>} : memref<8x64xf32, #tpu.memory_space<vmem>>, vector<8x64xf32>,
    return
  }
}

module attributes {stable_mosaic.version = 11 : i64} {
  func.func @_tower_kernel(%arg0: memref<10x64xf32, #tpu.memory_space<vmem>>, %arg1: memref<10x10xf32, #tpu.memory_space<vmem>>, %arg2: memref<1x64xf32, #tpu.memory_space<vmem>>, %arg3: memref<1x64xf32, #tpu.memory_space<vmem>>, %arg4: memref<1x64xf32, #tpu.memory_space<vmem>>, %arg5: memref<1x64xf32, #tpu.memory_space<vmem>>, %arg6: memref<64x192xf32, #tpu.memory_space<vmem>>, %arg7: memref<1x192xf32, #tpu.memory_space<vmem>>, %arg8: memref<64x64xf32, #tpu.memory_space<vmem>>, %arg9: memref<1x64xf32, #tpu.memory_space<vmem>>, %arg10: memref<1x64xf32, #tpu.memory_space<vmem>>, %arg11: memref<1x64xf32, #tpu.memory_space<vmem>>, %arg12: memref<64x256xf32, #tpu.memory_space<vmem>>, %arg13: memref<1x256xf32, #tpu.memory_space<vmem>>, %arg14: memref<256x64xf32, #tpu.memory_space<vmem>>, %arg15: memref<1x64xf32, #tpu.memory_space<vmem>>, %arg16: memref<1x64xf32, #tpu.memory_space<vmem>>, %arg17: memref<1x64xf32, #tpu.memory_space<vmem>>, %arg18: memref<64x192xf32, #tpu.memory_space<vmem>>, %arg19: memref<1x192xf32, #tpu.memory_space<vmem>>, %arg20: memref<64x64xf32, #tpu.memory_space<vmem>>, %arg21: memref<1x64xf32, #tpu.memory_space<vmem>>, %arg22: memref<1x64xf32, #tpu.memory_space<vmem>>, %arg23: memref<1x64xf32, #tpu.memory_space<vmem>>, %arg24: memref<64x256xf32, #tpu.memory_space<vmem>>, %arg25: memref<1x256xf32, #tpu.memory_space<vmem>>, %arg26: memref<256x64xf32, #tpu.memory_space<vmem>>, %arg27: memref<1x64xf32, #tpu.memory_space<vmem>>, %arg28: memref<1x64xf32, #tpu.memory_space<vmem>>, %arg29: memref<1x64xf32, #tpu.memory_space<vmem>>, %arg30: memref<64x32xf32, #tpu.memory_space<vmem>>, %arg31: memref<10x32xf32, #tpu.memory_space<vmem>>) attributes {dimension_semantics = [], scalar_prefetch = 0 : i64, scratch_operands = 0 : i64, tpu.core_type = #tpu.core_type<tc>} {
    %c0 = arith.constant 0 : index
    %c0_0 = arith.constant 0 : index
    %0 = vector.load %arg0[%c0, %c0_0] : memref<10x64xf32, #tpu.memory_space<vmem>>, vector<10x64xf32>
    %c0_1 = arith.constant 0 : index
    %c0_2 = arith.constant 0 : index
    %1 = vector.load %arg1[%c0_1, %c0_2] : memref<10x10xf32, #tpu.memory_space<vmem>>, vector<10x10xf32>
    %c0_3 = arith.constant 0 : index
    %c0_4 = arith.constant 0 : index
    %2 = vector.load %arg2[%c0_3, %c0_4] : memref<1x64xf32, #tpu.memory_space<vmem>>, vector<1x64xf32>
    %c0_5 = arith.constant 0 : index
    %c0_6 = arith.constant 0 : index
    %3 = vector.load %arg3[%c0_5, %c0_6] : memref<1x64xf32, #tpu.memory_space<vmem>>, vector<1x64xf32>
    %cst = arith.constant dense<0.000000e+00> : vector<10xf32>
    %4 = vector.multi_reduction <add>, %0, %cst [1] : vector<10x64xf32> to vector<10xf32>
    %5 = vector.shape_cast %4 : vector<10xf32> to vector<10x1xf32>
    %cst_7 = arith.constant 6.400000e+01 : f32
    %6 = vector.broadcast %cst_7 : f32 to vector<10x1xf32>
    %7 = arith.divf %5, %6 : vector<10x1xf32>
    %8 = vector.broadcast %7 : vector<10x1xf32> to vector<10x64xf32>
    %9 = arith.subf %0, %8 : vector<10x64xf32>
    %10 = arith.mulf %9, %9 : vector<10x64xf32>
    %cst_8 = arith.constant dense<0.000000e+00> : vector<10xf32>
    %11 = vector.multi_reduction <add>, %10, %cst_8 [1] : vector<10x64xf32> to vector<10xf32>
    %12 = vector.shape_cast %11 : vector<10xf32> to vector<10x1xf32>
    %cst_9 = arith.constant 6.400000e+01 : f32
    %13 = vector.broadcast %cst_9 : f32 to vector<10x1xf32>
    %14 = arith.divf %12, %13 : vector<10x1xf32>
    %15 = vector.broadcast %7 : vector<10x1xf32> to vector<10x64xf32>
    %16 = arith.subf %0, %15 : vector<10x64xf32>
    %cst_10 = arith.constant 9.99999974E-6 : f32
    %17 = vector.broadcast %cst_10 : f32 to vector<10x1xf32>
    %18 = arith.addf %14, %17 : vector<10x1xf32>
    %19 = math.rsqrt %18 : vector<10x1xf32>
    %20 = vector.broadcast %19 : vector<10x1xf32> to vector<10x64xf32>
    %21 = arith.mulf %16, %20 : vector<10x64xf32>
    %22 = vector.broadcast %2 : vector<1x64xf32> to vector<10x64xf32>
    %23 = arith.mulf %21, %22 : vector<10x64xf32>
    %24 = vector.broadcast %3 : vector<1x64xf32> to vector<10x64xf32>
    %25 = arith.addf %23, %24 : vector<10x64xf32>
    %c0_11 = arith.constant 0 : index
    %c0_12 = arith.constant 0 : index
    %26 = vector.load %arg4[%c0_11, %c0_12] : memref<1x64xf32, #tpu.memory_space<vmem>>, vector<1x64xf32>
    %c0_13 = arith.constant 0 : index
    %c0_14 = arith.constant 0 : index
    %27 = vector.load %arg5[%c0_13, %c0_14] : memref<1x64xf32, #tpu.memory_space<vmem>>, vector<1x64xf32>
    %c0_15 = arith.constant 0 : index
    %c0_16 = arith.constant 0 : index
    %28 = vector.load %arg6[%c0_15, %c0_16] : memref<64x192xf32, #tpu.memory_space<vmem>>, vector<64x192xf32>
    %c0_17 = arith.constant 0 : index
    %c0_18 = arith.constant 0 : index
    %29 = vector.load %arg7[%c0_17, %c0_18] : memref<1x192xf32, #tpu.memory_space<vmem>>, vector<1x192xf32>
    %c0_19 = arith.constant 0 : index
    %c0_20 = arith.constant 0 : index
    %30 = vector.load %arg8[%c0_19, %c0_20] : memref<64x64xf32, #tpu.memory_space<vmem>>, vector<64x64xf32>
    %c0_21 = arith.constant 0 : index
    %c0_22 = arith.constant 0 : index
    %31 = vector.load %arg9[%c0_21, %c0_22] : memref<1x64xf32, #tpu.memory_space<vmem>>, vector<1x64xf32>
    %c0_23 = arith.constant 0 : index
    %c0_24 = arith.constant 0 : index
    %32 = vector.load %arg10[%c0_23, %c0_24] : memref<1x64xf32, #tpu.memory_space<vmem>>, vector<1x64xf32>
    %c0_25 = arith.constant 0 : index
    %c0_26 = arith.constant 0 : index
    %33 = vector.load %arg11[%c0_25, %c0_26] : memref<1x64xf32, #tpu.memory_space<vmem>>, vector<1x64xf32>
    %c0_27 = arith.constant 0 : index
    %c0_28 = arith.constant 0 : index
    %34 = vector.load %arg12[%c0_27, %c0_28] : memref<64x256xf32, #tpu.memory_space<vmem>>, vector<64x256xf32>
    %c0_29 = arith.constant 0 : index
    %c0_30 = arith.constant 0 : index
    %35 = vector.load %arg13[%c0_29, %c0_30] : memref<1x256xf32, #tpu.memory_space<vmem>>, vector<1x256xf32>
    %c0_31 = arith.constant 0 : index
    %c0_32 = arith.constant 0 : index
    %36 = vector.load %arg14[%c0_31, %c0_32] : memref<256x64xf32, #tpu.memory_space<vmem>>, vector<256x64xf32>
    %c0_33 = arith.constant 0 : index
    %c0_34 = arith.constant 0 : index
    %37 = vector.load %arg15[%c0_33, %c0_34] : memref<1x64xf32, #tpu.memory_space<vmem>>, vector<1x64xf32>
    %cst_35 = arith.constant dense<0.000000e+00> : vector<10xf32>
    %38 = vector.multi_reduction <add>, %25, %cst_35 [1] : vector<10x64xf32> to vector<10xf32>
    %39 = vector.shape_cast %38 : vector<10xf32> to vector<10x1xf32>
    %cst_36 = arith.constant 6.400000e+01 : f32
    %40 = vector.broadcast %cst_36 : f32 to vector<10x1xf32>
    %41 = arith.divf %39, %40 : vector<10x1xf32>
    %42 = vector.broadcast %41 : vector<10x1xf32> to vector<10x64xf32>
    %43 = arith.subf %25, %42 : vector<10x64xf32>
    %44 = arith.mulf %43, %43 : vector<10x64xf32>
    %cst_37 = arith.constant dense<0.000000e+00> : vector<10xf32>
    %45 = vector.multi_reduction <add>, %44, %cst_37 [1] : vector<10x64xf32> to vector<10xf32>
    %46 = vector.shape_cast %45 : vector<10xf32> to vector<10x1xf32>
    %cst_38 = arith.constant 6.400000e+01 : f32
    %47 = vector.broadcast %cst_38 : f32 to vector<10x1xf32>
    %48 = arith.divf %46, %47 : vector<10x1xf32>
    %49 = vector.broadcast %41 : vector<10x1xf32> to vector<10x64xf32>
    %50 = arith.subf %25, %49 : vector<10x64xf32>
    %cst_39 = arith.constant 9.99999974E-6 : f32
    %51 = vector.broadcast %cst_39 : f32 to vector<10x1xf32>
    %52 = arith.addf %48, %51 : vector<10x1xf32>
    %53 = math.rsqrt %52 : vector<10x1xf32>
    %54 = vector.broadcast %53 : vector<10x1xf32> to vector<10x64xf32>
    %55 = arith.mulf %50, %54 : vector<10x64xf32>
    %56 = vector.broadcast %26 : vector<1x64xf32> to vector<10x64xf32>
    %57 = arith.mulf %55, %56 : vector<10x64xf32>
    %58 = vector.broadcast %27 : vector<1x64xf32> to vector<10x64xf32>
    %59 = arith.addf %57, %58 : vector<10x64xf32>
    %cst_40 = arith.constant dense<0.000000e+00> : vector<10x192xf32>
    %60 = tpu.matmul %59, %28, %cst_40 {dimension_numbers = #tpu.dot_dimension_numbers<[1], [0], [0], [1], [0, 0, 1, 1], [], []>} : vector<10x64xf32>, vector<64x192xf32>, vector<10x192xf32> -> vector<10x192xf32>
    %61 = vector.broadcast %29 : vector<1x192xf32> to vector<10x192xf32>
    %62 = arith.addf %60, %61 : vector<10x192xf32>
    %63 = vector.extract_strided_slice %62 {offsets = [0, 0], sizes = [10, 64], strides = [1, 1]} : vector<10x192xf32> to vector<10x64xf32>
    %64 = vector.extract_strided_slice %62 {offsets = [0, 64], sizes = [10, 64], strides = [1, 1]} : vector<10x192xf32> to vector<10x64xf32>
    %65 = vector.extract_strided_slice %62 {offsets = [0, 128], sizes = [10, 64], strides = [1, 1]} : vector<10x192xf32> to vector<10x64xf32>
    %cst_41 = arith.constant dense<0.000000e+00> : vector<10x10xf32>
    %66 = tpu.matmul %63, %64, %cst_41 {dimension_numbers = #tpu.dot_dimension_numbers<[1], [1], [0], [0], [0, 0, 1, 0], [], []>} : vector<10x64xf32>, vector<10x64xf32>, vector<10x10xf32> -> vector<10x10xf32>
    %cst_42 = arith.constant 1.250000e-01 : f32
    %67 = vector.broadcast %cst_42 : f32 to vector<10x10xf32>
    %68 = arith.mulf %66, %67 : vector<10x10xf32>
    %69 = arith.addf %68, %1 : vector<10x10xf32>
    %cst_43 = arith.constant dense<0xFF800000> : vector<10xf32>
    %70 = vector.multi_reduction <maximumf>, %69, %cst_43 [1] : vector<10x10xf32> to vector<10xf32>
    %71 = vector.shape_cast %70 : vector<10xf32> to vector<10x1xf32>
    %72 = vector.broadcast %71 : vector<10x1xf32> to vector<10x10xf32>
    %73 = arith.subf %69, %72 : vector<10x10xf32>
    %74 = math.exp %73 : vector<10x10xf32>
    %cst_44 = arith.constant dense<0.000000e+00> : vector<10xf32>
    %75 = vector.multi_reduction <add>, %74, %cst_44 [1] : vector<10x10xf32> to vector<10xf32>
    %76 = vector.shape_cast %75 : vector<10xf32> to vector<10x1xf32>
    %77 = tpu.reciprocal %76 {approx = true} : vector<10x1xf32> -> vector<10x1xf32>
    %78 = vector.broadcast %77 : vector<10x1xf32> to vector<10x10xf32>
    %79 = arith.mulf %74, %78 : vector<10x10xf32>
    %cst_45 = arith.constant dense<0.000000e+00> : vector<10x64xf32>
    %80 = tpu.matmul %79, %65, %cst_45 {dimension_numbers = #tpu.dot_dimension_numbers<[1], [0], [0], [1], [0, 0, 1, 1], [], []>} : vector<10x10xf32>, vector<10x64xf32>, vector<10x64xf32> -> vector<10x64xf32>
    %cst_46 = arith.constant dense<0.000000e+00> : vector<10x64xf32>
    %81 = tpu.matmul %80, %30, %cst_46 {dimension_numbers = #tpu.dot_dimension_numbers<[1], [0], [0], [1], [0, 0, 1, 1], [], []>} : vector<10x64xf32>, vector<64x64xf32>, vector<10x64xf32> -> vector<10x64xf32>
    %82 = arith.addf %25, %81 : vector<10x64xf32>
    %83 = vector.broadcast %31 : vector<1x64xf32> to vector<10x64xf32>
    %84 = arith.addf %82, %83 : vector<10x64xf32>
    %cst_47 = arith.constant dense<0.000000e+00> : vector<10xf32>
    %85 = vector.multi_reduction <add>, %84, %cst_47 [1] : vector<10x64xf32> to vector<10xf32>
    %86 = vector.shape_cast %85 : vector<10xf32> to vector<10x1xf32>
    %cst_48 = arith.constant 6.400000e+01 : f32
    %87 = vector.broadcast %cst_48 : f32 to vector<10x1xf32>
    %88 = arith.divf %86, %87 : vector<10x1xf32>
    %89 = vector.broadcast %88 : vector<10x1xf32> to vector<10x64xf32>
    %90 = arith.subf %84, %89 : vector<10x64xf32>
    %91 = arith.mulf %90, %90 : vector<10x64xf32>
    %cst_49 = arith.constant dense<0.000000e+00> : vector<10xf32>
    %92 = vector.multi_reduction <add>, %91, %cst_49 [1] : vector<10x64xf32> to vector<10xf32>
    %93 = vector.shape_cast %92 : vector<10xf32> to vector<10x1xf32>
    %cst_50 = arith.constant 6.400000e+01 : f32
    %94 = vector.broadcast %cst_50 : f32 to vector<10x1xf32>
    %95 = arith.divf %93, %94 : vector<10x1xf32>
    %96 = vector.broadcast %88 : vector<10x1xf32> to vector<10x64xf32>
    %97 = arith.subf %84, %96 : vector<10x64xf32>
    %cst_51 = arith.constant 9.99999974E-6 : f32
    %98 = vector.broadcast %cst_51 : f32 to vector<10x1xf32>
    %99 = arith.addf %95, %98 : vector<10x1xf32>
    %100 = math.rsqrt %99 : vector<10x1xf32>
    %101 = vector.broadcast %100 : vector<10x1xf32> to vector<10x64xf32>
    %102 = arith.mulf %97, %101 : vector<10x64xf32>
    %103 = vector.broadcast %32 : vector<1x64xf32> to vector<10x64xf32>
    %104 = arith.mulf %102, %103 : vector<10x64xf32>
    %105 = vector.broadcast %33 : vector<1x64xf32> to vector<10x64xf32>
    %106 = arith.addf %104, %105 : vector<10x64xf32>
    %cst_52 = arith.constant dense<0.000000e+00> : vector<10x256xf32>
    %107 = tpu.matmul %106, %34, %cst_52 {dimension_numbers = #tpu.dot_dimension_numbers<[1], [0], [0], [1], [0, 0, 1, 1], [], []>} : vector<10x64xf32>, vector<64x256xf32>, vector<10x256xf32> -> vector<10x256xf32>
    %108 = vector.broadcast %35 : vector<1x256xf32> to vector<10x256xf32>
    %109 = arith.addf %107, %108 : vector<10x256xf32>
    %cst_53 = arith.constant -1.702000e+00 : f32
    %110 = vector.broadcast %cst_53 : f32 to vector<10x256xf32>
    %111 = arith.mulf %110, %109 : vector<10x256xf32>
    %112 = math.exp %111 : vector<10x256xf32>
    %cst_54 = arith.constant 1.000000e+00 : f32
    %113 = vector.broadcast %cst_54 : f32 to vector<10x256xf32>
    %114 = arith.addf %113, %112 : vector<10x256xf32>
    %cst_55 = arith.constant 1.000000e+00 : f32
    %115 = vector.broadcast %cst_55 : f32 to vector<10x256xf32>
    %116 = arith.divf %115, %114 : vector<10x256xf32>
    %117 = arith.mulf %109, %116 : vector<10x256xf32>
    %cst_56 = arith.constant dense<0.000000e+00> : vector<10x64xf32>
    %118 = tpu.matmul %117, %36, %cst_56 {dimension_numbers = #tpu.dot_dimension_numbers<[1], [0], [0], [1], [0, 0, 1, 1], [], []>} : vector<10x256xf32>, vector<256x64xf32>, vector<10x64xf32> -> vector<10x64xf32>
    %119 = arith.addf %84, %118 : vector<10x64xf32>
    %120 = vector.broadcast %37 : vector<1x64xf32> to vector<10x64xf32>
    %121 = arith.addf %119, %120 : vector<10x64xf32>
    %c0_57 = arith.constant 0 : index
    %c0_58 = arith.constant 0 : index
    %122 = vector.load %arg16[%c0_57, %c0_58] : memref<1x64xf32, #tpu.memory_space<vmem>>, vector<1x64xf32>
    %c0_59 = arith.constant 0 : index
    %c0_60 = arith.constant 0 : index
    %123 = vector.load %arg17[%c0_59, %c0_60] : memref<1x64xf32, #tpu.memory_space<vmem>>, vector<1x64xf32>
    %c0_61 = arith.constant 0 : index
    %c0_62 = arith.constant 0 : index
    %124 = vector.load %arg18[%c0_61, %c0_62] : memref<64x192xf32, #tpu.memory_space<vmem>>, vector<64x192xf32>
    %c0_63 = arith.constant 0 : index
    %c0_64 = arith.constant 0 : index
    %125 = vector.load %arg19[%c0_63, %c0_64] : memref<1x192xf32, #tpu.memory_space<vmem>>, vector<1x192xf32>
    %c0_65 = arith.constant 0 : index
    %c0_66 = arith.constant 0 : index
    %126 = vector.load %arg20[%c0_65, %c0_66] : memref<64x64xf32, #tpu.memory_space<vmem>>, vector<64x64xf32>
    %c0_67 = arith.constant 0 : index
    %c0_68 = arith.constant 0 : index
    %127 = vector.load %arg21[%c0_67, %c0_68] : memref<1x64xf32, #tpu.memory_space<vmem>>, vector<1x64xf32>
    %c0_69 = arith.constant 0 : index
    %c0_70 = arith.constant 0 : index
    %128 = vector.load %arg22[%c0_69, %c0_70] : memref<1x64xf32, #tpu.memory_space<vmem>>, vector<1x64xf32>
    %c0_71 = arith.constant 0 : index
    %c0_72 = arith.constant 0 : index
    %129 = vector.load %arg23[%c0_71, %c0_72] : memref<1x64xf32, #tpu.memory_space<vmem>>, vector<1x64xf32>
    %c0_73 = arith.constant 0 : index
    %c0_74 = arith.constant 0 : index
    %130 = vector.load %arg24[%c0_73, %c0_74] : memref<64x256xf32, #tpu.memory_space<vmem>>, vector<64x256xf32>
    %c0_75 = arith.constant 0 : index
    %c0_76 = arith.constant 0 : index
    %131 = vector.load %arg25[%c0_75, %c0_76] : memref<1x256xf32, #tpu.memory_space<vmem>>, vector<1x256xf32>
    %c0_77 = arith.constant 0 : index
    %c0_78 = arith.constant 0 : index
    %132 = vector.load %arg26[%c0_77, %c0_78] : memref<256x64xf32, #tpu.memory_space<vmem>>, vector<256x64xf32>
    %c0_79 = arith.constant 0 : index
    %c0_80 = arith.constant 0 : index
    %133 = vector.load %arg27[%c0_79, %c0_80] : memref<1x64xf32, #tpu.memory_space<vmem>>, vector<1x64xf32>
    %cst_81 = arith.constant dense<0.000000e+00> : vector<10xf32>
    %134 = vector.multi_reduction <add>, %121, %cst_81 [1] : vector<10x64xf32> to vector<10xf32>
    %135 = vector.shape_cast %134 : vector<10xf32> to vector<10x1xf32>
    %cst_82 = arith.constant 6.400000e+01 : f32
    %136 = vector.broadcast %cst_82 : f32 to vector<10x1xf32>
    %137 = arith.divf %135, %136 : vector<10x1xf32>
    %138 = vector.broadcast %137 : vector<10x1xf32> to vector<10x64xf32>
    %139 = arith.subf %121, %138 : vector<10x64xf32>
    %140 = arith.mulf %139, %139 : vector<10x64xf32>
    %cst_83 = arith.constant dense<0.000000e+00> : vector<10xf32>
    %141 = vector.multi_reduction <add>, %140, %cst_83 [1] : vector<10x64xf32> to vector<10xf32>
    %142 = vector.shape_cast %141 : vector<10xf32> to vector<10x1xf32>
    %cst_84 = arith.constant 6.400000e+01 : f32
    %143 = vector.broadcast %cst_84 : f32 to vector<10x1xf32>
    %144 = arith.divf %142, %143 : vector<10x1xf32>
    %145 = vector.broadcast %137 : vector<10x1xf32> to vector<10x64xf32>
    %146 = arith.subf %121, %145 : vector<10x64xf32>
    %cst_85 = arith.constant 9.99999974E-6 : f32
    %147 = vector.broadcast %cst_85 : f32 to vector<10x1xf32>
    %148 = arith.addf %144, %147 : vector<10x1xf32>
    %149 = math.rsqrt %148 : vector<10x1xf32>
    %150 = vector.broadcast %149 : vector<10x1xf32> to vector<10x64xf32>
    %151 = arith.mulf %146, %150 : vector<10x64xf32>
    %152 = vector.broadcast %122 : vector<1x64xf32> to vector<10x64xf32>
    %153 = arith.mulf %151, %152 : vector<10x64xf32>
    %154 = vector.broadcast %123 : vector<1x64xf32> to vector<10x64xf32>
    %155 = arith.addf %153, %154 : vector<10x64xf32>
    %cst_86 = arith.constant dense<0.000000e+00> : vector<10x192xf32>
    %156 = tpu.matmul %155, %124, %cst_86 {dimension_numbers = #tpu.dot_dimension_numbers<[1], [0], [0], [1], [0, 0, 1, 1], [], []>} : vector<10x64xf32>, vector<64x192xf32>, vector<10x192xf32> -> vector<10x192xf32>
    %157 = vector.broadcast %125 : vector<1x192xf32> to vector<10x192xf32>
    %158 = arith.addf %156, %157 : vector<10x192xf32>
    %159 = vector.extract_strided_slice %158 {offsets = [0, 0], sizes = [10, 64], strides = [1, 1]} : vector<10x192xf32> to vector<10x64xf32>
    %160 = vector.extract_strided_slice %158 {offsets = [0, 64], sizes = [10, 64], strides = [1, 1]} : vector<10x192xf32> to vector<10x64xf32>
    %161 = vector.extract_strided_slice %158 {offsets = [0, 128], sizes = [10, 64], strides = [1, 1]} : vector<10x192xf32> to vector<10x64xf32>
    %cst_87 = arith.constant dense<0.000000e+00> : vector<10x10xf32>
    %162 = tpu.matmul %159, %160, %cst_87 {dimension_numbers = #tpu.dot_dimension_numbers<[1], [1], [0], [0], [0, 0, 1, 0], [], []>} : vector<10x64xf32>, vector<10x64xf32>, vector<10x10xf32> -> vector<10x10xf32>
    %cst_88 = arith.constant 1.250000e-01 : f32
    %163 = vector.broadcast %cst_88 : f32 to vector<10x10xf32>
    %164 = arith.mulf %162, %163 : vector<10x10xf32>
    %165 = arith.addf %164, %1 : vector<10x10xf32>
    %cst_89 = arith.constant dense<0xFF800000> : vector<10xf32>
    %166 = vector.multi_reduction <maximumf>, %165, %cst_89 [1] : vector<10x10xf32> to vector<10xf32>
    %167 = vector.shape_cast %166 : vector<10xf32> to vector<10x1xf32>
    %168 = vector.broadcast %167 : vector<10x1xf32> to vector<10x10xf32>
    %169 = arith.subf %165, %168 : vector<10x10xf32>
    %170 = math.exp %169 : vector<10x10xf32>
    %cst_90 = arith.constant dense<0.000000e+00> : vector<10xf32>
    %171 = vector.multi_reduction <add>, %170, %cst_90 [1] : vector<10x10xf32> to vector<10xf32>
    %172 = vector.shape_cast %171 : vector<10xf32> to vector<10x1xf32>
    %173 = tpu.reciprocal %172 {approx = true} : vector<10x1xf32> -> vector<10x1xf32>
    %174 = vector.broadcast %173 : vector<10x1xf32> to vector<10x10xf32>
    %175 = arith.mulf %170, %174 : vector<10x10xf32>
    %cst_91 = arith.constant dense<0.000000e+00> : vector<10x64xf32>
    %176 = tpu.matmul %175, %161, %cst_91 {dimension_numbers = #tpu.dot_dimension_numbers<[1], [0], [0], [1], [0, 0, 1, 1], [], []>} : vector<10x10xf32>, vector<10x64xf32>, vector<10x64xf32> -> vector<10x64xf32>
    %cst_92 = arith.constant dense<0.000000e+00> : vector<10x64xf32>
    %177 = tpu.matmul %176, %126, %cst_92 {dimension_numbers = #tpu.dot_dimension_numbers<[1], [0], [0], [1], [0, 0, 1, 1], [], []>} : vector<10x64xf32>, vector<64x64xf32>, vector<10x64xf32> -> vector<10x64xf32>
    %178 = arith.addf %121, %177 : vector<10x64xf32>
    %179 = vector.broadcast %127 : vector<1x64xf32> to vector<10x64xf32>
    %180 = arith.addf %178, %179 : vector<10x64xf32>
    %cst_93 = arith.constant dense<0.000000e+00> : vector<10xf32>
    %181 = vector.multi_reduction <add>, %180, %cst_93 [1] : vector<10x64xf32> to vector<10xf32>
    %182 = vector.shape_cast %181 : vector<10xf32> to vector<10x1xf32>
    %cst_94 = arith.constant 6.400000e+01 : f32
    %183 = vector.broadcast %cst_94 : f32 to vector<10x1xf32>
    %184 = arith.divf %182, %183 : vector<10x1xf32>
    %185 = vector.broadcast %184 : vector<10x1xf32> to vector<10x64xf32>
    %186 = arith.subf %180, %185 : vector<10x64xf32>
    %187 = arith.mulf %186, %186 : vector<10x64xf32>
    %cst_95 = arith.constant dense<0.000000e+00> : vector<10xf32>
    %188 = vector.multi_reduction <add>, %187, %cst_95 [1] : vector<10x64xf32> to vector<10xf32>
    %189 = vector.shape_cast %188 : vector<10xf32> to vector<10x1xf32>
    %cst_96 = arith.constant 6.400000e+01 : f32
    %190 = vector.broadcast %cst_96 : f32 to vector<10x1xf32>
    %191 = arith.divf %189, %190 : vector<10x1xf32>
    %192 = vector.broadcast %184 : vector<10x1xf32> to vector<10x64xf32>
    %193 = arith.subf %180, %192 : vector<10x64xf32>
    %cst_97 = arith.constant 9.99999974E-6 : f32
    %194 = vector.broadcast %cst_97 : f32 to vector<10x1xf32>
    %195 = arith.addf %191, %194 : vector<10x1xf32>
    %196 = math.rsqrt %195 : vector<10x1xf32>
    %197 = vector.broadcast %196 : vector<10x1xf32> to vector<10x64xf32>
    %198 = arith.mulf %193, %197 : vector<10x64xf32>
    %199 = vector.broadcast %128 : vector<1x64xf32> to vector<10x64xf32>
    %200 = arith.mulf %198, %199 : vector<10x64xf32>
    %201 = vector.broadcast %129 : vector<1x64xf32> to vector<10x64xf32>
    %202 = arith.addf %200, %201 : vector<10x64xf32>
    %cst_98 = arith.constant dense<0.000000e+00> : vector<10x256xf32>
    %203 = tpu.matmul %202, %130, %cst_98 {dimension_numbers = #tpu.dot_dimension_numbers<[1], [0], [0], [1], [0, 0, 1, 1], [], []>} : vector<10x64xf32>, vector<64x256xf32>, vector<10x256xf32> -> vector<10x256xf32>
    %204 = vector.broadcast %131 : vector<1x256xf32> to vector<10x256xf32>
    %205 = arith.addf %203, %204 : vector<10x256xf32>
    %cst_99 = arith.constant -1.702000e+00 : f32
    %206 = vector.broadcast %cst_99 : f32 to vector<10x256xf32>
    %207 = arith.mulf %206, %205 : vector<10x256xf32>
    %208 = math.exp %207 : vector<10x256xf32>
    %cst_100 = arith.constant 1.000000e+00 : f32
    %209 = vector.broadcast %cst_100 : f32 to vector<10x256xf32>
    %210 = arith.addf %209, %208 : vector<10x256xf32>
    %cst_101 = arith.constant 1.000000e+00 : f32
    %211 = vector.broadcast %cst_101 : f32 to vector<10x256xf32>
    %212 = arith.divf %211, %210 : vector<10x256xf32>
    %213 = arith.mulf %205, %212 : vector<10x256xf32>
    %cst_102 = arith.constant dense<0.000000e+00> : vector<10x64xf32>
    %214 = tpu.matmul %213, %132, %cst_102 {dimension_numbers = #tpu.dot_dimension_numbers<[1], [0], [0], [1], [0, 0, 1, 1], [], []>} : vector<10x256xf32>, vector<256x64xf32>, vector<10x64xf32> -> vector<10x64xf32>
    %215 = arith.addf %180, %214 : vector<10x64xf32>
    %216 = vector.broadcast %133 : vector<1x64xf32> to vector<10x64xf32>
    %217 = arith.addf %215, %216 : vector<10x64xf32>
    %c0_103 = arith.constant 0 : index
    %c0_104 = arith.constant 0 : index
    %218 = vector.load %arg28[%c0_103, %c0_104] : memref<1x64xf32, #tpu.memory_space<vmem>>, vector<1x64xf32>
    %c0_105 = arith.constant 0 : index
    %c0_106 = arith.constant 0 : index
    %219 = vector.load %arg29[%c0_105, %c0_106] : memref<1x64xf32, #tpu.memory_space<vmem>>, vector<1x64xf32>
    %c0_107 = arith.constant 0 : index
    %c0_108 = arith.constant 0 : index
    %220 = vector.load %arg30[%c0_107, %c0_108] : memref<64x32xf32, #tpu.memory_space<vmem>>, vector<64x32xf32>
    %cst_109 = arith.constant dense<0.000000e+00> : vector<10xf32>
    %221 = vector.multi_reduction <add>, %217, %cst_109 [1] : vector<10x64xf32> to vector<10xf32>
    %222 = vector.shape_cast %221 : vector<10xf32> to vector<10x1xf32>
    %cst_110 = arith.constant 6.400000e+01 : f32
    %223 = vector.broadcast %cst_110 : f32 to vector<10x1xf32>
    %224 = arith.divf %222, %223 : vector<10x1xf32>
    %225 = vector.broadcast %224 : vector<10x1xf32> to vector<10x64xf32>
    %226 = arith.subf %217, %225 : vector<10x64xf32>
    %227 = arith.mulf %226, %226 : vector<10x64xf32>
    %cst_111 = arith.constant dense<0.000000e+00> : vector<10xf32>
    %228 = vector.multi_reduction <add>, %227, %cst_111 [1] : vector<10x64xf32> to vector<10xf32>
    %229 = vector.shape_cast %228 : vector<10xf32> to vector<10x1xf32>
    %cst_112 = arith.constant 6.400000e+01 : f32
    %230 = vector.broadcast %cst_112 : f32 to vector<10x1xf32>
    %231 = arith.divf %229, %230 : vector<10x1xf32>
    %232 = vector.broadcast %224 : vector<10x1xf32> to vector<10x64xf32>
    %233 = arith.subf %217, %232 : vector<10x64xf32>
    %cst_113 = arith.constant 9.99999974E-6 : f32
    %234 = vector.broadcast %cst_113 : f32 to vector<10x1xf32>
    %235 = arith.addf %231, %234 : vector<10x1xf32>
    %236 = math.rsqrt %235 : vector<10x1xf32>
    %237 = vector.broadcast %236 : vector<10x1xf32> to vector<10x64xf32>
    %238 = arith.mulf %233, %237 : vector<10x64xf32>
    %239 = vector.broadcast %218 : vector<1x64xf32> to vector<10x64xf32>
    %240 = arith.mulf %238, %239 : vector<10x64xf32>
    %241 = vector.broadcast %219 : vector<1x64xf32> to vector<10x64xf32>
    %242 = arith.addf %240, %241 : vector<10x64xf32>
    %cst_114 = arith.constant dense<0.000000e+00> : vector<10x32xf32>
    %243 = tpu.matmul %242, %220, %cst_114 {dimension_numbers = #tpu.dot_dimension_numbers<[1], [0], [0], [1], [0, 0, 1, 1], [], []>} : vector<10x64xf32>, vector<64x32xf32>, vector<10x32xf32> -> vector<10x32xf32>
    %c0_115 = arith.constant 0 : index
    %c0_116 = arith.constant 0 : index
    %244 = vector.load %arg31[%c0_115, %c0_116] : memref<10x32xf32, #tpu.memory_space<vmem>>, vector<10x32xf32>
    tpu.vector_store %arg31[%c0_115, %c0_116], %243 {strides = array<i32>} : memref<10x32xf32, #tpu.memory_space<vmem>>, vector<10x32xf32>,
    return
  }
}

module attributes {stable_mosaic.version = 11 : i64} {
  func.func @_tower_kernel(%arg0: memref<16x32xf32, #tpu.memory_space<vmem>>, %arg1: memref<16x16xf32, #tpu.memory_space<vmem>>, %arg2: memref<1x32xf32, #tpu.memory_space<vmem>>, %arg3: memref<1x32xf32, #tpu.memory_space<vmem>>, %arg4: memref<32x96xf32, #tpu.memory_space<vmem>>, %arg5: memref<1x96xf32, #tpu.memory_space<vmem>>, %arg6: memref<32x32xf32, #tpu.memory_space<vmem>>, %arg7: memref<1x32xf32, #tpu.memory_space<vmem>>, %arg8: memref<1x32xf32, #tpu.memory_space<vmem>>, %arg9: memref<1x32xf32, #tpu.memory_space<vmem>>, %arg10: memref<32x128xf32, #tpu.memory_space<vmem>>, %arg11: memref<1x128xf32, #tpu.memory_space<vmem>>, %arg12: memref<128x32xf32, #tpu.memory_space<vmem>>, %arg13: memref<1x32xf32, #tpu.memory_space<vmem>>, %arg14: memref<1x32xf32, #tpu.memory_space<vmem>>, %arg15: memref<1x32xf32, #tpu.memory_space<vmem>>, %arg16: memref<32x96xf32, #tpu.memory_space<vmem>>, %arg17: memref<1x96xf32, #tpu.memory_space<vmem>>, %arg18: memref<32x32xf32, #tpu.memory_space<vmem>>, %arg19: memref<1x32xf32, #tpu.memory_space<vmem>>, %arg20: memref<1x32xf32, #tpu.memory_space<vmem>>, %arg21: memref<1x32xf32, #tpu.memory_space<vmem>>, %arg22: memref<32x128xf32, #tpu.memory_space<vmem>>, %arg23: memref<1x128xf32, #tpu.memory_space<vmem>>, %arg24: memref<128x32xf32, #tpu.memory_space<vmem>>, %arg25: memref<1x32xf32, #tpu.memory_space<vmem>>, %arg26: memref<1x32xf32, #tpu.memory_space<vmem>>, %arg27: memref<1x32xf32, #tpu.memory_space<vmem>>, %arg28: memref<32x32xf32, #tpu.memory_space<vmem>>, %arg29: memref<16x32xf32, #tpu.memory_space<vmem>>) attributes {dimension_semantics = [], scalar_prefetch = 0 : i64, scratch_operands = 0 : i64, tpu.core_type = #tpu.core_type<tc>} {
    %c0 = arith.constant 0 : index
    %c0_0 = arith.constant 0 : index
    %0 = vector.load %arg0[%c0, %c0_0] : memref<16x32xf32, #tpu.memory_space<vmem>>, vector<16x32xf32>
    %c0_1 = arith.constant 0 : index
    %c0_2 = arith.constant 0 : index
    %1 = vector.load %arg1[%c0_1, %c0_2] : memref<16x16xf32, #tpu.memory_space<vmem>>, vector<16x16xf32>
    %c0_3 = arith.constant 0 : index
    %c0_4 = arith.constant 0 : index
    %2 = vector.load %arg2[%c0_3, %c0_4] : memref<1x32xf32, #tpu.memory_space<vmem>>, vector<1x32xf32>
    %c0_5 = arith.constant 0 : index
    %c0_6 = arith.constant 0 : index
    %3 = vector.load %arg3[%c0_5, %c0_6] : memref<1x32xf32, #tpu.memory_space<vmem>>, vector<1x32xf32>
    %c0_7 = arith.constant 0 : index
    %c0_8 = arith.constant 0 : index
    %4 = vector.load %arg4[%c0_7, %c0_8] : memref<32x96xf32, #tpu.memory_space<vmem>>, vector<32x96xf32>
    %c0_9 = arith.constant 0 : index
    %c0_10 = arith.constant 0 : index
    %5 = vector.load %arg5[%c0_9, %c0_10] : memref<1x96xf32, #tpu.memory_space<vmem>>, vector<1x96xf32>
    %c0_11 = arith.constant 0 : index
    %c0_12 = arith.constant 0 : index
    %6 = vector.load %arg6[%c0_11, %c0_12] : memref<32x32xf32, #tpu.memory_space<vmem>>, vector<32x32xf32>
    %c0_13 = arith.constant 0 : index
    %c0_14 = arith.constant 0 : index
    %7 = vector.load %arg7[%c0_13, %c0_14] : memref<1x32xf32, #tpu.memory_space<vmem>>, vector<1x32xf32>
    %c0_15 = arith.constant 0 : index
    %c0_16 = arith.constant 0 : index
    %8 = vector.load %arg8[%c0_15, %c0_16] : memref<1x32xf32, #tpu.memory_space<vmem>>, vector<1x32xf32>
    %c0_17 = arith.constant 0 : index
    %c0_18 = arith.constant 0 : index
    %9 = vector.load %arg9[%c0_17, %c0_18] : memref<1x32xf32, #tpu.memory_space<vmem>>, vector<1x32xf32>
    %c0_19 = arith.constant 0 : index
    %c0_20 = arith.constant 0 : index
    %10 = vector.load %arg10[%c0_19, %c0_20] : memref<32x128xf32, #tpu.memory_space<vmem>>, vector<32x128xf32>
    %c0_21 = arith.constant 0 : index
    %c0_22 = arith.constant 0 : index
    %11 = vector.load %arg11[%c0_21, %c0_22] : memref<1x128xf32, #tpu.memory_space<vmem>>, vector<1x128xf32>
    %c0_23 = arith.constant 0 : index
    %c0_24 = arith.constant 0 : index
    %12 = vector.load %arg12[%c0_23, %c0_24] : memref<128x32xf32, #tpu.memory_space<vmem>>, vector<128x32xf32>
    %c0_25 = arith.constant 0 : index
    %c0_26 = arith.constant 0 : index
    %13 = vector.load %arg13[%c0_25, %c0_26] : memref<1x32xf32, #tpu.memory_space<vmem>>, vector<1x32xf32>
    %cst = arith.constant dense<0.000000e+00> : vector<16xf32>
    %14 = vector.multi_reduction <add>, %0, %cst [1] : vector<16x32xf32> to vector<16xf32>
    %15 = vector.shape_cast %14 : vector<16xf32> to vector<16x1xf32>
    %cst_27 = arith.constant 3.200000e+01 : f32
    %16 = vector.broadcast %cst_27 : f32 to vector<16x1xf32>
    %17 = arith.divf %15, %16 : vector<16x1xf32>
    %18 = vector.broadcast %17 : vector<16x1xf32> to vector<16x32xf32>
    %19 = arith.subf %0, %18 : vector<16x32xf32>
    %20 = arith.mulf %19, %19 : vector<16x32xf32>
    %cst_28 = arith.constant dense<0.000000e+00> : vector<16xf32>
    %21 = vector.multi_reduction <add>, %20, %cst_28 [1] : vector<16x32xf32> to vector<16xf32>
    %22 = vector.shape_cast %21 : vector<16xf32> to vector<16x1xf32>
    %cst_29 = arith.constant 3.200000e+01 : f32
    %23 = vector.broadcast %cst_29 : f32 to vector<16x1xf32>
    %24 = arith.divf %22, %23 : vector<16x1xf32>
    %25 = vector.broadcast %17 : vector<16x1xf32> to vector<16x32xf32>
    %26 = arith.subf %0, %25 : vector<16x32xf32>
    %cst_30 = arith.constant 9.99999974E-6 : f32
    %27 = vector.broadcast %cst_30 : f32 to vector<16x1xf32>
    %28 = arith.addf %24, %27 : vector<16x1xf32>
    %29 = math.rsqrt %28 : vector<16x1xf32>
    %30 = vector.broadcast %29 : vector<16x1xf32> to vector<16x32xf32>
    %31 = arith.mulf %26, %30 : vector<16x32xf32>
    %32 = vector.broadcast %2 : vector<1x32xf32> to vector<16x32xf32>
    %33 = arith.mulf %31, %32 : vector<16x32xf32>
    %34 = vector.broadcast %3 : vector<1x32xf32> to vector<16x32xf32>
    %35 = arith.addf %33, %34 : vector<16x32xf32>
    %cst_31 = arith.constant dense<0.000000e+00> : vector<16x96xf32>
    %36 = tpu.matmul %35, %4, %cst_31 {dimension_numbers = #tpu.dot_dimension_numbers<[1], [0], [0], [1], [0, 0, 1, 1], [], []>} : vector<16x32xf32>, vector<32x96xf32>, vector<16x96xf32> -> vector<16x96xf32>
    %37 = vector.broadcast %5 : vector<1x96xf32> to vector<16x96xf32>
    %38 = arith.addf %36, %37 : vector<16x96xf32>
    %39 = vector.extract_strided_slice %38 {offsets = [0, 0], sizes = [16, 16], strides = [1, 1]} : vector<16x96xf32> to vector<16x16xf32>
    %40 = vector.extract_strided_slice %38 {offsets = [0, 32], sizes = [16, 16], strides = [1, 1]} : vector<16x96xf32> to vector<16x16xf32>
    %41 = vector.extract_strided_slice %38 {offsets = [0, 64], sizes = [16, 16], strides = [1, 1]} : vector<16x96xf32> to vector<16x16xf32>
    %cst_32 = arith.constant dense<0.000000e+00> : vector<16x16xf32>
    %42 = tpu.matmul %39, %40, %cst_32 {dimension_numbers = #tpu.dot_dimension_numbers<[1], [1], [0], [0], [0, 0, 1, 0], [], []>} : vector<16x16xf32>, vector<16x16xf32>, vector<16x16xf32> -> vector<16x16xf32>
    %cst_33 = arith.constant 2.500000e-01 : f32
    %43 = vector.broadcast %cst_33 : f32 to vector<16x16xf32>
    %44 = arith.mulf %42, %43 : vector<16x16xf32>
    %45 = arith.addf %44, %1 : vector<16x16xf32>
    %cst_34 = arith.constant dense<0xFF800000> : vector<16xf32>
    %46 = vector.multi_reduction <maximumf>, %45, %cst_34 [1] : vector<16x16xf32> to vector<16xf32>
    %47 = vector.shape_cast %46 : vector<16xf32> to vector<16x1xf32>
    %48 = vector.broadcast %47 : vector<16x1xf32> to vector<16x16xf32>
    %49 = arith.subf %45, %48 : vector<16x16xf32>
    %50 = math.exp %49 : vector<16x16xf32>
    %cst_35 = arith.constant dense<0.000000e+00> : vector<16xf32>
    %51 = vector.multi_reduction <add>, %50, %cst_35 [1] : vector<16x16xf32> to vector<16xf32>
    %52 = vector.shape_cast %51 : vector<16xf32> to vector<16x1xf32>
    %53 = tpu.reciprocal %52 {approx = true} : vector<16x1xf32> -> vector<16x1xf32>
    %54 = vector.broadcast %53 : vector<16x1xf32> to vector<16x16xf32>
    %55 = arith.mulf %50, %54 : vector<16x16xf32>
    %cst_36 = arith.constant dense<0.000000e+00> : vector<16x16xf32>
    %56 = tpu.matmul %55, %41, %cst_36 {dimension_numbers = #tpu.dot_dimension_numbers<[1], [0], [0], [1], [0, 0, 1, 1], [], []>} : vector<16x16xf32>, vector<16x16xf32>, vector<16x16xf32> -> vector<16x16xf32>
    %57 = vector.extract_strided_slice %38 {offsets = [0, 16], sizes = [16, 16], strides = [1, 1]} : vector<16x96xf32> to vector<16x16xf32>
    %58 = vector.extract_strided_slice %38 {offsets = [0, 48], sizes = [16, 16], strides = [1, 1]} : vector<16x96xf32> to vector<16x16xf32>
    %59 = vector.extract_strided_slice %38 {offsets = [0, 80], sizes = [16, 16], strides = [1, 1]} : vector<16x96xf32> to vector<16x16xf32>
    %cst_37 = arith.constant dense<0.000000e+00> : vector<16x16xf32>
    %60 = tpu.matmul %57, %58, %cst_37 {dimension_numbers = #tpu.dot_dimension_numbers<[1], [1], [0], [0], [0, 0, 1, 0], [], []>} : vector<16x16xf32>, vector<16x16xf32>, vector<16x16xf32> -> vector<16x16xf32>
    %cst_38 = arith.constant 2.500000e-01 : f32
    %61 = vector.broadcast %cst_38 : f32 to vector<16x16xf32>
    %62 = arith.mulf %60, %61 : vector<16x16xf32>
    %63 = arith.addf %62, %1 : vector<16x16xf32>
    %cst_39 = arith.constant dense<0xFF800000> : vector<16xf32>
    %64 = vector.multi_reduction <maximumf>, %63, %cst_39 [1] : vector<16x16xf32> to vector<16xf32>
    %65 = vector.shape_cast %64 : vector<16xf32> to vector<16x1xf32>
    %66 = vector.broadcast %65 : vector<16x1xf32> to vector<16x16xf32>
    %67 = arith.subf %63, %66 : vector<16x16xf32>
    %68 = math.exp %67 : vector<16x16xf32>
    %cst_40 = arith.constant dense<0.000000e+00> : vector<16xf32>
    %69 = vector.multi_reduction <add>, %68, %cst_40 [1] : vector<16x16xf32> to vector<16xf32>
    %70 = vector.shape_cast %69 : vector<16xf32> to vector<16x1xf32>
    %71 = tpu.reciprocal %70 {approx = true} : vector<16x1xf32> -> vector<16x1xf32>
    %72 = vector.broadcast %71 : vector<16x1xf32> to vector<16x16xf32>
    %73 = arith.mulf %68, %72 : vector<16x16xf32>
    %cst_41 = arith.constant dense<0.000000e+00> : vector<16x16xf32>
    %74 = tpu.matmul %73, %59, %cst_41 {dimension_numbers = #tpu.dot_dimension_numbers<[1], [0], [0], [1], [0, 0, 1, 1], [], []>} : vector<16x16xf32>, vector<16x16xf32>, vector<16x16xf32> -> vector<16x16xf32>
    %75 = tpu.concatenate %56, %74 in 1 : vector<16x16xf32>, vector<16x16xf32> -> vector<16x32xf32>
    %cst_42 = arith.constant dense<0.000000e+00> : vector<16x32xf32>
    %76 = tpu.matmul %75, %6, %cst_42 {dimension_numbers = #tpu.dot_dimension_numbers<[1], [0], [0], [1], [0, 0, 1, 1], [], []>} : vector<16x32xf32>, vector<32x32xf32>, vector<16x32xf32> -> vector<16x32xf32>
    %77 = arith.addf %0, %76 : vector<16x32xf32>
    %78 = vector.broadcast %7 : vector<1x32xf32> to vector<16x32xf32>
    %79 = arith.addf %77, %78 : vector<16x32xf32>
    %cst_43 = arith.constant dense<0.000000e+00> : vector<16xf32>
    %80 = vector.multi_reduction <add>, %79, %cst_43 [1] : vector<16x32xf32> to vector<16xf32>
    %81 = vector.shape_cast %80 : vector<16xf32> to vector<16x1xf32>
    %cst_44 = arith.constant 3.200000e+01 : f32
    %82 = vector.broadcast %cst_44 : f32 to vector<16x1xf32>
    %83 = arith.divf %81, %82 : vector<16x1xf32>
    %84 = vector.broadcast %83 : vector<16x1xf32> to vector<16x32xf32>
    %85 = arith.subf %79, %84 : vector<16x32xf32>
    %86 = arith.mulf %85, %85 : vector<16x32xf32>
    %cst_45 = arith.constant dense<0.000000e+00> : vector<16xf32>
    %87 = vector.multi_reduction <add>, %86, %cst_45 [1] : vector<16x32xf32> to vector<16xf32>
    %88 = vector.shape_cast %87 : vector<16xf32> to vector<16x1xf32>
    %cst_46 = arith.constant 3.200000e+01 : f32
    %89 = vector.broadcast %cst_46 : f32 to vector<16x1xf32>
    %90 = arith.divf %88, %89 : vector<16x1xf32>
    %91 = vector.broadcast %83 : vector<16x1xf32> to vector<16x32xf32>
    %92 = arith.subf %79, %91 : vector<16x32xf32>
    %cst_47 = arith.constant 9.99999974E-6 : f32
    %93 = vector.broadcast %cst_47 : f32 to vector<16x1xf32>
    %94 = arith.addf %90, %93 : vector<16x1xf32>
    %95 = math.rsqrt %94 : vector<16x1xf32>
    %96 = vector.broadcast %95 : vector<16x1xf32> to vector<16x32xf32>
    %97 = arith.mulf %92, %96 : vector<16x32xf32>
    %98 = vector.broadcast %8 : vector<1x32xf32> to vector<16x32xf32>
    %99 = arith.mulf %97, %98 : vector<16x32xf32>
    %100 = vector.broadcast %9 : vector<1x32xf32> to vector<16x32xf32>
    %101 = arith.addf %99, %100 : vector<16x32xf32>
    %cst_48 = arith.constant dense<0.000000e+00> : vector<16x128xf32>
    %102 = tpu.matmul %101, %10, %cst_48 {dimension_numbers = #tpu.dot_dimension_numbers<[1], [0], [0], [1], [0, 0, 1, 1], [], []>} : vector<16x32xf32>, vector<32x128xf32>, vector<16x128xf32> -> vector<16x128xf32>
    %103 = vector.broadcast %11 : vector<1x128xf32> to vector<16x128xf32>
    %104 = arith.addf %102, %103 : vector<16x128xf32>
    %cst_49 = arith.constant -1.702000e+00 : f32
    %105 = vector.broadcast %cst_49 : f32 to vector<16x128xf32>
    %106 = arith.mulf %105, %104 : vector<16x128xf32>
    %107 = math.exp %106 : vector<16x128xf32>
    %cst_50 = arith.constant 1.000000e+00 : f32
    %108 = vector.broadcast %cst_50 : f32 to vector<16x128xf32>
    %109 = arith.addf %108, %107 : vector<16x128xf32>
    %cst_51 = arith.constant 1.000000e+00 : f32
    %110 = vector.broadcast %cst_51 : f32 to vector<16x128xf32>
    %111 = arith.divf %110, %109 : vector<16x128xf32>
    %112 = arith.mulf %104, %111 : vector<16x128xf32>
    %cst_52 = arith.constant dense<0.000000e+00> : vector<16x32xf32>
    %113 = tpu.matmul %112, %12, %cst_52 {dimension_numbers = #tpu.dot_dimension_numbers<[1], [0], [0], [1], [0, 0, 1, 1], [], []>} : vector<16x128xf32>, vector<128x32xf32>, vector<16x32xf32> -> vector<16x32xf32>
    %114 = arith.addf %79, %113 : vector<16x32xf32>
    %115 = vector.broadcast %13 : vector<1x32xf32> to vector<16x32xf32>
    %116 = arith.addf %114, %115 : vector<16x32xf32>
    %c0_53 = arith.constant 0 : index
    %c0_54 = arith.constant 0 : index
    %117 = vector.load %arg14[%c0_53, %c0_54] : memref<1x32xf32, #tpu.memory_space<vmem>>, vector<1x32xf32>
    %c0_55 = arith.constant 0 : index
    %c0_56 = arith.constant 0 : index
    %118 = vector.load %arg15[%c0_55, %c0_56] : memref<1x32xf32, #tpu.memory_space<vmem>>, vector<1x32xf32>
    %c0_57 = arith.constant 0 : index
    %c0_58 = arith.constant 0 : index
    %119 = vector.load %arg16[%c0_57, %c0_58] : memref<32x96xf32, #tpu.memory_space<vmem>>, vector<32x96xf32>
    %c0_59 = arith.constant 0 : index
    %c0_60 = arith.constant 0 : index
    %120 = vector.load %arg17[%c0_59, %c0_60] : memref<1x96xf32, #tpu.memory_space<vmem>>, vector<1x96xf32>
    %c0_61 = arith.constant 0 : index
    %c0_62 = arith.constant 0 : index
    %121 = vector.load %arg18[%c0_61, %c0_62] : memref<32x32xf32, #tpu.memory_space<vmem>>, vector<32x32xf32>
    %c0_63 = arith.constant 0 : index
    %c0_64 = arith.constant 0 : index
    %122 = vector.load %arg19[%c0_63, %c0_64] : memref<1x32xf32, #tpu.memory_space<vmem>>, vector<1x32xf32>
    %c0_65 = arith.constant 0 : index
    %c0_66 = arith.constant 0 : index
    %123 = vector.load %arg20[%c0_65, %c0_66] : memref<1x32xf32, #tpu.memory_space<vmem>>, vector<1x32xf32>
    %c0_67 = arith.constant 0 : index
    %c0_68 = arith.constant 0 : index
    %124 = vector.load %arg21[%c0_67, %c0_68] : memref<1x32xf32, #tpu.memory_space<vmem>>, vector<1x32xf32>
    %c0_69 = arith.constant 0 : index
    %c0_70 = arith.constant 0 : index
    %125 = vector.load %arg22[%c0_69, %c0_70] : memref<32x128xf32, #tpu.memory_space<vmem>>, vector<32x128xf32>
    %c0_71 = arith.constant 0 : index
    %c0_72 = arith.constant 0 : index
    %126 = vector.load %arg23[%c0_71, %c0_72] : memref<1x128xf32, #tpu.memory_space<vmem>>, vector<1x128xf32>
    %c0_73 = arith.constant 0 : index
    %c0_74 = arith.constant 0 : index
    %127 = vector.load %arg24[%c0_73, %c0_74] : memref<128x32xf32, #tpu.memory_space<vmem>>, vector<128x32xf32>
    %c0_75 = arith.constant 0 : index
    %c0_76 = arith.constant 0 : index
    %128 = vector.load %arg25[%c0_75, %c0_76] : memref<1x32xf32, #tpu.memory_space<vmem>>, vector<1x32xf32>
    %cst_77 = arith.constant dense<0.000000e+00> : vector<16xf32>
    %129 = vector.multi_reduction <add>, %116, %cst_77 [1] : vector<16x32xf32> to vector<16xf32>
    %130 = vector.shape_cast %129 : vector<16xf32> to vector<16x1xf32>
    %cst_78 = arith.constant 3.200000e+01 : f32
    %131 = vector.broadcast %cst_78 : f32 to vector<16x1xf32>
    %132 = arith.divf %130, %131 : vector<16x1xf32>
    %133 = vector.broadcast %132 : vector<16x1xf32> to vector<16x32xf32>
    %134 = arith.subf %116, %133 : vector<16x32xf32>
    %135 = arith.mulf %134, %134 : vector<16x32xf32>
    %cst_79 = arith.constant dense<0.000000e+00> : vector<16xf32>
    %136 = vector.multi_reduction <add>, %135, %cst_79 [1] : vector<16x32xf32> to vector<16xf32>
    %137 = vector.shape_cast %136 : vector<16xf32> to vector<16x1xf32>
    %cst_80 = arith.constant 3.200000e+01 : f32
    %138 = vector.broadcast %cst_80 : f32 to vector<16x1xf32>
    %139 = arith.divf %137, %138 : vector<16x1xf32>
    %140 = vector.broadcast %132 : vector<16x1xf32> to vector<16x32xf32>
    %141 = arith.subf %116, %140 : vector<16x32xf32>
    %cst_81 = arith.constant 9.99999974E-6 : f32
    %142 = vector.broadcast %cst_81 : f32 to vector<16x1xf32>
    %143 = arith.addf %139, %142 : vector<16x1xf32>
    %144 = math.rsqrt %143 : vector<16x1xf32>
    %145 = vector.broadcast %144 : vector<16x1xf32> to vector<16x32xf32>
    %146 = arith.mulf %141, %145 : vector<16x32xf32>
    %147 = vector.broadcast %117 : vector<1x32xf32> to vector<16x32xf32>
    %148 = arith.mulf %146, %147 : vector<16x32xf32>
    %149 = vector.broadcast %118 : vector<1x32xf32> to vector<16x32xf32>
    %150 = arith.addf %148, %149 : vector<16x32xf32>
    %cst_82 = arith.constant dense<0.000000e+00> : vector<16x96xf32>
    %151 = tpu.matmul %150, %119, %cst_82 {dimension_numbers = #tpu.dot_dimension_numbers<[1], [0], [0], [1], [0, 0, 1, 1], [], []>} : vector<16x32xf32>, vector<32x96xf32>, vector<16x96xf32> -> vector<16x96xf32>
    %152 = vector.broadcast %120 : vector<1x96xf32> to vector<16x96xf32>
    %153 = arith.addf %151, %152 : vector<16x96xf32>
    %154 = vector.extract_strided_slice %153 {offsets = [0, 0], sizes = [16, 16], strides = [1, 1]} : vector<16x96xf32> to vector<16x16xf32>
    %155 = vector.extract_strided_slice %153 {offsets = [0, 32], sizes = [16, 16], strides = [1, 1]} : vector<16x96xf32> to vector<16x16xf32>
    %156 = vector.extract_strided_slice %153 {offsets = [0, 64], sizes = [16, 16], strides = [1, 1]} : vector<16x96xf32> to vector<16x16xf32>
    %cst_83 = arith.constant dense<0.000000e+00> : vector<16x16xf32>
    %157 = tpu.matmul %154, %155, %cst_83 {dimension_numbers = #tpu.dot_dimension_numbers<[1], [1], [0], [0], [0, 0, 1, 0], [], []>} : vector<16x16xf32>, vector<16x16xf32>, vector<16x16xf32> -> vector<16x16xf32>
    %cst_84 = arith.constant 2.500000e-01 : f32
    %158 = vector.broadcast %cst_84 : f32 to vector<16x16xf32>
    %159 = arith.mulf %157, %158 : vector<16x16xf32>
    %160 = arith.addf %159, %1 : vector<16x16xf32>
    %cst_85 = arith.constant dense<0xFF800000> : vector<16xf32>
    %161 = vector.multi_reduction <maximumf>, %160, %cst_85 [1] : vector<16x16xf32> to vector<16xf32>
    %162 = vector.shape_cast %161 : vector<16xf32> to vector<16x1xf32>
    %163 = vector.broadcast %162 : vector<16x1xf32> to vector<16x16xf32>
    %164 = arith.subf %160, %163 : vector<16x16xf32>
    %165 = math.exp %164 : vector<16x16xf32>
    %cst_86 = arith.constant dense<0.000000e+00> : vector<16xf32>
    %166 = vector.multi_reduction <add>, %165, %cst_86 [1] : vector<16x16xf32> to vector<16xf32>
    %167 = vector.shape_cast %166 : vector<16xf32> to vector<16x1xf32>
    %168 = tpu.reciprocal %167 {approx = true} : vector<16x1xf32> -> vector<16x1xf32>
    %169 = vector.broadcast %168 : vector<16x1xf32> to vector<16x16xf32>
    %170 = arith.mulf %165, %169 : vector<16x16xf32>
    %cst_87 = arith.constant dense<0.000000e+00> : vector<16x16xf32>
    %171 = tpu.matmul %170, %156, %cst_87 {dimension_numbers = #tpu.dot_dimension_numbers<[1], [0], [0], [1], [0, 0, 1, 1], [], []>} : vector<16x16xf32>, vector<16x16xf32>, vector<16x16xf32> -> vector<16x16xf32>
    %172 = vector.extract_strided_slice %153 {offsets = [0, 16], sizes = [16, 16], strides = [1, 1]} : vector<16x96xf32> to vector<16x16xf32>
    %173 = vector.extract_strided_slice %153 {offsets = [0, 48], sizes = [16, 16], strides = [1, 1]} : vector<16x96xf32> to vector<16x16xf32>
    %174 = vector.extract_strided_slice %153 {offsets = [0, 80], sizes = [16, 16], strides = [1, 1]} : vector<16x96xf32> to vector<16x16xf32>
    %cst_88 = arith.constant dense<0.000000e+00> : vector<16x16xf32>
    %175 = tpu.matmul %172, %173, %cst_88 {dimension_numbers = #tpu.dot_dimension_numbers<[1], [1], [0], [0], [0, 0, 1, 0], [], []>} : vector<16x16xf32>, vector<16x16xf32>, vector<16x16xf32> -> vector<16x16xf32>
    %cst_89 = arith.constant 2.500000e-01 : f32
    %176 = vector.broadcast %cst_89 : f32 to vector<16x16xf32>
    %177 = arith.mulf %175, %176 : vector<16x16xf32>
    %178 = arith.addf %177, %1 : vector<16x16xf32>
    %cst_90 = arith.constant dense<0xFF800000> : vector<16xf32>
    %179 = vector.multi_reduction <maximumf>, %178, %cst_90 [1] : vector<16x16xf32> to vector<16xf32>
    %180 = vector.shape_cast %179 : vector<16xf32> to vector<16x1xf32>
    %181 = vector.broadcast %180 : vector<16x1xf32> to vector<16x16xf32>
    %182 = arith.subf %178, %181 : vector<16x16xf32>
    %183 = math.exp %182 : vector<16x16xf32>
    %cst_91 = arith.constant dense<0.000000e+00> : vector<16xf32>
    %184 = vector.multi_reduction <add>, %183, %cst_91 [1] : vector<16x16xf32> to vector<16xf32>
    %185 = vector.shape_cast %184 : vector<16xf32> to vector<16x1xf32>
    %186 = tpu.reciprocal %185 {approx = true} : vector<16x1xf32> -> vector<16x1xf32>
    %187 = vector.broadcast %186 : vector<16x1xf32> to vector<16x16xf32>
    %188 = arith.mulf %183, %187 : vector<16x16xf32>
    %cst_92 = arith.constant dense<0.000000e+00> : vector<16x16xf32>
    %189 = tpu.matmul %188, %174, %cst_92 {dimension_numbers = #tpu.dot_dimension_numbers<[1], [0], [0], [1], [0, 0, 1, 1], [], []>} : vector<16x16xf32>, vector<16x16xf32>, vector<16x16xf32> -> vector<16x16xf32>
    %190 = tpu.concatenate %171, %189 in 1 : vector<16x16xf32>, vector<16x16xf32> -> vector<16x32xf32>
    %cst_93 = arith.constant dense<0.000000e+00> : vector<16x32xf32>
    %191 = tpu.matmul %190, %121, %cst_93 {dimension_numbers = #tpu.dot_dimension_numbers<[1], [0], [0], [1], [0, 0, 1, 1], [], []>} : vector<16x32xf32>, vector<32x32xf32>, vector<16x32xf32> -> vector<16x32xf32>
    %192 = arith.addf %116, %191 : vector<16x32xf32>
    %193 = vector.broadcast %122 : vector<1x32xf32> to vector<16x32xf32>
    %194 = arith.addf %192, %193 : vector<16x32xf32>
    %cst_94 = arith.constant dense<0.000000e+00> : vector<16xf32>
    %195 = vector.multi_reduction <add>, %194, %cst_94 [1] : vector<16x32xf32> to vector<16xf32>
    %196 = vector.shape_cast %195 : vector<16xf32> to vector<16x1xf32>
    %cst_95 = arith.constant 3.200000e+01 : f32
    %197 = vector.broadcast %cst_95 : f32 to vector<16x1xf32>
    %198 = arith.divf %196, %197 : vector<16x1xf32>
    %199 = vector.broadcast %198 : vector<16x1xf32> to vector<16x32xf32>
    %200 = arith.subf %194, %199 : vector<16x32xf32>
    %201 = arith.mulf %200, %200 : vector<16x32xf32>
    %cst_96 = arith.constant dense<0.000000e+00> : vector<16xf32>
    %202 = vector.multi_reduction <add>, %201, %cst_96 [1] : vector<16x32xf32> to vector<16xf32>
    %203 = vector.shape_cast %202 : vector<16xf32> to vector<16x1xf32>
    %cst_97 = arith.constant 3.200000e+01 : f32
    %204 = vector.broadcast %cst_97 : f32 to vector<16x1xf32>
    %205 = arith.divf %203, %204 : vector<16x1xf32>
    %206 = vector.broadcast %198 : vector<16x1xf32> to vector<16x32xf32>
    %207 = arith.subf %194, %206 : vector<16x32xf32>
    %cst_98 = arith.constant 9.99999974E-6 : f32
    %208 = vector.broadcast %cst_98 : f32 to vector<16x1xf32>
    %209 = arith.addf %205, %208 : vector<16x1xf32>
    %210 = math.rsqrt %209 : vector<16x1xf32>
    %211 = vector.broadcast %210 : vector<16x1xf32> to vector<16x32xf32>
    %212 = arith.mulf %207, %211 : vector<16x32xf32>
    %213 = vector.broadcast %123 : vector<1x32xf32> to vector<16x32xf32>
    %214 = arith.mulf %212, %213 : vector<16x32xf32>
    %215 = vector.broadcast %124 : vector<1x32xf32> to vector<16x32xf32>
    %216 = arith.addf %214, %215 : vector<16x32xf32>
    %cst_99 = arith.constant dense<0.000000e+00> : vector<16x128xf32>
    %217 = tpu.matmul %216, %125, %cst_99 {dimension_numbers = #tpu.dot_dimension_numbers<[1], [0], [0], [1], [0, 0, 1, 1], [], []>} : vector<16x32xf32>, vector<32x128xf32>, vector<16x128xf32> -> vector<16x128xf32>
    %218 = vector.broadcast %126 : vector<1x128xf32> to vector<16x128xf32>
    %219 = arith.addf %217, %218 : vector<16x128xf32>
    %cst_100 = arith.constant -1.702000e+00 : f32
    %220 = vector.broadcast %cst_100 : f32 to vector<16x128xf32>
    %221 = arith.mulf %220, %219 : vector<16x128xf32>
    %222 = math.exp %221 : vector<16x128xf32>
    %cst_101 = arith.constant 1.000000e+00 : f32
    %223 = vector.broadcast %cst_101 : f32 to vector<16x128xf32>
    %224 = arith.addf %223, %222 : vector<16x128xf32>
    %cst_102 = arith.constant 1.000000e+00 : f32
    %225 = vector.broadcast %cst_102 : f32 to vector<16x128xf32>
    %226 = arith.divf %225, %224 : vector<16x128xf32>
    %227 = arith.mulf %219, %226 : vector<16x128xf32>
    %cst_103 = arith.constant dense<0.000000e+00> : vector<16x32xf32>
    %228 = tpu.matmul %227, %127, %cst_103 {dimension_numbers = #tpu.dot_dimension_numbers<[1], [0], [0], [1], [0, 0, 1, 1], [], []>} : vector<16x128xf32>, vector<128x32xf32>, vector<16x32xf32> -> vector<16x32xf32>
    %229 = arith.addf %194, %228 : vector<16x32xf32>
    %230 = vector.broadcast %128 : vector<1x32xf32> to vector<16x32xf32>
    %231 = arith.addf %229, %230 : vector<16x32xf32>
    %c0_104 = arith.constant 0 : index
    %c0_105 = arith.constant 0 : index
    %232 = vector.load %arg26[%c0_104, %c0_105] : memref<1x32xf32, #tpu.memory_space<vmem>>, vector<1x32xf32>
    %c0_106 = arith.constant 0 : index
    %c0_107 = arith.constant 0 : index
    %233 = vector.load %arg27[%c0_106, %c0_107] : memref<1x32xf32, #tpu.memory_space<vmem>>, vector<1x32xf32>
    %c0_108 = arith.constant 0 : index
    %c0_109 = arith.constant 0 : index
    %234 = vector.load %arg28[%c0_108, %c0_109] : memref<32x32xf32, #tpu.memory_space<vmem>>, vector<32x32xf32>
    %cst_110 = arith.constant dense<0.000000e+00> : vector<16xf32>
    %235 = vector.multi_reduction <add>, %231, %cst_110 [1] : vector<16x32xf32> to vector<16xf32>
    %236 = vector.shape_cast %235 : vector<16xf32> to vector<16x1xf32>
    %cst_111 = arith.constant 3.200000e+01 : f32
    %237 = vector.broadcast %cst_111 : f32 to vector<16x1xf32>
    %238 = arith.divf %236, %237 : vector<16x1xf32>
    %239 = vector.broadcast %238 : vector<16x1xf32> to vector<16x32xf32>
    %240 = arith.subf %231, %239 : vector<16x32xf32>
    %241 = arith.mulf %240, %240 : vector<16x32xf32>
    %cst_112 = arith.constant dense<0.000000e+00> : vector<16xf32>
    %242 = vector.multi_reduction <add>, %241, %cst_112 [1] : vector<16x32xf32> to vector<16xf32>
    %243 = vector.shape_cast %242 : vector<16xf32> to vector<16x1xf32>
    %cst_113 = arith.constant 3.200000e+01 : f32
    %244 = vector.broadcast %cst_113 : f32 to vector<16x1xf32>
    %245 = arith.divf %243, %244 : vector<16x1xf32>
    %246 = vector.broadcast %238 : vector<16x1xf32> to vector<16x32xf32>
    %247 = arith.subf %231, %246 : vector<16x32xf32>
    %cst_114 = arith.constant 9.99999974E-6 : f32
    %248 = vector.broadcast %cst_114 : f32 to vector<16x1xf32>
    %249 = arith.addf %245, %248 : vector<16x1xf32>
    %250 = math.rsqrt %249 : vector<16x1xf32>
    %251 = vector.broadcast %250 : vector<16x1xf32> to vector<16x32xf32>
    %252 = arith.mulf %247, %251 : vector<16x32xf32>
    %253 = vector.broadcast %232 : vector<1x32xf32> to vector<16x32xf32>
    %254 = arith.mulf %252, %253 : vector<16x32xf32>
    %255 = vector.broadcast %233 : vector<1x32xf32> to vector<16x32xf32>
    %256 = arith.addf %254, %255 : vector<16x32xf32>
    %cst_115 = arith.constant dense<0.000000e+00> : vector<16x32xf32>
    %257 = tpu.matmul %256, %234, %cst_115 {dimension_numbers = #tpu.dot_dimension_numbers<[1], [0], [0], [1], [0, 0, 1, 1], [], []>} : vector<16x32xf32>, vector<32x32xf32>, vector<16x32xf32> -> vector<16x32xf32>
    %c0_116 = arith.constant 0 : index
    %c0_117 = arith.constant 0 : index
    %258 = vector.load %arg29[%c0_116, %c0_117] : memref<16x32xf32, #tpu.memory_space<vmem>>, vector<16x32xf32>
    tpu.vector_store %arg29[%c0_116, %c0_117], %257 {strides = array<i32>} : memref<16x32xf32, #tpu.memory_space<vmem>>, vector<16x32xf32>,
    return
  }
}

module attributes {stable_mosaic.version = 11 : i64} {
  func.func @_clip_logits_kernel(%arg0: memref<2x32xf32, #tpu.memory_space<vmem>>, %arg1: memref<2x32xf32, #tpu.memory_space<vmem>>, %arg2: memref<1x1xf32, #tpu.memory_space<vmem>>, %arg3: memref<2x2xf32, #tpu.memory_space<vmem>>) attributes {dimension_semantics = [], scalar_prefetch = 0 : i64, scratch_operands = 0 : i64, tpu.core_type = #tpu.core_type<tc>} {
    %c0 = arith.constant 0 : index
    %c0_0 = arith.constant 0 : index
    %0 = vector.load %arg0[%c0, %c0_0] : memref<2x32xf32, #tpu.memory_space<vmem>>, vector<2x32xf32>
    %c0_1 = arith.constant 0 : index
    %c0_2 = arith.constant 0 : index
    %1 = vector.load %arg1[%c0_1, %c0_2] : memref<2x32xf32, #tpu.memory_space<vmem>>, vector<2x32xf32>
    %2 = arith.mulf %0, %0 : vector<2x32xf32>
    %cst = arith.constant dense<0.000000e+00> : vector<2xf32>
    %3 = vector.multi_reduction <add>, %2, %cst [1] : vector<2x32xf32> to vector<2xf32>
    %4 = vector.shape_cast %3 : vector<2xf32> to vector<2x1xf32>
    %5 = math.rsqrt %4 : vector<2x1xf32>
    %6 = vector.broadcast %5 : vector<2x1xf32> to vector<2x32xf32>
    %7 = arith.mulf %0, %6 : vector<2x32xf32>
    %8 = arith.mulf %1, %1 : vector<2x32xf32>
    %cst_3 = arith.constant dense<0.000000e+00> : vector<2xf32>
    %9 = vector.multi_reduction <add>, %8, %cst_3 [1] : vector<2x32xf32> to vector<2xf32>
    %10 = vector.shape_cast %9 : vector<2xf32> to vector<2x1xf32>
    %11 = math.rsqrt %10 : vector<2x1xf32>
    %12 = vector.broadcast %11 : vector<2x1xf32> to vector<2x32xf32>
    %13 = arith.mulf %1, %12 : vector<2x32xf32>
    %c0_4 = arith.constant 0 : index
    %c0_5 = arith.constant 0 : index
    %14 = vector.load %arg2[%c0_4, %c0_5] : memref<1x1xf32, #tpu.memory_space<vmem>>, vector<1x1xf32>
    %15 = vector.extract %14[0, 0] : f32 from vector<1x1xf32>
    %16 = math.exp %15 : f32
    %cst_6 = arith.constant dense<0.000000e+00> : vector<2x2xf32>
    %17 = tpu.matmul %7, %13, %cst_6 {dimension_numbers = #tpu.dot_dimension_numbers<[1], [1], [0], [0], [0, 0, 1, 0], [], []>} : vector<2x32xf32>, vector<2x32xf32>, vector<2x2xf32> -> vector<2x2xf32>
    %18 = vector.broadcast %16 : f32 to vector<2x2xf32>
    %19 = arith.mulf %18, %17 : vector<2x2xf32>
    %c0_7 = arith.constant 0 : index
    %c0_8 = arith.constant 0 : index
    %20 = vector.load %arg3[%c0_7, %c0_8] : memref<2x2xf32, #tpu.memory_space<vmem>>, vector<2x2xf32>
    tpu.vector_store %arg3[%c0_7, %c0_8], %19 {strides = array<i32>} : memref<2x2xf32, #tpu.memory_space<vmem>>, vector<2x2xf32>,
    return
  }
}

</mosaic_0001>

<llo_original>
// kernel: eq.17
$region0: #{eq.17}
  %s0 = inlined_call_operand.vmem [shape: s32[2,5], index: 0, kind: input, shape index: {}]
  %s1 = inlined_call_operand.vmem [shape: s32[10], index: 1, kind: output, shape index: {}]
  $region1: #{eq.17} parent=0
    #allocation0 [shape = 'u8[4096]{0}', space=vmem, size = 0x1000, scoped, tag = 'scoped mem for output reshape']
    #allocation1 [shape = 'u8[4096]{0}', space=vmem, size = 0x1000, scoped, tag = 'scoped mem for input reshape']
    %s3 = ssub.s32 4, 1
    %v4 = vld [vmem:[%s0] sm:%s3]
    %5 = vst [vmem:[#allocation1] sm:%s3] %v4
    %v6 = vld [vmem:[#allocation1] sm:$0x1]
    %vm7 = vcmask 39936
    %8 = vst.msk [vmem:[#allocation0] sm:$0x1] %vm7, %v6
    %s9 = scalar_lea.vmem [#allocation1], 1
    %v10 = vld [vmem:[%s9] sm:$0x1]
    %11 = vrot.lane.b32.xlu0 %v10, 5
    %v12 = vpop.permute.xlu0 %11
    %vm13 = vcmask 80936
    %14 = vst.msk [vmem:[#allocation0] sm:$0x1] %vm13, %v12
    %s16 = ssub.s32 2, 1
    %v17 = vld [vmem:[#allocation0] sm:%s16]
    %s19 = ssub.s32 2, 1
    %20 = vst [vmem:[%s1] sm:%s19] %v17

// kernel: clip_forward.4
$region0: #{clip_forward.4}
  #allocation0 [shape = 'u32[]', space=smem, size = 0x4, offset = 0x4, fixed_abs, tag = 'smem constant byte address 0x4 - core index']
  #allocation1 [shape = 'u32[72,128]{1,0:T(1,128)}', space=vmem, size = 0x9000, scoped, tag = 'internal scratch']
  %s0 = inlined_call_operand.vmem [shape: f32[8,192], index: 0, kind: input, shape index: {}]
  %s1 = inlined_call_operand.vmem [shape: f32[192,64], index: 1, kind: input, shape index: {}]
  %s2 = inlined_call_operand.vmem [shape: f32[1,64], index: 2, kind: input, shape index: {}]
  %s3 = inlined_call_operand.vmem [shape: f32[8,64], index: 3, kind: output, shape index: {}]
  %s4 = sld [smem:[#allocation0]]
  $region22: #{clip_forward.4} parent=0
    _
  %s6 = ssub.s32 1, %s4
  %s7 = scalar_select 0, %s6, %s4
  // Predicated region
  $region2: #{clip_forward.4} parent=0 // pred_check
    _
  $region3: #{clip_forward.4} parent=0 // pred_check_branch
    %9 = sbr.rel (0) target = $region5
  $region4: #{clip_forward.4} parent=0 // pred_region
    _
  $region5: #{clip_forward.4} parent=0 // pred_fallthru
    _
  // Predicated region
  $region6: #{clip_forward.4} parent=0 // pred_check
    _
  $region7: #{clip_forward.4} parent=0 // pred_check_branch
    %11 = sbr.rel (0) target = $region9
  $region8: #{clip_forward.4} parent=0 // pred_region
    _
  $region9: #{clip_forward.4} parent=0 // pred_fallthru
    _
  // Predicated region
  $region10: #{clip_forward.4} parent=0 // pred_check
    _
  $region11: #{clip_forward.4} parent=0 // pred_check_branch
    %13 = sbr.rel (0) target = $region13
  $region12: #{clip_forward.4} parent=0 // pred_region
    _
  $region13: #{clip_forward.4} parent=0 // pred_fallthru
    _
  %v14 = vld [vmem:[%s0] sm:$0xff]
  %v15 = vld [vmem:[%s0 + $0x8] sm:$0xff]
  %v16 = vld [vmem:[%s1] sm:$0xff]
  %v17 = vld [vmem:[%s1 + $0x8] sm:$0xff]
  %v18 = vld [vmem:[%s1 + $0x10] sm:$0xff]
  %v19 = vld [vmem:[%s1 + $0x18] sm:$0xff]
  %v20 = vld [vmem:[%s1 + $0x20] sm:$0xff]
  %v21 = vld [vmem:[%s1 + $0x28] sm:$0xff]
  %v22 = vld [vmem:[%s1 + $0x30] sm:$0xff]
  %v23 = vld [vmem:[%s1 + $0x38] sm:$0xff]
  %v24 = vld [vmem:[%s1 + $0x40] sm:$0xff]
  %v25 = vld [vmem:[%s1 + $0x48] sm:$0xff]
  %v26 = vld [vmem:[%s1 + $0x50] sm:$0xff]
  %v27 = vld [vmem:[%s1 + $0x58] sm:$0xff]
  %v28 = vld [vmem:[%s1 + $0x60] sm:$0xff]
  %v29 = vld [vmem:[%s1 + $0x68] sm:$0xff]
  %v30 = vld [vmem:[%s1 + $0x70] sm:$0xff]
  %v31 = vld [vmem:[%s1 + $0x78] sm:$0xff]
  %v32 = vld [vmem:[%s1 + $0x80] sm:$0xff]
  %v33 = vld [vmem:[%s1 + $0x88] sm:$0xff]
  %v34 = vld [vmem:[%s1 + $0x90] sm:$0xff]
  %v35 = vld [vmem:[%s1 + $0x98] sm:$0xff]
  %v36 = vld [vmem:[%s1 + $0xa0] sm:$0xff]
  %v37 = vld [vmem:[%s1 + $0xa8] sm:$0xff]
  %v38 = vld [vmem:[%s1 + $0xb0] sm:$0xff]
  %v39 = vld [vmem:[%s1 + $0xb8] sm:$0xff]
  %v40 = vld [vmem:[%s2] sm:$0x1]
  %v42 = vperm.slane %v40, 0
  %vm44 = vcmask 523264
  %v46 = vsel %vm44, %v15, 0
  %48 = vmatpush.msra.mxu0 %v31
  %49 = vmatpush.msra.mxu0 %v30
  %50 = vmatpush.msra.mxu0 %v29
  %51 = vmatpush.msra.mxu0 %v28
  %52 = vmatpush.msra.mxu0 %v27
  %53 = vmatpush.msra.mxu0 %v26
  %54 = vmatpush.msra.mxu0 %v25
  %55 = vmatpush.msra.mxu0 %v24
  %56 = vmatpush.msra.mxu0 %v23
  %57 = vmatpush.msra.mxu0 %v22
  %58 = vmatpush.msra.mxu0 %v21
  %59 = vmatpush.msra.mxu0 %v20
  %60 = vmatpush.msra.mxu0 %v19
  %61 = vmatpush.msra.mxu0 %v18
  %62 = vmatpush.msra.mxu0 %v17
  %63 = vmatpush.msra.mxu0 %v16
  %64 = vmatmul.f32.gmra.mxu0 %v14
  %v65 = vpop.f32.mrf.mxu0
  %v66 = vadd.f32 %v42, %v65
  %67 = vdwg.mxu0
  %68 = vmatpush.msra.mxu0 0.0
  %69 = vmatpush.msra.mxu0 0.0
  %70 = vmatpush.msra.mxu0 0.0
  %71 = vmatpush.msra.mxu0 0.0
  %72 = vmatpush.msra.mxu0 0.0
  %73 = vmatpush.msra.mxu0 0.0
  %74 = vmatpush.msra.mxu0 0.0
  %75 = vmatpush.msra.mxu0 0.0
  %76 = vmatpush.msra.mxu0 %v39
  %77 = vmatpush.msra.mxu0 %v38
  %78 = vmatpush.msra.mxu0 %v37
  %79 = vmatpush.msra.mxu0 %v36
  %80 = vmatpush.msra.mxu0 %v35
  %81 = vmatpush.msra.mxu0 %v34
  %82 = vmatpush.msra.mxu0 %v33
  %83 = vmatpush.msra.mxu0 %v32
  %84 = vmatmul.f32.gmra.mxu0 %v46
  %v85 = vpop.f32.mrf.mxu0
  %v86 = vadd.f32 %v66, %v85
  %87 = vdwg.mxu0
  %88 = vst.msk [vmem:[%s3] sm:$0xff] %vm44, %v86
  // Predicated region
  $region14: #{clip_forward.4} parent=0 // pred_check
    _
  $region15: #{clip_forward.4} parent=0 // pred_check_branch
    %90 = sbr.rel (0) target = $region17
  $region16: #{clip_forward.4} parent=0 // pred_region
    _
  $region17: #{clip_forward.4} parent=0 // pred_fallthru
    _
  // Predicated region
  $region18: #{clip_forward.4} parent=0 // pred_check
    _
  $region19: #{clip_forward.4} parent=0 // pred_check_branch
    %92 = sbr.rel (0) target = $region21
  $region20: #{clip_forward.4} parent=0 // pred_region
    _
  $region21: #{clip_forward.4} parent=0 // pred_fallthru
    _

// kernel: clip_forward.7
$region0: #{clip_forward.7}
  #allocation0 [shape = 'u32[]', space=smem, size = 0x4, offset = 0x4, fixed_abs, tag = 'smem constant byte address 0x4 - core index']
  #allocation1 [shape = 'u32[72,128]{1,0:T(1,128)}', space=vmem, size = 0x9000, scoped, tag = 'internal scratch']
  #allocation2 [shape = 'f32[1,1]{1,0:T(1,128)S(1)}', space=vmem, size = 0x200, scoped, tag = 'scoped memory for clip_forward.7']
  %s0 = inlined_call_operand.vmem [shape: f32[2,32], index: 0, kind: input, shape index: {}]
  %s1 = inlined_call_operand.vmem [shape: f32[2,32], index: 1, kind: input, shape index: {}]
  %s2 = inlined_call_operand.<no memory space> [shape: f32[1,1], index: 2, kind: input, shape index: {}]
  %s3 = inlined_call_operand.vmem [shape: f32[2,2], index: 3, kind: output, shape index: {}]
  %s4 = sld [smem:[#allocation0]]
  $region22: #{clip_forward.7} parent=0
    _
  %s6 = ssub.s32 1, %s4
  %s7 = scalar_select 0, %s6, %s4
  %v8 = vstv %s2
  %9 = vst [vmem:[#allocation2] sm:$0x1] %v8
  // Predicated region
  $region2: #{clip_forward.7} parent=0 // pred_check
    _
  $region3: #{clip_forward.7} parent=0 // pred_check_branch
    %11 = sbr.rel (0) target = $region5
  $region4: #{clip_forward.7} parent=0 // pred_region
    _
  $region5: #{clip_forward.7} parent=0 // pred_fallthru
    _
  // Predicated region
  $region6: #{clip_forward.7} parent=0 // pred_check
    _
  $region7: #{clip_forward.7} parent=0 // pred_check_branch
    %13 = sbr.rel (0) target = $region9
  $region8: #{clip_forward.7} parent=0 // pred_region
    _
  $region9: #{clip_forward.7} parent=0 // pred_fallthru
    _
  // Predicated region
  $region10: #{clip_forward.7} parent=0 // pred_check
    _
  $region11: #{clip_forward.7} parent=0 // pred_check_branch
    %15 = sbr.rel (0) target = $region13
  $region12: #{clip_forward.7} parent=0 // pred_region
    _
  $region13: #{clip_forward.7} parent=0 // pred_fallthru
    _
  %v16 = vld [vmem:[%s0] sm:$0x3]
  %v17 = vld [vmem:[%s1] sm:$0x3]
  %v18 = vmul.f32 %v16, %v16
  %vm19 = vcmask 254976
  %v20 = vsel %vm19, %v18, 0.0
  %21 = vadd.xlane.f32.xlu0 %v20
  %v22 = vpop.xlane.xlu0 %21
  %v23 = vrsqrt.pop %v22
  %v24 = vmul.f32 %v23, %v22
  %v25 = vmul.f32 %v24, %v23
  %v26 = vmul.f32 0.5, %v25
  %v27 = vsub.f32 1.5, %v26
  %v28 = vmul.f32 %v23, %v27
  %vm29 = vweird.f32 %v22
  %vm30 = vweird.f32 %v23
  %vm31 = vmor %vm29, %vm30
  %v32 = vsel %vm31, %v23, %v28
  %v33 = vmul.f32 %v16, %v32
  %v34 = vmul.f32 %v17, %v17
  %v35 = vsel %vm19, %v34, 0.0
  %36 = vadd.xlane.f32.xlu0 %v35
  %v37 = vpop.xlane.xlu0 %36
  %v38 = vrsqrt.pop %v37
  %v39 = vmul.f32 %v38, %v37
  %v40 = vmul.f32 %v39, %v38
  %v41 = vmul.f32 0.5, %v40
  %v42 = vsub.f32 1.5, %v41
  %v43 = vmul.f32 %v38, %v42
  %vm44 = vweird.f32 %v37
  %vm45 = vweird.f32 %v38
  %vm46 = vmor %vm44, %vm45
  %v47 = vsel %vm46, %v38, %v43
  %v48 = vmul.f32 %v17, %v47
  %v49 = vld [vmem:[#allocation2] sm:$0x1]
  %s50 = vtos %v49
  %v51 = vstv %s50
  %v52 = vmul.f32 %v51, 1.442695
  %v53 = vpow.pop %v52
  %s54 = vtos %v53
  %vm55 = vcmask 261120
  %v57 = vsel %vm55, %v33, 0
  %v60 = vsel %vm55, %v48, 0
  %62 = vmatpush.xpose.msra.mxu0 0.0
  %63 = vmatpush.xpose.msra.mxu0 0.0
  %64 = vmatpush.xpose.msra.mxu0 0.0
  %65 = vmatpush.xpose.msra.mxu0 0.0
  %66 = vmatpush.xpose.msra.mxu0 0.0
  %67 = vmatpush.xpose.msra.mxu0 0.0
  %68 = vmatpush.xpose.msra.mxu0 0.0
  %69 = vmatpush.xpose.msra.mxu0 0.0
  %70 = vmatpush.xpose.msra.mxu0 0.0
  %71 = vmatpush.xpose.msra.mxu0 0.0
  %72 = vmatpush.xpose.msra.mxu0 0.0
  %73 = vmatpush.xpose.msra.mxu0 0.0
  %74 = vmatpush.xpose.msra.mxu0 0.0
  %75 = vmatpush.xpose.msra.mxu0 0.0
  %76 = vmatpush.xpose.msra.mxu0 0.0
  %77 = vmatpush.xpose.msra.mxu0 %v60
  %78 = vmatmul.f32.gmra.mxu0 %v57
  %v79 = vpop.f32.mrf.mxu0
  %v80 = vadd.f32 0.0, %v79
  %81 = vdwg.mxu0
  %v82 = vstv %s54
  %v83 = vmul.f32 %v82, %v80
  %vm84 = vcmask 9216
  %85 = vst.msk [vmem:[%s3] sm:$0x3] %vm84, %v83
  // Predicated region
  $region14: #{clip_forward.7} parent=0 // pred_check
    _
  $region15: #{clip_forward.7} parent=0 // pred_check_branch
    %87 = sbr.rel (0) target = $region17
  $region16: #{clip_forward.7} parent=0 // pred_region
    _
  $region17: #{clip_forward.7} parent=0 // pred_fallthru
    _
  // Predicated region
  $region18: #{clip_forward.7} parent=0 // pred_check
    _
  $region19: #{clip_forward.7} parent=0 // pred_check_branch
    %89 = sbr.rel (0) target = $region21
  $region20: #{clip_forward.7} parent=0 // pred_region
    _
  $region21: #{clip_forward.7} parent=0 // pred_fallthru
    _

// kernel: clip_forward.6
$region0: #{clip_forward.6}
  #allocation0 [shape = 'u32[]', space=smem, size = 0x4, offset = 0x4, fixed_abs, tag = 'smem constant byte address 0x4 - core index']
  #allocation1 [shape = 'u32[72,128]{1,0:T(1,128)}', space=vmem, size = 0x9000, scoped, tag = 'internal scratch']
  %s0 = inlined_call_operand.smem [shape: u32[30], index: -1, kind: input, shape index: {}]
  %s1 = sld [smem:[%s0]]
  %s2 = scalar_lea.smem %s0, 1
  %s3 = sld [smem:[%s2]]
  %s4 = scalar_lea.smem %s0, 2
  %s5 = sld [smem:[%s4]]
  %s6 = scalar_lea.smem %s0, 3
  %s7 = sld [smem:[%s6]]
  %s8 = scalar_lea.smem %s0, 4
  %s9 = sld [smem:[%s8]]
  %s10 = scalar_lea.smem %s0, 5
  %s11 = sld [smem:[%s10]]
  %s12 = scalar_lea.smem %s0, 6
  %s13 = sld [smem:[%s12]]
  %s14 = scalar_lea.smem %s0, 7
  %s15 = sld [smem:[%s14]]
  %s16 = scalar_lea.smem %s0, 8
  %s17 = sld [smem:[%s16]]
  %s18 = scalar_lea.smem %s0, 9
  %s19 = sld [smem:[%s18]]
  %s20 = scalar_lea.smem %s0, 10
  %s21 = sld [smem:[%s20]]
  %s22 = scalar_lea.smem %s0, 11
  %s23 = sld [smem:[%s22]]
  %s24 = scalar_lea.smem %s0, 12
  %s25 = sld [smem:[%s24]]
  %s26 = scalar_lea.smem %s0, 13
  %s27 = sld [smem:[%s26]]
  %s28 = scalar_lea.smem %s0, 14
  %s29 = sld [smem:[%s28]]
  %s30 = scalar_lea.smem %s0, 15
  %s31 = sld [smem:[%s30]]
  %s32 = scalar_lea.smem %s0, 16
  %s33 = sld [smem:[%s32]]
  %s34 = scalar_lea.smem %s0, 17
  %s35 = sld [smem:[%s34]]
  %s36 = scalar_lea.smem %s0, 18
  %s37 = sld [smem:[%s36]]
  %s38 = scalar_lea.smem %s0, 19
  %s39 = sld [smem:[%s38]]
  %s40 = scalar_lea.smem %s0, 20
  %s41 = sld [smem:[%s40]]
  %s42 = scalar_lea.smem %s0, 21
  %s43 = sld [smem:[%s42]]
  %s44 = scalar_lea.smem %s0, 22
  %s45 = sld [smem:[%s44]]
  %s46 = scalar_lea.smem %s0, 23
  %s47 = sld [smem:[%s46]]
  %s48 = scalar_lea.smem %s0, 24
  %s49 = sld [smem:[%s48]]
  %s50 = scalar_lea.smem %s0, 25
  %s51 = sld [smem:[%s50]]
  %s52 = scalar_lea.smem %s0, 26
  %s53 = sld [smem:[%s52]]
  %s54 = scalar_lea.smem %s0, 27
  %s55 = sld [smem:[%s54]]
  %s56 = scalar_lea.smem %s0, 28
  %s57 = sld [smem:[%s56]]
  %s58 = scalar_lea.smem %s0, 29
  %s59 = sld [smem:[%s58]]
  %s60 = sld [smem:[#allocation0]]
  $region126: #{clip_forward.6} parent=0
    _
  %s62 = ssub.s32 1, %s60
  %s63 = scalar_select 0, %s62, %s60
  // Predicated region
  $region2: #{clip_forward.6} parent=0 // pred_check
    _
  $region3: #{clip_forward.6} parent=0 // pred_check_branch
    %65 = sbr.rel (0) target = $region5
  $region4: #{clip_forward.6} parent=0 // pred_region
    _
  $region5: #{clip_forward.6} parent=0 // pred_fallthru
    _
  // Predicated region
  $region6: #{clip_forward.6} parent=0 // pred_check
    _
  $region7: #{clip_forward.6} parent=0 // pred_check_branch
    %67 = sbr.rel (0) target = $region9
  $region8: #{clip_forward.6} parent=0 // pred_region
    _
  $region9: #{clip_forward.6} parent=0 // pred_fallthru
    _
  // Predicated region
  $region10: #{clip_forward.6} parent=0 // pred_check
    _
  $region11: #{clip_forward.6} parent=0 // pred_check_branch
    %69 = sbr.rel (0) target = $region13
  $region12: #{clip_forward.6} parent=0 // pred_region
    _
  $region13: #{clip_forward.6} parent=0 // pred_fallthru
    _
  // Predicated region
  $region14: #{clip_forward.6} parent=0 // pred_check
    _
  $region15: #{clip_forward.6} parent=0 // pred_check_branch
    %71 = sbr.rel (0) target = $region17
  $region16: #{clip_forward.6} parent=0 // pred_region
    _
  $region17: #{clip_forward.6} parent=0 // pred_fallthru
    _
  // Predicated region
  $region18: #{clip_forward.6} parent=0 // pred_check
    _
  $region19: #{clip_forward.6} parent=0 // pred_check_branch
    %73 = sbr.rel (0) target = $region21
  $region20: #{clip_forward.6} parent=0 // pred_region
    _
  $region21: #{clip_forward.6} parent=0 // pred_fallthru
    _
  // Predicated region
  $region22: #{clip_forward.6} parent=0 // pred_check
    _
  $region23: #{clip_forward.6} parent=0 // pred_check_branch
    %75 = sbr.rel (0) target = $region25
  $region24: #{clip_forward.6} parent=0 // pred_region
    _
  $region25: #{clip_forward.6} parent=0 // pred_fallthru
    _
  // Predicated region
  $region26: #{clip_forward.6} parent=0 // pred_check
    _
  $region27: #{clip_forward.6} parent=0 // pred_check_branch
    %77 = sbr.rel (0) target = $region29
  $region28: #{clip_forward.6} parent=0 // pred_region
    _
  $region29: #{clip_forward.6} parent=0 // pred_fallthru
    _
  // Predicated region
  $region30: #{clip_forward.6} parent=0 // pred_check
    _
  $region31: #{clip_forward.6} parent=0 // pred_check_branch
    %79 = sbr.rel (0) target = $region33
  $region32: #{clip_forward.6} parent=0 // pred_region
    _
  $region33: #{clip_forward.6} parent=0 // pred_fallthru
    _
  // Predicated region
  $region34: #{clip_forward.6} parent=0 // pred_check
    _
  $region35: #{clip_forward.6} parent=0 // pred_check_branch
    %81 = sbr.rel (0) target = $region37
  $region36: #{clip_forward.6} parent=0 // pred_region
    _
  $region37: #{clip_forward.6} parent=0 // pred_fallthru
    _
  // Predicated region
  $region38: #{clip_forward.6} parent=0 // pred_check
    _
  $region39: #{clip_forward.6} parent=0 // pred_check_branch
    %83 = sbr.rel (0) target = $region41
  $region40: #{clip_forward.6} parent=0 // pred_region
    _
  $region41: #{clip_forward.6} parent=0 // pred_fallthru
    _
  // Predicated region
  $region42: #{clip_forward.6} parent=0 // pred_check
    _
  $region43: #{clip_forward.6} parent=0 // pred_check_branch
    %85 = sbr.rel (0) target = $region45
  $region44: #{clip_forward.6} parent=0 // pred_region
    _
  $region45: #{clip_forward.6} parent=0 // pred_fallthru
    _
  // Predicated region
  $region46: #{clip_forward.6} parent=0 // pred_check
    _
  $region47: #{clip_forward.6} parent=0 // pred_check_branch
    %87 = sbr.rel (0) target = $region49
  $region48: #{clip_forward.6} parent=0 // pred_region
    _
  $region49: #{clip_forward.6} parent=0 // pred_fallthru
    _
  // Predicated region
  $region50: #{clip_forward.6} parent=0 // pred_check
    _
  $region51: #{clip_forward.6} parent=0 // pred_check_branch
    %89 = sbr.rel (0) target = $region53
  $region52: #{clip_forward.6} parent=0 // pred_region
    _
  $region53: #{clip_forward.6} parent=0 // pred_fallthru
    _
  // Predicated region
  $region54: #{clip_forward.6} parent=0 // pred_check
    _
  $region55: #{clip_forward.6} parent=0 // pred_check_branch
    %91 = sbr.rel (0) target = $region57
  $region56: #{clip_forward.6} parent=0 // pred_region
    _
  $region57: #{clip_forward.6} parent=0 // pred_fallthru
    _
  // Predicated region
  $region58: #{clip_forward.6} parent=0 // pred_check
    _
  $region59: #{clip_forward.6} parent=0 // pred_check_branch
    %93 = sbr.rel (0) target = $region61
  $region60: #{clip_forward.6} parent=0 // pred_region
    _
  $region61: #{clip_forward.6} parent=0 // pred_fallthru
    _
  // Predicated region
  $region62: #{clip_forward.6} parent=0 // pred_check
    _
  $region63: #{clip_forward.6} parent=0 // pred_check_branch
    %95 = sbr.rel (0) target = $region65
  $region64: #{clip_forward.6} parent=0 // pred_region
    _
  $region65: #{clip_forward.6} parent=0 // pred_fallthru
    _
  // Predicated region
  $region66: #{clip_forward.6} parent=0 // pred_check
    _
  $region67: #{clip_forward.6} parent=0 // pred_check_branch
    %97 = sbr.rel (0) target = $region69
  $region68: #{clip_forward.6} parent=0 // pred_region
    _
  $region69: #{clip_forward.6} parent=0 // pred_fallthru
    _
  // Predicated region
  $region70: #{clip_forward.6} parent=0 // pred_check
    _
  $region71: #{clip_forward.6} parent=0 // pred_check_branch
    %99 = sbr.rel (0) target = $region73
  $region72: #{clip_forward.6} parent=0 // pred_region
    _
  $region73: #{clip_forward.6} parent=0 // pred_fallthru
    _
  // Predicated region
  $region74: #{clip_forward.6} parent=0 // pred_check
    _
  $region75: #{clip_forward.6} parent=0 // pred_check_branch
    %101 = sbr.rel (0) target = $region77
  $region76: #{clip_forward.6} parent=0 // pred_region
    _
  $region77: #{clip_forward.6} parent=0 // pred_fallthru
    _
  // Predicated region
  $region78: #{clip_forward.6} parent=0 // pred_check
    _
  $region79: #{clip_forward.6} parent=0 // pred_check_branch
    %103 = sbr.rel (0) target = $region81
  $region80: #{clip_forward.6} parent=0 // pred_region
    _
  $region81: #{clip_forward.6} parent=0 // pred_fallthru
    _
  // Predicated region
  $region82: #{clip_forward.6} parent=0 // pred_check
    _
  $region83: #{clip_forward.6} parent=0 // pred_check_branch
    %105 = sbr.rel (0) target = $region85
  $region84: #{clip_forward.6} parent=0 // pred_region
    _
  $region85: #{clip_forward.6} parent=0 // pred_fallthru
    _
  // Predicated region
  $region86: #{clip_forward.6} parent=0 // pred_check
    _
  $region87: #{clip_forward.6} parent=0 // pred_check_branch
    %107 = sbr.rel (0) target = $region89
  $region88: #{clip_forward.6} parent=0 // pred_region
    _
  $region89: #{clip_forward.6} parent=0 // pred_fallthru
    _
  // Predicated region
  $region90: #{clip_forward.6} parent=0 // pred_check
    _
  $region91: #{clip_forward.6} parent=0 // pred_check_branch
    %109 = sbr.rel (0) target = $region93
  $region92: #{clip_forward.6} parent=0 // pred_region
    _
  $region93: #{clip_forward.6} parent=0 // pred_fallthru
    _
  // Predicated region
  $region94: #{clip_forward.6} parent=0 // pred_check
    _
  $region95: #{clip_forward.6} parent=0 // pred_check_branch
    %111 = sbr.rel (0) target = $region97
  $region96: #{clip_forward.6} parent=0 // pred_region
    _
  $region97: #{clip_forward.6} parent=0 // pred_fallthru
    _
  // Predicated region
  $region98: #{clip_forward.6} parent=0 // pred_check
    _
  $region99: #{clip_forward.6} parent=0 // pred_check_branch
    %113 = sbr.rel (0) target = $region101
  $region100: #{clip_forward.6} parent=0 // pred_region
    _
  $region101: #{clip_forward.6} parent=0 // pred_fallthru
    _
  // Predicated region
  $region102: #{clip_forward.6} parent=0 // pred_check
    _
  $region103: #{clip_forward.6} parent=0 // pred_check_branch
    %115 = sbr.rel (0) target = $region105
  $region104: #{clip_forward.6} parent=0 // pred_region
    _
  $region105: #{clip_forward.6} parent=0 // pred_fallthru
    _
  // Predicated region
  $region106: #{clip_forward.6} parent=0 // pred_check
    _
  $region107: #{clip_forward.6} parent=0 // pred_check_branch
    %117 = sbr.rel (0) target = $region109
  $region108: #{clip_forward.6} parent=0 // pred_region
    _
  $region109: #{clip_forward.6} parent=0 // pred_fallthru
    _
  // Predicated region
  $region110: #{clip_forward.6} parent=0 // pred_check
    _
  $region111: #{clip_forward.6} parent=0 // pred_check_branch
    %119 = sbr.rel (0) target = $region113
  $region112: #{clip_forward.6} parent=0 // pred_region
    _
  $region113: #{clip_forward.6} parent=0 // pred_fallthru
    _
  // Predicated region
  $region114: #{clip_forward.6} parent=0 // pred_check
    _
  $region115: #{clip_forward.6} parent=0 // pred_check_branch
    %121 = sbr.rel (0) target = $region117
  $region116: #{clip_forward.6} parent=0 // pred_region
    _
  $region117: #{clip_forward.6} parent=0 // pred_fallthru
    _
  %v122 = vld [vmem:[%s1] sm:$0xff]
  %v123 = vld [vmem:[%s1 + $0x8] sm:$0xff]
  %v124 = vld [vmem:[%s3] sm:$0xff]
  %v125 = vld [vmem:[%s3 + $0x8] sm:$0xff]
  %v126 = vld [vmem:[%s5] sm:$0x1]
  %v127 = vld [vmem:[%s7] sm:$0x1]
  %v128 = vld [vmem:[%s9] sm:$0xff]
  %v129 = vld [vmem:[%s9 + $0x8] sm:$0xff]
  %v130 = vld [vmem:[%s9 + $0x10] sm:$0xff]
  %v131 = vld [vmem:[%s9 + $0x18] sm:$0xff]
  %v132 = vld [vmem:[%s11] sm:$0x1]
  %v133 = vld [vmem:[%s13] sm:$0xff]
  %v134 = vld [vmem:[%s13 + $0x8] sm:$0xff]
  %v135 = vld [vmem:[%s13 + $0x10] sm:$0xff]
  %v136 = vld [vmem:[%s13 + $0x18] sm:$0xff]
  %v137 = vld [vmem:[%s15] sm:$0x1]
  %v138 = vld [vmem:[%s17] sm:$0x1]
  %v139 = vld [vmem:[%s19] sm:$0x1]
  %v140 = vld [vmem:[%s21] sm:$0xff]
  %v141 = vld [vmem:[%s21 + $0x8] sm:$0xff]
  %v142 = vld [vmem:[%s21 + $0x10] sm:$0xff]
  %v143 = vld [vmem:[%s21 + $0x18] sm:$0xff]
  %v144 = vld [vmem:[%s23] sm:$0x1]
  %v145 = vld [vmem:[%s25] sm:$0xff]
  %v146 = vld [vmem:[%s25 + $0x8] sm:$0xff]
  %v147 = vld [vmem:[%s25 + $0x10] sm:$0xff]
  %v148 = vld [vmem:[%s25 + $0x18] sm:$0xff]
  %v149 = vld [vmem:[%s25 + $0x20] sm:$0xff]
  %v150 = vld [vmem:[%s25 + $0x28] sm:$0xff]
  %v151 = vld [vmem:[%s25 + $0x30] sm:$0xff]
  %v152 = vld [vmem:[%s25 + $0x38] sm:$0xff]
  %v153 = vld [vmem:[%s25 + $0x40] sm:$0xff]
  %v154 = vld [vmem:[%s25 + $0x48] sm:$0xff]
  %v155 = vld [vmem:[%s25 + $0x50] sm:$0xff]
  %v156 = vld [vmem:[%s25 + $0x58] sm:$0xff]
  %v157 = vld [vmem:[%s25 + $0x60] sm:$0xff]
  %v158 = vld [vmem:[%s25 + $0x68] sm:$0xff]
  %v159 = vld [vmem:[%s25 + $0x70] sm:$0xff]
  %v160 = vld [vmem:[%s25 + $0x78] sm:$0xff]
  %v161 = vld [vmem:[%s27] sm:$0x1]
  %vm162 = vcmask 261120
  %v163 = vsel %vm162, %v122, 0.0
  %164 = vadd.xlane.f32.xlu0 %v163
  %v165 = vpop.xlane.xlu0 %164
  %v166 = vsel %vm162, %v123, 0.0
  %167 = vadd.xlane.f32.xlu0 %v166
  %v168 = vpop.xlane.xlu0 %167
  %v169 = vrcp.pop 32.0
  %v170 = vmul.f32 32.0, %v169
  %v171 = vsub.f32 1.0, %v170
  %v172 = vmul.f32 %v169, %v171
  %v173 = vadd.f32 %v169, %v172
  %vm174 = vweird.f32 %v169
  %v175 = vsel %vm174, %v169, %v173
  %v176 = vmul.f32 %v165, %v175
  %v177 = vmul.f32 %v168, %v175
  %v178 = vsub.f32 %v122, %v176
  %v179 = vsub.f32 %v123, %v177
  %v180 = vmul.f32 %v178, %v178
  %v181 = vmul.f32 %v179, %v179
  %v182 = vsel %vm162, %v180, 0.0
  %183 = vadd.xlane.f32.xlu0 %v182
  %v184 = vpop.xlane.xlu0 %183
  %v185 = vsel %vm162, %v181, 0.0
  %186 = vadd.xlane.f32.xlu0 %v185
  %v187 = vpop.xlane.xlu0 %186
  %v188 = vmul.f32 %v184, %v175
  %v189 = vmul.f32 %v187, %v175
  %v190 = vadd.f32 %v188, 1e-05
  %v191 = vadd.f32 %v189, 1e-05
  %v192 = vrsqrt.pop %v190
  %v193 = vmul.f32 %v192, %v190
  %v194 = vmul.f32 %v193, %v192
  %v195 = vmul.f32 0.5, %v194
  %v196 = vsub.f32 1.5, %v195
  %v197 = vmul.f32 %v192, %v196
  %vm198 = vweird.f32 %v190
  %vm199 = vweird.f32 %v192
  %vm200 = vmor %vm198, %vm199
  %v201 = vsel %vm200, %v192, %v197
  %v202 = vrsqrt.pop %v191
  %v203 = vmul.f32 %v202, %v191
  %v204 = vmul.f32 %v203, %v202
  %v205 = vmul.f32 0.5, %v204
  %v206 = vsub.f32 1.5, %v205
  %v207 = vmul.f32 %v202, %v206
  %vm208 = vweird.f32 %v191
  %vm209 = vweird.f32 %v202
  %vm210 = vmor %vm208, %vm209
  %v211 = vsel %vm210, %v202, %v207
  %v212 = vmul.f32 %v178, %v201
  %v213 = vmul.f32 %v179, %v211
  %v215 = vperm.slane %v126, 0
  %v217 = vmul.f32 %v212, %v215
  %v218 = vmul.f32 %v213, %v215
  %v220 = vperm.slane %v127, 0
  %v222 = vadd.f32 %v217, %v220
  %v223 = vadd.f32 %v218, %v220
  %v225 = vperm.slane %v132, 0
  %v228 = vsel %vm162, %v222, 0
  %v231 = vsel %vm162, %v223, 0
  %233 = vmatpush.msra.mxu0 0.0
  %234 = vmatpush.msra.mxu0 0.0
  %235 = vmatpush.msra.mxu0 0.0
  %236 = vmatpush.msra.mxu0 0.0
  %237 = vmatpush.msra.mxu0 0.0
  %238 = vmatpush.msra.mxu0 0.0
  %239 = vmatpush.msra.mxu0 0.0
  %240 = vmatpush.msra.mxu0 0.0
  %241 = vmatpush.msra.mxu0 0.0
  %242 = vmatpush.msra.mxu0 0.0
  %243 = vmatpush.msra.mxu0 0.0
  %244 = vmatpush.msra.mxu0 0.0
  %245 = vmatpush.msra.mxu0 %v131
  %246 = vmatpush.msra.mxu0 %v130
  %247 = vmatpush.msra.mxu0 %v129
  %248 = vmatpush.msra.mxu0 %v128
  %249 = vmatmul.f32.gmra.mxu0 %v228
  %v250 = vpop.f32.mrf.mxu0
  %v251 = vadd.f32 %v225, %v250
  %252 = vmatmul.f32.gmra.mxu0 %v231
  %v253 = vpop.f32.mrf.mxu0
  %v254 = vadd.f32 %v225, %v253
  %255 = vdwg.mxu0
  %258 = vrot.lane.b32.xlu0 %v251, 96
  %v259 = vpop.permute.xlu0 %258
  %260 = vrot.lane.b32.xlu0 %v254, 96
  %v261 = vpop.permute.xlu0 %260
  %vm262 = vcmask 130048
  %v263 = vsel %vm262, %v251, 0
  %v265 = vsel %vm262, %v254, 0
  %v267 = vsel %vm262, %v259, 0
  %v269 = vsel %vm262, %v261, 0
  %271 = vmatpush.xpose.msra.mxu0 0.0
  %272 = vmatpush.xpose.msra.mxu0 0.0
  %273 = vmatpush.xpose.msra.mxu0 0.0
  %274 = vmatpush.xpose.msra.mxu0 0.0
  %275 = vmatpush.xpose.msra.mxu0 0.0
  %276 = vmatpush.xpose.msra.mxu0 0.0
  %277 = vmatpush.xpose.msra.mxu0 0.0
  %278 = vmatpush.xpose.msra.mxu0 0.0
  %279 = vmatpush.xpose.msra.mxu0 0.0
  %280 = vmatpush.xpose.msra.mxu0 0.0
  %281 = vmatpush.xpose.msra.mxu0 0.0
  %282 = vmatpush.xpose.msra.mxu0 0.0
  %283 = vmatpush.xpose.msra.mxu0 0.0
  %284 = vmatpush.xpose.msra.mxu0 0.0
  %285 = vmatpush.xpose.msra.mxu0 %v269
  %286 = vmatpush.xpose.msra.mxu0 %v267
  %287 = vmatmul.f32.gmra.mxu0 %v263
  %v288 = vpop.f32.mrf.mxu0
  %v289 = vadd.f32 0.0, %v288
  %290 = vmatmul.f32.gmra.mxu0 %v265
  %v291 = vpop.f32.mrf.mxu0
  %v292 = vadd.f32 0.0, %v291
  %293 = vdwg.mxu0
  %v294 = vmul.f32 %v289, 0.25
  %v295 = vmul.f32 %v292, 0.25
  %v296 = vadd.f32 %v294, %v124
  %v297 = vadd.f32 %v295, %v125
  %v298 = vsel %vm262, %v296, -inf
  %299 = vmax.xlane.f32.xlu0 %v298
  %v300 = vpop.xlane.xlu0 %299
  %v301 = vsel %vm262, %v297, -inf
  %302 = vmax.xlane.f32.xlu0 %v301
  %v303 = vpop.xlane.xlu0 %302
  %v304 = vsub.f32 %v296, %v300
  %v305 = vsub.f32 %v297, %v303
  %v306 = vmul.f32 %v304, 1.442695
  %v307 = vpow.pop %v306
  %v308 = vmul.f32 %v305, 1.442695
  %v309 = vpow.pop %v308
  %v310 = vsel %vm262, %v307, 0.0
  %311 = vadd.xlane.f32.xlu0 %v310
  %v312 = vpop.xlane.xlu0 %311
  %v313 = vsel %vm262, %v309, 0.0
  %314 = vadd.xlane.f32.xlu0 %v313
  %v315 = vpop.xlane.xlu0 %314
  %v316 = vrcp.pop %v312
  %v317 = vrcp.pop %v315
  %v318 = vmul.f32 %v307, %v316
  %v319 = vmul.f32 %v309, %v317
  %320 = vrot.lane.b32.xlu0 %v251, 64
  %v321 = vpop.permute.xlu0 %320
  %322 = vrot.lane.b32.xlu0 %v254, 64
  %v323 = vpop.permute.xlu0 %322
  %v327 = vsel %vm262, %v318, 0
  %v330 = vsel %vm262, %v319, 0
  %332 = vmatpush.msra.mxu0 0.0
  %333 = vmatpush.msra.mxu0 0.0
  %334 = vmatpush.msra.mxu0 0.0
  %335 = vmatpush.msra.mxu0 0.0
  %336 = vmatpush.msra.mxu0 0.0
  %337 = vmatpush.msra.mxu0 0.0
  %338 = vmatpush.msra.mxu0 0.0
  %339 = vmatpush.msra.mxu0 0.0
  %340 = vmatpush.msra.mxu0 0.0
  %341 = vmatpush.msra.mxu0 0.0
  %342 = vmatpush.msra.mxu0 0.0
  %343 = vmatpush.msra.mxu0 0.0
  %344 = vmatpush.msra.mxu0 0.0
  %345 = vmatpush.msra.mxu0 0.0
  %346 = vmatpush.msra.mxu0 %v323
  %347 = vmatpush.msra.mxu0 %v321
  %348 = vmatmul.f32.gmra.mxu0 %v327
  %v349 = vpop.f32.mrf.mxu0
  %v350 = vadd.f32 0.0, %v349
  %351 = vmatmul.f32.gmra.mxu0 %v330
  %v352 = vpop.f32.mrf.mxu0
  %v353 = vadd.f32 0.0, %v352
  %354 = vdwg.mxu0
  %355 = vrot.lane.b32.xlu0 %v251, 112
  %v356 = vpop.permute.xlu0 %355
  %357 = vrot.lane.b32.xlu0 %v254, 112
  %v358 = vpop.permute.xlu0 %357
  %359 = vrot.lane.b32.xlu0 %v251, 80
  %v360 = vpop.permute.xlu0 %359
  %361 = vrot.lane.b32.xlu0 %v254, 80
  %v362 = vpop.permute.xlu0 %361
  %v363 = vsel %vm262, %v356, 0
  %v365 = vsel %vm262, %v358, 0
  %v367 = vsel %vm262, %v360, 0
  %v369 = vsel %vm262, %v362, 0
  %371 = vmatpush.xpose.msra.mxu0 0.0
  %372 = vmatpush.xpose.msra.mxu0 0.0
  %373 = vmatpush.xpose.msra.mxu0 0.0
  %374 = vmatpush.xpose.msra.mxu0 0.0
  %375 = vmatpush.xpose.msra.mxu0 0.0
  %376 = vmatpush.xpose.msra.mxu0 0.0
  %377 = vmatpush.xpose.msra.mxu0 0.0
  %378 = vmatpush.xpose.msra.mxu0 0.0
  %379 = vmatpush.xpose.msra.mxu0 0.0
  %380 = vmatpush.xpose.msra.mxu0 0.0
  %381 = vmatpush.xpose.msra.mxu0 0.0
  %382 = vmatpush.xpose.msra.mxu0 0.0
  %383 = vmatpush.xpose.msra.mxu0 0.0
  %384 = vmatpush.xpose.msra.mxu0 0.0
  %385 = vmatpush.xpose.msra.mxu0 %v369
  %386 = vmatpush.xpose.msra.mxu0 %v367
  %387 = vmatmul.f32.gmra.mxu0 %v363
  %v388 = vpop.f32.mrf.mxu0
  %v389 = vadd.f32 0.0, %v388
  %390 = vmatmul.f32.gmra.mxu0 %v365
  %v391 = vpop.f32.mrf.mxu0
  %v392 = vadd.f32 0.0, %v391
  %393 = vdwg.mxu0
  %v394 = vmul.f32 %v389, 0.25
  %v395 = vmul.f32 %v392, 0.25
  %v396 = vadd.f32 %v394, %v124
  %v397 = vadd.f32 %v395, %v125
  %v398 = vsel %vm262, %v396, -inf
  %399 = vmax.xlane.f32.xlu0 %v398
  %v400 = vpop.xlane.xlu0 %399
  %v401 = vsel %vm262, %v397, -inf
  %402 = vmax.xlane.f32.xlu0 %v401
  %v403 = vpop.xlane.xlu0 %402
  %v404 = vsub.f32 %v396, %v400
  %v405 = vsub.f32 %v397, %v403
  %v406 = vmul.f32 %v404, 1.442695
  %v407 = vpow.pop %v406
  %v408 = vmul.f32 %v405, 1.442695
  %v409 = vpow.pop %v408
  %v410 = vsel %vm262, %v407, 0.0
  %411 = vadd.xlane.f32.xlu0 %v410
  %v412 = vpop.xlane.xlu0 %411
  %v413 = vsel %vm262, %v409, 0.0
  %414 = vadd.xlane.f32.xlu0 %v413
  %v415 = vpop.xlane.xlu0 %414
  %v416 = vrcp.pop %v412
  %v417 = vrcp.pop %v415
  %v418 = vmul.f32 %v407, %v416
  %v419 = vmul.f32 %v409, %v417
  %420 = vrot.lane.b32.xlu0 %v251, 48
  %v421 = vpop.permute.xlu0 %420
  %422 = vrot.lane.b32.xlu0 %v254, 48
  %v423 = vpop.permute.xlu0 %422
  %v427 = vsel %vm262, %v418, 0
  %v430 = vsel %vm262, %v419, 0
  %432 = vmatpush.msra.mxu0 0.0
  %433 = vmatpush.msra.mxu0 0.0
  %434 = vmatpush.msra.mxu0 0.0
  %435 = vmatpush.msra.mxu0 0.0
  %436 = vmatpush.msra.mxu0 0.0
  %437 = vmatpush.msra.mxu0 0.0
  %438 = vmatpush.msra.mxu0 0.0
  %439 = vmatpush.msra.mxu0 0.0
  %440 = vmatpush.msra.mxu0 0.0
  %441 = vmatpush.msra.mxu0 0.0
  %442 = vmatpush.msra.mxu0 0.0
  %443 = vmatpush.msra.mxu0 0.0
  %444 = vmatpush.msra.mxu0 0.0
  %445 = vmatpush.msra.mxu0 0.0
  %446 = vmatpush.msra.mxu0 %v423
  %447 = vmatpush.msra.mxu0 %v421
  %448 = vmatmul.f32.gmra.mxu0 %v427
  %v449 = vpop.f32.mrf.mxu0
  %v450 = vadd.f32 0.0, %v449
  %451 = vmatmul.f32.gmra.mxu0 %v430
  %v452 = vpop.f32.mrf.mxu0
  %v453 = vadd.f32 0.0, %v452
  %454 = vdwg.mxu0
  %457 = vrot.lane.b32.xlu0 %v450, 16
  %v458 = vpop.permute.xlu0 %457
  %459 = vrot.lane.b32.xlu0 %v453, 16
  %v460 = vpop.permute.xlu0 %459
  %v463 = vsel %vm262, %v350, %v458
  %v464 = vsel %vm262, %v353, %v460
  %v466 = vsel %vm162, %v463, 0
  %v469 = vsel %vm162, %v464, 0
  %471 = vmatpush.msra.mxu0 0.0
  %472 = vmatpush.msra.mxu0 0.0
  %473 = vmatpush.msra.mxu0 0.0
  %474 = vmatpush.msra.mxu0 0.0
  %475 = vmatpush.msra.mxu0 0.0
  %476 = vmatpush.msra.mxu0 0.0
  %477 = vmatpush.msra.mxu0 0.0
  %478 = vmatpush.msra.mxu0 0.0
  %479 = vmatpush.msra.mxu0 0.0
  %480 = vmatpush.msra.mxu0 0.0
  %481 = vmatpush.msra.mxu0 0.0
  %482 = vmatpush.msra.mxu0 0.0
  %483 = vmatpush.msra.mxu0 %v136
  %484 = vmatpush.msra.mxu0 %v135
  %485 = vmatpush.msra.mxu0 %v134
  %486 = vmatpush.msra.mxu0 %v133
  %487 = vmatmul.f32.gmra.mxu0 %v466
  %v488 = vpop.f32.mrf.mxu0
  %v489 = vadd.f32 0.0, %v488
  %490 = vmatmul.f32.gmra.mxu0 %v469
  %v491 = vpop.f32.mrf.mxu0
  %v492 = vadd.f32 0.0, %v491
  %493 = vdwg.mxu0
  %v494 = vadd.f32 %v122, %v489
  %v495 = vadd.f32 %v123, %v492
  %v497 = vperm.slane %v137, 0
  %v499 = vadd.f32 %v494, %v497
  %v500 = vadd.f32 %v495, %v497
  %v501 = vsel %vm162, %v499, 0.0
  %502 = vadd.xlane.f32.xlu0 %v501
  %v503 = vpop.xlane.xlu0 %502
  %v504 = vsel %vm162, %v500, 0.0
  %505 = vadd.xlane.f32.xlu0 %v504
  %v506 = vpop.xlane.xlu0 %505
  %v507 = vmul.f32 %v503, %v175
  %v508 = vmul.f32 %v506, %v175
  %v509 = vsub.f32 %v499, %v507
  %v510 = vsub.f32 %v500, %v508
  %v511 = vmul.f32 %v509, %v509
  %v512 = vmul.f32 %v510, %v510
  %v513 = vsel %vm162, %v511, 0.0
  %514 = vadd.xlane.f32.xlu0 %v513
  %v515 = vpop.xlane.xlu0 %514
  %v516 = vsel %vm162, %v512, 0.0
  %517 = vadd.xlane.f32.xlu0 %v516
  %v518 = vpop.xlane.xlu0 %517
  %v519 = vmul.f32 %v515, %v175
  %v520 = vmul.f32 %v518, %v175
  %v521 = vadd.f32 %v519, 1e-05
  %v522 = vadd.f32 %v520, 1e-05
  %v523 = vrsqrt.pop %v521
  %v524 = vmul.f32 %v523, %v521
  %v525 = vmul.f32 %v524, %v523
  %v526 = vmul.f32 0.5, %v525
  %v527 = vsub.f32 1.5, %v526
  %v528 = vmul.f32 %v523, %v527
  %vm529 = vweird.f32 %v521
  %vm530 = vweird.f32 %v523
  %vm531 = vmor %vm529, %vm530
  %v532 = vsel %vm531, %v523, %v528
  %v533 = vrsqrt.pop %v522
  %v534 = vmul.f32 %v533, %v522
  %v535 = vmul.f32 %v534, %v533
  %v536 = vmul.f32 0.5, %v535
  %v537 = vsub.f32 1.5, %v536
  %v538 = vmul.f32 %v533, %v537
  %vm539 = vweird.f32 %v522
  %vm540 = vweird.f32 %v533
  %vm541 = vmor %vm539, %vm540
  %v542 = vsel %vm541, %v533, %v538
  %v543 = vmul.f32 %v509, %v532
  %v544 = vmul.f32 %v510, %v542
  %v546 = vperm.slane %v138, 0
  %v548 = vmul.f32 %v543, %v546
  %v549 = vmul.f32 %v544, %v546
  %v551 = vperm.slane %v139, 0
  %v553 = vadd.f32 %v548, %v551
  %v554 = vadd.f32 %v549, %v551
  %v556 = vperm.slane %v144, 0
  %v559 = vsel %vm162, %v553, 0
  %v562 = vsel %vm162, %v554, 0
  %564 = vmatpush.msra.mxu0 0.0
  %565 = vmatpush.msra.mxu0 0.0
  %566 = vmatpush.msra.mxu0 0.0
  %567 = vmatpush.msra.mxu0 0.0
  %568 = vmatpush.msra.mxu0 0.0
  %569 = vmatpush.msra.mxu0 0.0
  %570 = vmatpush.msra.mxu0 0.0
  %571 = vmatpush.msra.mxu0 0.0
  %572 = vmatpush.msra.mxu0 0.0
  %573 = vmatpush.msra.mxu0 0.0
  %574 = vmatpush.msra.mxu0 0.0
  %575 = vmatpush.msra.mxu0 0.0
  %576 = vmatpush.msra.mxu0 %v143
  %577 = vmatpush.msra.mxu0 %v142
  %578 = vmatpush.msra.mxu0 %v141
  %579 = vmatpush.msra.mxu0 %v140
  %580 = vmatmul.f32.gmra.mxu0 %v559
  %v581 = vpop.f32.mrf.mxu0
  %v582 = vadd.f32 %v556, %v581
  %583 = vmatmul.f32.gmra.mxu0 %v562
  %v584 = vpop.f32.mrf.mxu0
  %v585 = vadd.f32 %v556, %v584
  %586 = vdwg.mxu0
  %v587 = vmul.f32 %v582, -1.702
  %v588 = vmul.f32 %v585, -1.702
  %v589 = vmul.f32 %v587, 1.442695
  %v590 = vpow.pop %v589
  %v591 = vmul.f32 %v588, 1.442695
  %v592 = vpow.pop %v591
  %v593 = vadd.f32 %v590, 1.0
  %v594 = vadd.f32 %v592, 1.0
  %v595 = vrcp.pop %v593
  %v596 = vmul.f32 %v593, %v595
  %v597 = vsub.f32 1.0, %v596
  %v598 = vmul.f32 %v595, %v597
  %v599 = vadd.f32 %v595, %v598
  %vm600 = vweird.f32 %v593
  %vm601 = vweird.f32 %v595
  %vm602 = vmor %vm600, %vm601
  %v603 = vsel %vm602, %v595, %v599
  %v604 = vand.u32 2147483647, %v593
  %vm605 = vcmp.eq.f32.partialorder %v604, 8.507059e+37
  %v606 = vand.u32 %v593, 2147483648
  %v607 = vor.u32 1.1754944e-38, %v606
  %v608 = vsel %vm605, %v607, %v603
  %v609 = vmul.f32 1.0, %v608
  %v610 = vrcp.pop %v594
  %v611 = vmul.f32 %v594, %v610
  %v612 = vsub.f32 1.0, %v611
  %v613 = vmul.f32 %v610, %v612
  %v614 = vadd.f32 %v610, %v613
  %vm615 = vweird.f32 %v594
  %vm616 = vweird.f32 %v610
  %vm617 = vmor %vm615, %vm616
  %v618 = vsel %vm617, %v610, %v614
  %v619 = vand.u32 2147483647, %v594
  %vm620 = vcmp.eq.f32.partialorder %v619, 8.507059e+37
  %v621 = vand.u32 %v594, 2147483648
  %v622 = vor.u32 1.1754944e-38, %v621
  %v623 = vsel %vm620, %v622, %v618
  %v624 = vmul.f32 1.0, %v623
  %v625 = vmul.f32 %v582, %v609
  %v626 = vmul.f32 %v585, %v624
  %627 = vmatpush.msra.mxu0 %v160
  %628 = vmatpush.msra.mxu0 %v159
  %629 = vmatpush.msra.mxu0 %v158
  %630 = vmatpush.msra.mxu0 %v157
  %631 = vmatpush.msra.mxu0 %v156
  %632 = vmatpush.msra.mxu0 %v155
  %633 = vmatpush.msra.mxu0 %v154
  %634 = vmatpush.msra.mxu0 %v153
  %635 = vmatpush.msra.mxu0 %v152
  %636 = vmatpush.msra.mxu0 %v151
  %637 = vmatpush.msra.mxu0 %v150
  %638 = vmatpush.msra.mxu0 %v149
  %639 = vmatpush.msra.mxu0 %v148
  %640 = vmatpush.msra.mxu0 %v147
  %641 = vmatpush.msra.mxu0 %v146
  %642 = vmatpush.msra.mxu0 %v145
  %643 = vmatmul.f32.gmra.mxu0 %v625
  %v644 = vpop.f32.mrf.mxu0
  %v645 = vadd.f32 0.0, %v644
  %646 = vmatmul.f32.gmra.mxu0 %v626
  %v647 = vpop.f32.mrf.mxu0
  %v648 = vadd.f32 0.0, %v647
  %649 = vdwg.mxu0
  %v650 = vadd.f32 %v499, %v645
  %v651 = vadd.f32 %v500, %v648
  %v653 = vperm.slane %v161, 0
  %v655 = vadd.f32 %v650, %v653
  %v656 = vadd.f32 %v651, %v653
  %v657 = vld [vmem:[%s29] sm:$0x1]
  %v658 = vld [vmem:[%s31] sm:$0x1]
  %v659 = vld [vmem:[%s33] sm:$0xff]
  %v660 = vld [vmem:[%s33 + $0x8] sm:$0xff]
  %v661 = vld [vmem:[%s33 + $0x10] sm:$0xff]
  %v662 = vld [vmem:[%s33 + $0x18] sm:$0xff]
  %v663 = vld [vmem:[%s35] sm:$0x1]
  %v664 = vld [vmem:[%s37] sm:$0xff]
  %v665 = vld [vmem:[%s37 + $0x8] sm:$0xff]
  %v666 = vld [vmem:[%s37 + $0x10] sm:$0xff]
  %v667 = vld [vmem:[%s37 + $0x18] sm:$0xff]
  %v668 = vld [vmem:[%s39] sm:$0x1]
  %v669 = vld [vmem:[%s41] sm:$0x1]
  %v670 = vld [vmem:[%s43] sm:$0x1]
  %v671 = vld [vmem:[%s45] sm:$0xff]
  %v672 = vld [vmem:[%s45 + $0x8] sm:$0xff]
  %v673 = vld [vmem:[%s45 + $0x10] sm:$0xff]
  %v674 = vld [vmem:[%s45 + $0x18] sm:$0xff]
  %v675 = vld [vmem:[%s47] sm:$0x1]
  %v676 = vld [vmem:[%s49] sm:$0xff]
  %v677 = vld [vmem:[%s49 + $0x8] sm:$0xff]
  %v678 = vld [vmem:[%s49 + $0x10] sm:$0xff]
  %v679 = vld [vmem:[%s49 + $0x18] sm:$0xff]
  %v680 = vld [vmem:[%s49 + $0x20] sm:$0xff]
  %v681 = vld [vmem:[%s49 + $0x28] sm:$0xff]
  %v682 = vld [vmem:[%s49 + $0x30] sm:$0xff]
  %v683 = vld [vmem:[%s49 + $0x38] sm:$0xff]
  %v684 = vld [vmem:[%s49 + $0x40] sm:$0xff]
  %v685 = vld [vmem:[%s49 + $0x48] sm:$0xff]
  %v686 = vld [vmem:[%s49 + $0x50] sm:$0xff]
  %v687 = vld [vmem:[%s49 + $0x58] sm:$0xff]
  %v688 = vld [vmem:[%s49 + $0x60] sm:$0xff]
  %v689 = vld [vmem:[%s49 + $0x68] sm:$0xff]
  %v690 = vld [vmem:[%s49 + $0x70] sm:$0xff]
  %v691 = vld [vmem:[%s49 + $0x78] sm:$0xff]
  %v692 = vld [vmem:[%s51] sm:$0x1]
  %v693 = vsel %vm162, %v655, 0.0
  %694 = vadd.xlane.f32.xlu0 %v693
  %v695 = vpop.xlane.xlu0 %694
  %v696 = vsel %vm162, %v656, 0.0
  %697 = vadd.xlane.f32.xlu0 %v696
  %v698 = vpop.xlane.xlu0 %697
  %v699 = vmul.f32 %v695, %v175
  %v700 = vmul.f32 %v698, %v175
  %v701 = vsub.f32 %v655, %v699
  %v702 = vsub.f32 %v656, %v700
  %v703 = vmul.f32 %v701, %v701
  %v704 = vmul.f32 %v702, %v702
  %v705 = vsel %vm162, %v703, 0.0
  %706 = vadd.xlane.f32.xlu0 %v705
  %v707 = vpop.xlane.xlu0 %706
  %v708 = vsel %vm162, %v704, 0.0
  %709 = vadd.xlane.f32.xlu0 %v708
  %v710 = vpop.xlane.xlu0 %709
  %v711 = vmul.f32 %v707, %v175
  %v712 = vmul.f32 %v710, %v175
  %v713 = vadd.f32 %v711, 1e-05
  %v714 = vadd.f32 %v712, 1e-05
  %v715 = vrsqrt.pop %v713
  %v716 = vmul.f32 %v715, %v713
  %v717 = vmul.f32 %v716, %v715
  %v718 = vmul.f32 0.5, %v717
  %v719 = vsub.f32 1.5, %v718
  %v720 = vmul.f32 %v715, %v719
  %vm721 = vweird.f32 %v713
  %vm722 = vweird.f32 %v715
  %vm723 = vmor %vm721, %vm722
  %v724 = vsel %vm723, %v715, %v720
  %v725 = vrsqrt.pop %v714
  %v726 = vmul.f32 %v725, %v714
  %v727 = vmul.f32 %v726, %v725
  %v728 = vmul.f32 0.5, %v727
  %v729 = vsub.f32 1.5, %v728
  %v730 = vmul.f32 %v725, %v729
  %vm731 = vweird.f32 %v714
  %vm732 = vweird.f32 %v725
  %vm733 = vmor %vm731, %vm732
  %v734 = vsel %vm733, %v725, %v730
  %v735 = vmul.f32 %v701, %v724
  %v736 = vmul.f32 %v702, %v734
  %v738 = vperm.slane %v657, 0
  %v740 = vmul.f32 %v735, %v738
  %v741 = vmul.f32 %v736, %v738
  %v743 = vperm.slane %v658, 0
  %v745 = vadd.f32 %v740, %v743
  %v746 = vadd.f32 %v741, %v743
  %v748 = vperm.slane %v663, 0
  %v751 = vsel %vm162, %v745, 0
  %v754 = vsel %vm162, %v746, 0
  %756 = vmatpush.msra.mxu0 0.0
  %757 = vmatpush.msra.mxu0 0.0
  %758 = vmatpush.msra.mxu0 0.0
  %759 = vmatpush.msra.mxu0 0.0
  %760 = vmatpush.msra.mxu0 0.0
  %761 = vmatpush.msra.mxu0 0.0
  %762 = vmatpush.msra.mxu0 0.0
  %763 = vmatpush.msra.mxu0 0.0
  %764 = vmatpush.msra.mxu0 0.0
  %765 = vmatpush.msra.mxu0 0.0
  %766 = vmatpush.msra.mxu0 0.0
  %767 = vmatpush.msra.mxu0 0.0
  %768 = vmatpush.msra.mxu0 %v662
  %769 = vmatpush.msra.mxu0 %v661
  %770 = vmatpush.msra.mxu0 %v660
  %771 = vmatpush.msra.mxu0 %v659
  %772 = vmatmul.f32.gmra.mxu0 %v751
  %v773 = vpop.f32.mrf.mxu0
  %v774 = vadd.f32 %v748, %v773
  %775 = vmatmul.f32.gmra.mxu0 %v754
  %v776 = vpop.f32.mrf.mxu0
  %v777 = vadd.f32 %v748, %v776
  %778 = vdwg.mxu0
  %781 = vrot.lane.b32.xlu0 %v774, 96
  %v782 = vpop.permute.xlu0 %781
  %783 = vrot.lane.b32.xlu0 %v777, 96
  %v784 = vpop.permute.xlu0 %783
  %v785 = vsel %vm262, %v774, 0
  %v787 = vsel %vm262, %v777, 0
  %v789 = vsel %vm262, %v782, 0
  %v791 = vsel %vm262, %v784, 0
  %793 = vmatpush.xpose.msra.mxu0 0.0
  %794 = vmatpush.xpose.msra.mxu0 0.0
  %795 = vmatpush.xpose.msra.mxu0 0.0
  %796 = vmatpush.xpose.msra.mxu0 0.0
  %797 = vmatpush.xpose.msra.mxu0 0.0
  %798 = vmatpush.xpose.msra.mxu0 0.0
  %799 = vmatpush.xpose.msra.mxu0 0.0
  %800 = vmatpush.xpose.msra.mxu0 0.0
  %801 = vmatpush.xpose.msra.mxu0 0.0
  %802 = vmatpush.xpose.msra.mxu0 0.0
  %803 = vmatpush.xpose.msra.mxu0 0.0
  %804 = vmatpush.xpose.msra.mxu0 0.0
  %805 = vmatpush.xpose.msra.mxu0 0.0
  %806 = vmatpush.xpose.msra.mxu0 0.0
  %807 = vmatpush.xpose.msra.mxu0 %v791
  %808 = vmatpush.xpose.msra.mxu0 %v789
  %809 = vmatmul.f32.gmra.mxu0 %v785
  %v810 = vpop.f32.mrf.mxu0
  %v811 = vadd.f32 0.0, %v810
  %812 = vmatmul.f32.gmra.mxu0 %v787
  %v813 = vpop.f32.mrf.mxu0
  %v814 = vadd.f32 0.0, %v813
  %815 = vdwg.mxu0
  %v816 = vmul.f32 %v811, 0.25
  %v817 = vmul.f32 %v814, 0.25
  %v818 = vadd.f32 %v816, %v124
  %v819 = vadd.f32 %v817, %v125
  %v820 = vsel %vm262, %v818, -inf
  %821 = vmax.xlane.f32.xlu0 %v820
  %v822 = vpop.xlane.xlu0 %821
  %v823 = vsel %vm262, %v819, -inf
  %824 = vmax.xlane.f32.xlu0 %v823
  %v825 = vpop.xlane.xlu0 %824
  %v826 = vsub.f32 %v818, %v822
  %v827 = vsub.f32 %v819, %v825
  %v828 = vmul.f32 %v826, 1.442695
  %v829 = vpow.pop %v828
  %v830 = vmul.f32 %v827, 1.442695
  %v831 = vpow.pop %v830
  %v832 = vsel %vm262, %v829, 0.0
  %833 = vadd.xlane.f32.xlu0 %v832
  %v834 = vpop.xlane.xlu0 %833
  %v835 = vsel %vm262, %v831, 0.0
  %836 = vadd.xlane.f32.xlu0 %v835
  %v837 = vpop.xlane.xlu0 %836
  %v838 = vrcp.pop %v834
  %v839 = vrcp.pop %v837
  %v840 = vmul.f32 %v829, %v838
  %v841 = vmul.f32 %v831, %v839
  %842 = vrot.lane.b32.xlu0 %v774, 64
  %v843 = vpop.permute.xlu0 %842
  %844 = vrot.lane.b32.xlu0 %v777, 64
  %v845 = vpop.permute.xlu0 %844
  %v849 = vsel %vm262, %v840, 0
  %v852 = vsel %vm262, %v841, 0
  %854 = vmatpush.msra.mxu0 0.0
  %855 = vmatpush.msra.mxu0 0.0
  %856 = vmatpush.msra.mxu0 0.0
  %857 = vmatpush.msra.mxu0 0.0
  %858 = vmatpush.msra.mxu0 0.0
  %859 = vmatpush.msra.mxu0 0.0
  %860 = vmatpush.msra.mxu0 0.0
  %861 = vmatpush.msra.mxu0 0.0
  %862 = vmatpush.msra.mxu0 0.0
  %863 = vmatpush.msra.mxu0 0.0
  %864 = vmatpush.msra.mxu0 0.0
  %865 = vmatpush.msra.mxu0 0.0
  %866 = vmatpush.msra.mxu0 0.0
  %867 = vmatpush.msra.mxu0 0.0
  %868 = vmatpush.msra.mxu0 %v845
  %869 = vmatpush.msra.mxu0 %v843
  %870 = vmatmul.f32.gmra.mxu0 %v849
  %v871 = vpop.f32.mrf.mxu0
  %v872 = vadd.f32 0.0, %v871
  %873 = vmatmul.f32.gmra.mxu0 %v852
  %v874 = vpop.f32.mrf.mxu0
  %v875 = vadd.f32 0.0, %v874
  %876 = vdwg.mxu0
  %877 = vrot.lane.b32.xlu0 %v774, 112
  %v878 = vpop.permute.xlu0 %877
  %879 = vrot.lane.b32.xlu0 %v777, 112
  %v880 = vpop.permute.xlu0 %879
  %881 = vrot.lane.b32.xlu0 %v774, 80
  %v882 = vpop.permute.xlu0 %881
  %883 = vrot.lane.b32.xlu0 %v777, 80
  %v884 = vpop.permute.xlu0 %883
  %v885 = vsel %vm262, %v878, 0
  %v887 = vsel %vm262, %v880, 0
  %v889 = vsel %vm262, %v882, 0
  %v891 = vsel %vm262, %v884, 0
  %893 = vmatpush.xpose.msra.mxu0 0.0
  %894 = vmatpush.xpose.msra.mxu0 0.0
  %895 = vmatpush.xpose.msra.mxu0 0.0
  %896 = vmatpush.xpose.msra.mxu0 0.0
  %897 = vmatpush.xpose.msra.mxu0 0.0
  %898 = vmatpush.xpose.msra.mxu0 0.0
  %899 = vmatpush.xpose.msra.mxu0 0.0
  %900 = vmatpush.xpose.msra.mxu0 0.0
  %901 = vmatpush.xpose.msra.mxu0 0.0
  %902 = vmatpush.xpose.msra.mxu0 0.0
  %903 = vmatpush.xpose.msra.mxu0 0.0
  %904 = vmatpush.xpose.msra.mxu0 0.0
  %905 = vmatpush.xpose.msra.mxu0 0.0
  %906 = vmatpush.xpose.msra.mxu0 0.0
  %907 = vmatpush.xpose.msra.mxu0 %v891
  %908 = vmatpush.xpose.msra.mxu0 %v889
  %909 = vmatmul.f32.gmra.mxu0 %v885
  %v910 = vpop.f32.mrf.mxu0
  %v911 = vadd.f32 0.0, %v910
  %912 = vmatmul.f32.gmra.mxu0 %v887
  %v913 = vpop.f32.mrf.mxu0
  %v914 = vadd.f32 0.0, %v913
  %915 = vdwg.mxu0
  %v916 = vmul.f32 %v911, 0.25
  %v917 = vmul.f32 %v914, 0.25
  %v918 = vadd.f32 %v916, %v124
  %v919 = vadd.f32 %v917, %v125
  %v920 = vsel %vm262, %v918, -inf
  %921 = vmax.xlane.f32.xlu0 %v920
  %v922 = vpop.xlane.xlu0 %921
  %v923 = vsel %vm262, %v919, -inf
  %924 = vmax.xlane.f32.xlu0 %v923
  %v925 = vpop.xlane.xlu0 %924
  %v926 = vsub.f32 %v918, %v922
  %v927 = vsub.f32 %v919, %v925
  %v928 = vmul.f32 %v926, 1.442695
  %v929 = vpow.pop %v928
  %v930 = vmul.f32 %v927, 1.442695
  %v931 = vpow.pop %v930
  %v932 = vsel %vm262, %v929, 0.0
  %933 = vadd.xlane.f32.xlu0 %v932
  %v934 = vpop.xlane.xlu0 %933
  %v935 = vsel %vm262, %v931, 0.0
  %936 = vadd.xlane.f32.xlu0 %v935
  %v937 = vpop.xlane.xlu0 %936
  %v938 = vrcp.pop %v934
  %v939 = vrcp.pop %v937
  %v940 = vmul.f32 %v929, %v938
  %v941 = vmul.f32 %v931, %v939
  %942 = vrot.lane.b32.xlu0 %v774, 48
  %v943 = vpop.permute.xlu0 %942
  %944 = vrot.lane.b32.xlu0 %v777, 48
  %v945 = vpop.permute.xlu0 %944
  %v949 = vsel %vm262, %v940, 0
  %v952 = vsel %vm262, %v941, 0
  %954 = vmatpush.msra.mxu0 0.0
  %955 = vmatpush.msra.mxu0 0.0
  %956 = vmatpush.msra.mxu0 0.0
  %957 = vmatpush.msra.mxu0 0.0
  %958 = vmatpush.msra.mxu0 0.0
  %959 = vmatpush.msra.mxu0 0.0
  %960 = vmatpush.msra.mxu0 0.0
  %961 = vmatpush.msra.mxu0 0.0
  %962 = vmatpush.msra.mxu0 0.0
  %963 = vmatpush.msra.mxu0 0.0
  %964 = vmatpush.msra.mxu0 0.0
  %965 = vmatpush.msra.mxu0 0.0
  %966 = vmatpush.msra.mxu0 0.0
  %967 = vmatpush.msra.mxu0 0.0
  %968 = vmatpush.msra.mxu0 %v945
  %969 = vmatpush.msra.mxu0 %v943
  %970 = vmatmul.f32.gmra.mxu0 %v949
  %v971 = vpop.f32.mrf.mxu0
  %v972 = vadd.f32 0.0, %v971
  %973 = vmatmul.f32.gmra.mxu0 %v952
  %v974 = vpop.f32.mrf.mxu0
  %v975 = vadd.f32 0.0, %v974
  %976 = vdwg.mxu0
  %979 = vrot.lane.b32.xlu0 %v972, 16
  %v980 = vpop.permute.xlu0 %979
  %981 = vrot.lane.b32.xlu0 %v975, 16
  %v982 = vpop.permute.xlu0 %981
  %v985 = vsel %vm262, %v872, %v980
  %v986 = vsel %vm262, %v875, %v982
  %v988 = vsel %vm162, %v985, 0
  %v991 = vsel %vm162, %v986, 0
  %993 = vmatpush.msra.mxu0 0.0
  %994 = vmatpush.msra.mxu0 0.0
  %995 = vmatpush.msra.mxu0 0.0
  %996 = vmatpush.msra.mxu0 0.0
  %997 = vmatpush.msra.mxu0 0.0
  %998 = vmatpush.msra.mxu0 0.0
  %999 = vmatpush.msra.mxu0 0.0
  %1000 = vmatpush.msra.mxu0 0.0
  %1001 = vmatpush.msra.mxu0 0.0
  %1002 = vmatpush.msra.mxu0 0.0
  %1003 = vmatpush.msra.mxu0 0.0
  %1004 = vmatpush.msra.mxu0 0.0
  %1005 = vmatpush.msra.mxu0 %v667
  %1006 = vmatpush.msra.mxu0 %v666
  %1007 = vmatpush.msra.mxu0 %v665
  %1008 = vmatpush.msra.mxu0 %v664
  %1009 = vmatmul.f32.gmra.mxu0 %v988
  %v1010 = vpop.f32.mrf.mxu0
  %v1011 = vadd.f32 0.0, %v1010
  %1012 = vmatmul.f32.gmra.mxu0 %v991
  %v1013 = vpop.f32.mrf.mxu0
  %v1014 = vadd.f32 0.0, %v1013
  %1015 = vdwg.mxu0
  %v1016 = vadd.f32 %v655, %v1011
  %v1017 = vadd.f32 %v656, %v1014
  %v1019 = vperm.slane %v668, 0
  %v1021 = vadd.f32 %v1016, %v1019
  %v1022 = vadd.f32 %v1017, %v1019
  %v1023 = vsel %vm162, %v1021, 0.0
  %1024 = vadd.xlane.f32.xlu0 %v1023
  %v1025 = vpop.xlane.xlu0 %1024
  %v1026 = vsel %vm162, %v1022, 0.0
  %1027 = vadd.xlane.f32.xlu0 %v1026
  %v1028 = vpop.xlane.xlu0 %1027
  %v1029 = vmul.f32 %v1025, %v175
  %v1030 = vmul.f32 %v1028, %v175
  %v1031 = vsub.f32 %v1021, %v1029
  %v1032 = vsub.f32 %v1022, %v1030
  %v1033 = vmul.f32 %v1031, %v1031
  %v1034 = vmul.f32 %v1032, %v1032
  %v1035 = vsel %vm162, %v1033, 0.0
  %1036 = vadd.xlane.f32.xlu0 %v1035
  %v1037 = vpop.xlane.xlu0 %1036
  %v1038 = vsel %vm162, %v1034, 0.0
  %1039 = vadd.xlane.f32.xlu0 %v1038
  %v1040 = vpop.xlane.xlu0 %1039
  %v1041 = vmul.f32 %v1037, %v175
  %v1042 = vmul.f32 %v1040, %v175
  %v1043 = vadd.f32 %v1041, 1e-05
  %v1044 = vadd.f32 %v1042, 1e-05
  %v1045 = vrsqrt.pop %v1043
  %v1046 = vmul.f32 %v1045, %v1043
  %v1047 = vmul.f32 %v1046, %v1045
  %v1048 = vmul.f32 0.5, %v1047
  %v1049 = vsub.f32 1.5, %v1048
  %v1050 = vmul.f32 %v1045, %v1049
  %vm1051 = vweird.f32 %v1043
  %vm1052 = vweird.f32 %v1045
  %vm1053 = vmor %vm1051, %vm1052
  %v1054 = vsel %vm1053, %v1045, %v1050
  %v1055 = vrsqrt.pop %v1044
  %v1056 = vmul.f32 %v1055, %v1044
  %v1057 = vmul.f32 %v1056, %v1055
  %v1058 = vmul.f32 0.5, %v1057
  %v1059 = vsub.f32 1.5, %v1058
  %v1060 = vmul.f32 %v1055, %v1059
  %vm1061 = vweird.f32 %v1044
  %vm1062 = vweird.f32 %v1055
  %vm1063 = vmor %vm1061, %vm1062
  %v1064 = vsel %vm1063, %v1055, %v1060
  %v1065 = vmul.f32 %v1031, %v1054
  %v1066 = vmul.f32 %v1032, %v1064
  %v1068 = vperm.slane %v669, 0
  %v1070 = vmul.f32 %v1065, %v1068
  %v1071 = vmul.f32 %v1066, %v1068
  %v1073 = vperm.slane %v670, 0
  %v1075 = vadd.f32 %v1070, %v1073
  %v1076 = vadd.f32 %v1071, %v1073
  %v1078 = vperm.slane %v675, 0
  %v1081 = vsel %vm162, %v1075, 0
  %v1084 = vsel %vm162, %v1076, 0
  %1086 = vmatpush.msra.mxu0 0.0
  %1087 = vmatpush.msra.mxu0 0.0
  %1088 = vmatpush.msra.mxu0 0.0
  %1089 = vmatpush.msra.mxu0 0.0
  %1090 = vmatpush.msra.mxu0 0.0
  %1091 = vmatpush.msra.mxu0 0.0
  %1092 = vmatpush.msra.mxu0 0.0
  %1093 = vmatpush.msra.mxu0 0.0
  %1094 = vmatpush.msra.mxu0 0.0
  %1095 = vmatpush.msra.mxu0 0.0
  %1096 = vmatpush.msra.mxu0 0.0
  %1097 = vmatpush.msra.mxu0 0.0
  %1098 = vmatpush.msra.mxu0 %v674
  %1099 = vmatpush.msra.mxu0 %v673
  %1100 = vmatpush.msra.mxu0 %v672
  %1101 = vmatpush.msra.mxu0 %v671
  %1102 = vmatmul.f32.gmra.mxu0 %v1081
  %v1103 = vpop.f32.mrf.mxu0
  %v1104 = vadd.f32 %v1078, %v1103
  %1105 = vmatmul.f32.gmra.mxu0 %v1084
  %v1106 = vpop.f32.mrf.mxu0
  %v1107 = vadd.f32 %v1078, %v1106
  %1108 = vdwg.mxu0
  %v1109 = vmul.f32 %v1104, -1.702
  %v1110 = vmul.f32 %v1107, -1.702
  %v1111 = vmul.f32 %v1109, 1.442695
  %v1112 = vpow.pop %v1111
  %v1113 = vmul.f32 %v1110, 1.442695
  %v1114 = vpow.pop %v1113
  %v1115 = vadd.f32 %v1112, 1.0
  %v1116 = vadd.f32 %v1114, 1.0
  %v1117 = vrcp.pop %v1115
  %v1118 = vmul.f32 %v1115, %v1117
  %v1119 = vsub.f32 1.0, %v1118
  %v1120 = vmul.f32 %v1117, %v1119
  %v1121 = vadd.f32 %v1117, %v1120
  %vm1122 = vweird.f32 %v1115
  %vm1123 = vweird.f32 %v1117
  %vm1124 = vmor %vm1122, %vm1123
  %v1125 = vsel %vm1124, %v1117, %v1121
  %v1126 = vand.u32 2147483647, %v1115
  %vm1127 = vcmp.eq.f32.partialorder %v1126, 8.507059e+37
  %v1128 = vand.u32 %v1115, 2147483648
  %v1129 = vor.u32 1.1754944e-38, %v1128
  %v1130 = vsel %vm1127, %v1129, %v1125
  %v1131 = vmul.f32 1.0, %v1130
  %v1132 = vrcp.pop %v1116
  %v1133 = vmul.f32 %v1116, %v1132
  %v1134 = vsub.f32 1.0, %v1133
  %v1135 = vmul.f32 %v1132, %v1134
  %v1136 = vadd.f32 %v1132, %v1135
  %vm1137 = vweird.f32 %v1116
  %vm1138 = vweird.f32 %v1132
  %vm1139 = vmor %vm1137, %vm1138
  %v1140 = vsel %vm1139, %v1132, %v1136
  %v1141 = vand.u32 2147483647, %v1116
  %vm1142 = vcmp.eq.f32.partialorder %v1141, 8.507059e+37
  %v1143 = vand.u32 %v1116, 2147483648
  %v1144 = vor.u32 1.1754944e-38, %v1143
  %v1145 = vsel %vm1142, %v1144, %v1140
  %v1146 = vmul.f32 1.0, %v1145
  %v1147 = vmul.f32 %v1104, %v1131
  %v1148 = vmul.f32 %v1107, %v1146
  %1149 = vmatpush.msra.mxu0 %v691
  %1150 = vmatpush.msra.mxu0 %v690
  %1151 = vmatpush.msra.mxu0 %v689
  %1152 = vmatpush.msra.mxu0 %v688
  %1153 = vmatpush.msra.mxu0 %v687
  %1154 = vmatpush.msra.mxu0 %v686
  %1155 = vmatpush.msra.mxu0 %v685
  %1156 = vmatpush.msra.mxu0 %v684
  %1157 = vmatpush.msra.mxu0 %v683
  %1158 = vmatpush.msra.mxu0 %v682
  %1159 = vmatpush.msra.mxu0 %v681
  %1160 = vmatpush.msra.mxu0 %v680
  %1161 = vmatpush.msra.mxu0 %v679
  %1162 = vmatpush.msra.mxu0 %v678
  %1163 = vmatpush.msra.mxu0 %v677
  %1164 = vmatpush.msra.mxu0 %v676
  %1165 = vmatmul.f32.gmra.mxu0 %v1147
  %v1166 = vpop.f32.mrf.mxu0
  %v1167 = vadd.f32 0.0, %v1166
  %1168 = vmatmul.f32.gmra.mxu0 %v1148
  %v1169 = vpop.f32.mrf.mxu0
  %v1170 = vadd.f32 0.0, %v1169
  %1171 = vdwg.mxu0
  %v1172 = vadd.f32 %v1021, %v1167
  %v1173 = vadd.f32 %v1022, %v1170
  %v1175 = vperm.slane %v692, 0
  %v1177 = vadd.f32 %v1172, %v1175
  %v1178 = vadd.f32 %v1173, %v1175
  %v1179 = vld [vmem:[%s53] sm:$0x1]
  %v1180 = vld [vmem:[%s55] sm:$0x1]
  %v1181 = vld [vmem:[%s57] sm:$0xff]
  %v1182 = vld [vmem:[%s57 + $0x8] sm:$0xff]
  %v1183 = vld [vmem:[%s57 + $0x10] sm:$0xff]
  %v1184 = vld [vmem:[%s57 + $0x18] sm:$0xff]
  %v1185 = vsel %vm162, %v1177, 0.0
  %1186 = vadd.xlane.f32.xlu0 %v1185
  %v1187 = vpop.xlane.xlu0 %1186
  %v1188 = vsel %vm162, %v1178, 0.0
  %1189 = vadd.xlane.f32.xlu0 %v1188
  %v1190 = vpop.xlane.xlu0 %1189
  %v1191 = vmul.f32 %v1187, %v175
  %v1192 = vmul.f32 %v1190, %v175
  %v1193 = vsub.f32 %v1177, %v1191
  %v1194 = vsub.f32 %v1178, %v1192
  %v1195 = vmul.f32 %v1193, %v1193
  %v1196 = vmul.f32 %v1194, %v1194
  %v1197 = vsel %vm162, %v1195, 0.0
  %1198 = vadd.xlane.f32.xlu0 %v1197
  %v1199 = vpop.xlane.xlu0 %1198
  %v1200 = vsel %vm162, %v1196, 0.0
  %1201 = vadd.xlane.f32.xlu0 %v1200
  %v1202 = vpop.xlane.xlu0 %1201
  %v1203 = vmul.f32 %v1199, %v175
  %v1204 = vmul.f32 %v1202, %v175
  %v1205 = vadd.f32 %v1203, 1e-05
  %v1206 = vadd.f32 %v1204, 1e-05
  %v1207 = vrsqrt.pop %v1205
  %v1208 = vmul.f32 %v1207, %v1205
  %v1209 = vmul.f32 %v1208, %v1207
  %v1210 = vmul.f32 0.5, %v1209
  %v1211 = vsub.f32 1.5, %v1210
  %v1212 = vmul.f32 %v1207, %v1211
  %vm1213 = vweird.f32 %v1205
  %vm1214 = vweird.f32 %v1207
  %vm1215 = vmor %vm1213, %vm1214
  %v1216 = vsel %vm1215, %v1207, %v1212
  %v1217 = vrsqrt.pop %v1206
  %v1218 = vmul.f32 %v1217, %v1206
  %v1219 = vmul.f32 %v1218, %v1217
  %v1220 = vmul.f32 0.5, %v1219
  %v1221 = vsub.f32 1.5, %v1220
  %v1222 = vmul.f32 %v1217, %v1221
  %vm1223 = vweird.f32 %v1206
  %vm1224 = vweird.f32 %v1217
  %vm1225 = vmor %vm1223, %vm1224
  %v1226 = vsel %vm1225, %v1217, %v1222
  %v1227 = vmul.f32 %v1193, %v1216
  %v1228 = vmul.f32 %v1194, %v1226
  %v1230 = vperm.slane %v1179, 0
  %v1232 = vmul.f32 %v1227, %v1230
  %v1233 = vmul.f32 %v1228, %v1230
  %v1235 = vperm.slane %v1180, 0
  %v1237 = vadd.f32 %v1232, %v1235
  %v1238 = vadd.f32 %v1233, %v1235
  %v1240 = vsel %vm162, %v1237, 0
  %v1243 = vsel %vm162, %v1238, 0
  %1245 = vmatpush.msra.mxu0 0.0
  %1246 = vmatpush.msra.mxu0 0.0
  %1247 = vmatpush.msra.mxu0 0.0
  %1248 = vmatpush.msra.mxu0 0.0
  %1249 = vmatpush.msra.mxu0 0.0
  %1250 = vmatpush.msra.mxu0 0.0
  %1251 = vmatpush.msra.mxu0 0.0
  %1252 = vmatpush.msra.mxu0 0.0
  %1253 = vmatpush.msra.mxu0 0.0
  %1254 = vmatpush.msra.mxu0 0.0
  %1255 = vmatpush.msra.mxu0 0.0
  %1256 = vmatpush.msra.mxu0 0.0
  %1257 = vmatpush.msra.mxu0 %v1184
  %1258 = vmatpush.msra.mxu0 %v1183
  %1259 = vmatpush.msra.mxu0 %v1182
  %1260 = vmatpush.msra.mxu0 %v1181
  %1261 = vmatmul.f32.gmra.mxu0 %v1240
  %v1262 = vpop.f32.mrf.mxu0
  %v1263 = vadd.f32 0.0, %v1262
  %1264 = vmatmul.f32.gmra.mxu0 %v1243
  %v1265 = vpop.f32.mrf.mxu0
  %v1266 = vadd.f32 0.0, %v1265
  %1267 = vdwg.mxu0
  %1268 = vst.msk [vmem:[%s59] sm:$0xff] %vm162, %v1263
  %1269 = vst.msk [vmem:[%s59 + $0x8] sm:$0xff] %vm162, %v1266
  // Predicated region
  $region118: #{clip_forward.6} parent=0 // pred_check
    _
  $region119: #{clip_forward.6} parent=0 // pred_check_branch
    %1271 = sbr.rel (0) target = $region121
  $region120: #{clip_forward.6} parent=0 // pred_region
    _
  $region121: #{clip_forward.6} parent=0 // pred_fallthru
    _
  // Predicated region
  $region122: #{clip_forward.6} parent=0 // pred_check
    _
  $region123: #{clip_forward.6} parent=0 // pred_check_branch
    %1273 = sbr.rel (0) target = $region125
  $region124: #{clip_forward.6} parent=0 // pred_region
    _
  $region125: #{clip_forward.6} parent=0 // pred_fallthru
    _

// kernel: clip_forward.5
$region0: #{clip_forward.5}
  #allocation0 [shape = 'u32[]', space=smem, size = 0x4, offset = 0x4, fixed_abs, tag = 'smem constant byte address 0x4 - core index']
  #allocation1 [shape = 'u32[72,128]{1,0:T(1,128)}', space=vmem, size = 0x9000, scoped, tag = 'internal scratch']
  %s0 = inlined_call_operand.smem [shape: u32[32], index: -1, kind: input, shape index: {}]
  %s1 = sld [smem:[%s0]]
  %s2 = scalar_lea.smem %s0, 1
  %s3 = sld [smem:[%s2]]
  %s4 = scalar_lea.smem %s0, 2
  %s5 = sld [smem:[%s4]]
  %s6 = scalar_lea.smem %s0, 3
  %s7 = sld [smem:[%s6]]
  %s8 = scalar_lea.smem %s0, 4
  %s9 = sld [smem:[%s8]]
  %s10 = scalar_lea.smem %s0, 5
  %s11 = sld [smem:[%s10]]
  %s12 = scalar_lea.smem %s0, 6
  %s13 = sld [smem:[%s12]]
  %s14 = scalar_lea.smem %s0, 7
  %s15 = sld [smem:[%s14]]
  %s16 = scalar_lea.smem %s0, 8
  %s17 = sld [smem:[%s16]]
  %s18 = scalar_lea.smem %s0, 9
  %s19 = sld [smem:[%s18]]
  %s20 = scalar_lea.smem %s0, 10
  %s21 = sld [smem:[%s20]]
  %s22 = scalar_lea.smem %s0, 11
  %s23 = sld [smem:[%s22]]
  %s24 = scalar_lea.smem %s0, 12
  %s25 = sld [smem:[%s24]]
  %s26 = scalar_lea.smem %s0, 13
  %s27 = sld [smem:[%s26]]
  %s28 = scalar_lea.smem %s0, 14
  %s29 = sld [smem:[%s28]]
  %s30 = scalar_lea.smem %s0, 15
  %s31 = sld [smem:[%s30]]
  %s32 = scalar_lea.smem %s0, 16
  %s33 = sld [smem:[%s32]]
  %s34 = scalar_lea.smem %s0, 17
  %s35 = sld [smem:[%s34]]
  %s36 = scalar_lea.smem %s0, 18
  %s37 = sld [smem:[%s36]]
  %s38 = scalar_lea.smem %s0, 19
  %s39 = sld [smem:[%s38]]
  %s40 = scalar_lea.smem %s0, 20
  %s41 = sld [smem:[%s40]]
  %s42 = scalar_lea.smem %s0, 21
  %s43 = sld [smem:[%s42]]
  %s44 = scalar_lea.smem %s0, 22
  %s45 = sld [smem:[%s44]]
  %s46 = scalar_lea.smem %s0, 23
  %s47 = sld [smem:[%s46]]
  %s48 = scalar_lea.smem %s0, 24
  %s49 = sld [smem:[%s48]]
  %s50 = scalar_lea.smem %s0, 25
  %s51 = sld [smem:[%s50]]
  %s52 = scalar_lea.smem %s0, 26
  %s53 = sld [smem:[%s52]]
  %s54 = scalar_lea.smem %s0, 27
  %s55 = sld [smem:[%s54]]
  %s56 = scalar_lea.smem %s0, 28
  %s57 = sld [smem:[%s56]]
  %s58 = scalar_lea.smem %s0, 29
  %s59 = sld [smem:[%s58]]
  %s60 = scalar_lea.smem %s0, 30
  %s61 = sld [smem:[%s60]]
  %s62 = scalar_lea.smem %s0, 31
  %s63 = sld [smem:[%s62]]
  %s64 = sld [smem:[#allocation0]]
  $region134: #{clip_forward.5} parent=0
    _
  %s66 = ssub.s32 1, %s64
  %s67 = scalar_select 0, %s66, %s64
  // Predicated region
  $region2: #{clip_forward.5} parent=0 // pred_check
    _
  $region3: #{clip_forward.5} parent=0 // pred_check_branch
    %69 = sbr.rel (0) target = $region5
  $region4: #{clip_forward.5} parent=0 // pred_region
    _
  $region5: #{clip_forward.5} parent=0 // pred_fallthru
    _
  // Predicated region
  $region6: #{clip_forward.5} parent=0 // pred_check
    _
  $region7: #{clip_forward.5} parent=0 // pred_check_branch
    %71 = sbr.rel (0) target = $region9
  $region8: #{clip_forward.5} parent=0 // pred_region
    _
  $region9: #{clip_forward.5} parent=0 // pred_fallthru
    _
  // Predicated region
  $region10: #{clip_forward.5} parent=0 // pred_check
    _
  $region11: #{clip_forward.5} parent=0 // pred_check_branch
    %73 = sbr.rel (0) target = $region13
  $region12: #{clip_forward.5} parent=0 // pred_region
    _
  $region13: #{clip_forward.5} parent=0 // pred_fallthru
    _
  // Predicated region
  $region14: #{clip_forward.5} parent=0 // pred_check
    _
  $region15: #{clip_forward.5} parent=0 // pred_check_branch
    %75 = sbr.rel (0) target = $region17
  $region16: #{clip_forward.5} parent=0 // pred_region
    _
  $region17: #{clip_forward.5} parent=0 // pred_fallthru
    _
  // Predicated region
  $region18: #{clip_forward.5} parent=0 // pred_check
    _
  $region19: #{clip_forward.5} parent=0 // pred_check_branch
    %77 = sbr.rel (0) target = $region21
  $region20: #{clip_forward.5} parent=0 // pred_region
    _
  $region21: #{clip_forward.5} parent=0 // pred_fallthru
    _
  // Predicated region
  $region22: #{clip_forward.5} parent=0 // pred_check
    _
  $region23: #{clip_forward.5} parent=0 // pred_check_branch
    %79 = sbr.rel (0) target = $region25
  $region24: #{clip_forward.5} parent=0 // pred_region
    _
  $region25: #{clip_forward.5} parent=0 // pred_fallthru
    _
  // Predicated region
  $region26: #{clip_forward.5} parent=0 // pred_check
    _
  $region27: #{clip_forward.5} parent=0 // pred_check_branch
    %81 = sbr.rel (0) target = $region29
  $region28: #{clip_forward.5} parent=0 // pred_region
    _
  $region29: #{clip_forward.5} parent=0 // pred_fallthru
    _
  // Predicated region
  $region30: #{clip_forward.5} parent=0 // pred_check
    _
  $region31: #{clip_forward.5} parent=0 // pred_check_branch
    %83 = sbr.rel (0) target = $region33
  $region32: #{clip_forward.5} parent=0 // pred_region
    _
  $region33: #{clip_forward.5} parent=0 // pred_fallthru
    _
  // Predicated region
  $region34: #{clip_forward.5} parent=0 // pred_check
    _
  $region35: #{clip_forward.5} parent=0 // pred_check_branch
    %85 = sbr.rel (0) target = $region37
  $region36: #{clip_forward.5} parent=0 // pred_region
    _
  $region37: #{clip_forward.5} parent=0 // pred_fallthru
    _
  // Predicated region
  $region38: #{clip_forward.5} parent=0 // pred_check
    _
  $region39: #{clip_forward.5} parent=0 // pred_check_branch
    %87 = sbr.rel (0) target = $region41
  $region40: #{clip_forward.5} parent=0 // pred_region
    _
  $region41: #{clip_forward.5} parent=0 // pred_fallthru
    _
  // Predicated region
  $region42: #{clip_forward.5} parent=0 // pred_check
    _
  $region43: #{clip_forward.5} parent=0 // pred_check_branch
    %89 = sbr.rel (0) target = $region45
  $region44: #{clip_forward.5} parent=0 // pred_region
    _
  $region45: #{clip_forward.5} parent=0 // pred_fallthru
    _
  // Predicated region
  $region46: #{clip_forward.5} parent=0 // pred_check
    _
  $region47: #{clip_forward.5} parent=0 // pred_check_branch
    %91 = sbr.rel (0) target = $region49
  $region48: #{clip_forward.5} parent=0 // pred_region
    _
  $region49: #{clip_forward.5} parent=0 // pred_fallthru
    _
  // Predicated region
  $region50: #{clip_forward.5} parent=0 // pred_check
    _
  $region51: #{clip_forward.5} parent=0 // pred_check_branch
    %93 = sbr.rel (0) target = $region53
  $region52: #{clip_forward.5} parent=0 // pred_region
    _
  $region53: #{clip_forward.5} parent=0 // pred_fallthru
    _
  // Predicated region
  $region54: #{clip_forward.5} parent=0 // pred_check
    _
  $region55: #{clip_forward.5} parent=0 // pred_check_branch
    %95 = sbr.rel (0) target = $region57
  $region56: #{clip_forward.5} parent=0 // pred_region
    _
  $region57: #{clip_forward.5} parent=0 // pred_fallthru
    _
  // Predicated region
  $region58: #{clip_forward.5} parent=0 // pred_check
    _
  $region59: #{clip_forward.5} parent=0 // pred_check_branch
    %97 = sbr.rel (0) target = $region61
  $region60: #{clip_forward.5} parent=0 // pred_region
    _
  $region61: #{clip_forward.5} parent=0 // pred_fallthru
    _
  // Predicated region
  $region62: #{clip_forward.5} parent=0 // pred_check
    _
  $region63: #{clip_forward.5} parent=0 // pred_check_branch
    %99 = sbr.rel (0) target = $region65
  $region64: #{clip_forward.5} parent=0 // pred_region
    _
  $region65: #{clip_forward.5} parent=0 // pred_fallthru
    _
  // Predicated region
  $region66: #{clip_forward.5} parent=0 // pred_check
    _
  $region67: #{clip_forward.5} parent=0 // pred_check_branch
    %101 = sbr.rel (0) target = $region69
  $region68: #{clip_forward.5} parent=0 // pred_region
    _
  $region69: #{clip_forward.5} parent=0 // pred_fallthru
    _
  // Predicated region
  $region70: #{clip_forward.5} parent=0 // pred_check
    _
  $region71: #{clip_forward.5} parent=0 // pred_check_branch
    %103 = sbr.rel (0) target = $region73
  $region72: #{clip_forward.5} parent=0 // pred_region
    _
  $region73: #{clip_forward.5} parent=0 // pred_fallthru
    _
  // Predicated region
  $region74: #{clip_forward.5} parent=0 // pred_check
    _
  $region75: #{clip_forward.5} parent=0 // pred_check_branch
    %105 = sbr.rel (0) target = $region77
  $region76: #{clip_forward.5} parent=0 // pred_region
    _
  $region77: #{clip_forward.5} parent=0 // pred_fallthru
    _
  // Predicated region
  $region78: #{clip_forward.5} parent=0 // pred_check
    _
  $region79: #{clip_forward.5} parent=0 // pred_check_branch
    %107 = sbr.rel (0) target = $region81
  $region80: #{clip_forward.5} parent=0 // pred_region
    _
  $region81: #{clip_forward.5} parent=0 // pred_fallthru
    _
  // Predicated region
  $region82: #{clip_forward.5} parent=0 // pred_check
    _
  $region83: #{clip_forward.5} parent=0 // pred_check_branch
    %109 = sbr.rel (0) target = $region85
  $region84: #{clip_forward.5} parent=0 // pred_region
    _
  $region85: #{clip_forward.5} parent=0 // pred_fallthru
    _
  // Predicated region
  $region86: #{clip_forward.5} parent=0 // pred_check
    _
  $region87: #{clip_forward.5} parent=0 // pred_check_branch
    %111 = sbr.rel (0) target = $region89
  $region88: #{clip_forward.5} parent=0 // pred_region
    _
  $region89: #{clip_forward.5} parent=0 // pred_fallthru
    _
  // Predicated region
  $region90: #{clip_forward.5} parent=0 // pred_check
    _
  $region91: #{clip_forward.5} parent=0 // pred_check_branch
    %113 = sbr.rel (0) target = $region93
  $region92: #{clip_forward.5} parent=0 // pred_region
    _
  $region93: #{clip_forward.5} parent=0 // pred_fallthru
    _
  // Predicated region
  $region94: #{clip_forward.5} parent=0 // pred_check
    _
  $region95: #{clip_forward.5} parent=0 // pred_check_branch
    %115 = sbr.rel (0) target = $region97
  $region96: #{clip_forward.5} parent=0 // pred_region
    _
  $region97: #{clip_forward.5} parent=0 // pred_fallthru
    _
  // Predicated region
  $region98: #{clip_forward.5} parent=0 // pred_check
    _
  $region99: #{clip_forward.5} parent=0 // pred_check_branch
    %117 = sbr.rel (0) target = $region101
  $region100: #{clip_forward.5} parent=0 // pred_region
    _
  $region101: #{clip_forward.5} parent=0 // pred_fallthru
    _
  // Predicated region
  $region102: #{clip_forward.5} parent=0 // pred_check
    _
  $region103: #{clip_forward.5} parent=0 // pred_check_branch
    %119 = sbr.rel (0) target = $region105
  $region104: #{clip_forward.5} parent=0 // pred_region
    _
  $region105: #{clip_forward.5} parent=0 // pred_fallthru
    _
  // Predicated region
  $region106: #{clip_forward.5} parent=0 // pred_check
    _
  $region107: #{clip_forward.5} parent=0 // pred_check_branch
    %121 = sbr.rel (0) target = $region109
  $region108: #{clip_forward.5} parent=0 // pred_region
    _
  $region109: #{clip_forward.5} parent=0 // pred_fallthru
    _
  // Predicated region
  $region110: #{clip_forward.5} parent=0 // pred_check
    _
  $region111: #{clip_forward.5} parent=0 // pred_check_branch
    %123 = sbr.rel (0) target = $region113
  $region112: #{clip_forward.5} parent=0 // pred_region
    _
  $region113: #{clip_forward.5} parent=0 // pred_fallthru
    _
  // Predicated region
  $region114: #{clip_forward.5} parent=0 // pred_check
    _
  $region115: #{clip_forward.5} parent=0 // pred_check_branch
    %125 = sbr.rel (0) target = $region117
  $region116: #{clip_forward.5} parent=0 // pred_region
    _
  $region117: #{clip_forward.5} parent=0 // pred_fallthru
    _
  // Predicated region
  $region118: #{clip_forward.5} parent=0 // pred_check
    _
  $region119: #{clip_forward.5} parent=0 // pred_check_branch
    %127 = sbr.rel (0) target = $region121
  $region120: #{clip_forward.5} parent=0 // pred_region
    _
  $region121: #{clip_forward.5} parent=0 // pred_fallthru
    _
  // Predicated region
  $region122: #{clip_forward.5} parent=0 // pred_check
    _
  $region123: #{clip_forward.5} parent=0 // pred_check_branch
    %129 = sbr.rel (0) target = $region125
  $region124: #{clip_forward.5} parent=0 // pred_region
    _
  $region125: #{clip_forward.5} parent=0 // pred_fallthru
    _
  %v130 = vld [vmem:[%s1] sm:$0xff]
  %v131 = vld [vmem:[%s1 + $0x8] sm:$0x3]
  %v132 = vld [vmem:[%s3] sm:$0xff]
  %v133 = vld [vmem:[%s3 + $0x8] sm:$0x3]
  %v134 = vld [vmem:[%s5] sm:$0x1]
  %v135 = vld [vmem:[%s7] sm:$0x1]
  %vm136 = vcmask 523264
  %v137 = vsel %vm136, %v130, 0.0
  %138 = vadd.xlane.f32.xlu0 %v137
  %v139 = vpop.xlane.xlu0 %138
  %vm140 = vcmask 517120
  %v141 = vsel %vm140, %v131, 0.0
  %142 = vadd.xlane.f32.xlu0 %v141
  %v143 = vpop.xlane.xlu0 %142
  %v144 = vrcp.pop 64.0
  %v145 = vmul.f32 64.0, %v144
  %v146 = vsub.f32 1.0, %v145
  %v147 = vmul.f32 %v144, %v146
  %v148 = vadd.f32 %v144, %v147
  %vm149 = vweird.f32 %v144
  %v150 = vsel %vm149, %v144, %v148
  %v151 = vmul.f32 %v139, %v150
  %v152 = vmul.f32 %v143, %v150
  %v153 = vsub.f32 %v130, %v151
  %v154 = vsub.f32 %v131, %v152
  %v155 = vmul.f32 %v153, %v153
  %v156 = vmul.f32 %v154, %v154
  %v157 = vsel %vm136, %v155, 0.0
  %158 = vadd.xlane.f32.xlu0 %v157
  %v159 = vpop.xlane.xlu0 %158
  %v160 = vsel %vm140, %v156, 0.0
  %161 = vadd.xlane.f32.xlu0 %v160
  %v162 = vpop.xlane.xlu0 %161
  %v163 = vmul.f32 %v159, %v150
  %v164 = vmul.f32 %v162, %v150
  %v165 = vadd.f32 %v163, 1e-05
  %v166 = vadd.f32 %v164, 1e-05
  %v167 = vrsqrt.pop %v165
  %v168 = vmul.f32 %v167, %v165
  %v169 = vmul.f32 %v168, %v167
  %v170 = vmul.f32 0.5, %v169
  %v171 = vsub.f32 1.5, %v170
  %v172 = vmul.f32 %v167, %v171
  %vm173 = vweird.f32 %v165
  %vm174 = vweird.f32 %v167
  %vm175 = vmor %vm173, %vm174
  %v176 = vsel %vm175, %v167, %v172
  %v177 = vrsqrt.pop %v166
  %v178 = vmul.f32 %v177, %v166
  %v179 = vmul.f32 %v178, %v177
  %v180 = vmul.f32 0.5, %v179
  %v181 = vsub.f32 1.5, %v180
  %v182 = vmul.f32 %v177, %v181
  %vm183 = vweird.f32 %v166
  %vm184 = vweird.f32 %v177
  %vm185 = vmor %vm183, %vm184
  %v186 = vsel %vm185, %v177, %v182
  %v187 = vmul.f32 %v153, %v176
  %v188 = vmul.f32 %v154, %v186
  %v190 = vperm.slane %v134, 0
  %v192 = vmul.f32 %v187, %v190
  %v193 = vmul.f32 %v188, %v190
  %v195 = vperm.slane %v135, 0
  %v197 = vadd.f32 %v192, %v195
  %v198 = vadd.f32 %v193, %v195
  %v199 = vld [vmem:[%s9] sm:$0x1]
  %v200 = vld [vmem:[%s11] sm:$0x1]
  %v201 = vld [vmem:[%s13] sm:$0xff]
  %v202 = vld [vmem:[%s13 + $0x8] sm:$0xff]
  %v203 = vld [vmem:[%s13 + $0x10] sm:$0xff]
  %v204 = vld [vmem:[%s13 + $0x18] sm:$0xff]
  %v205 = vld [vmem:[%s13 + $0x20] sm:$0xff]
  %v206 = vld [vmem:[%s13 + $0x28] sm:$0xff]
  %v207 = vld [vmem:[%s13 + $0x30] sm:$0xff]
  %v208 = vld [vmem:[%s13 + $0x38] sm:$0xff]
  %v209 = vld [vmem:[%s13 + $0x40] sm:$0xff]
  %v210 = vld [vmem:[%s13 + $0x48] sm:$0xff]
  %v211 = vld [vmem:[%s13 + $0x50] sm:$0xff]
  %v212 = vld [vmem:[%s13 + $0x58] sm:$0xff]
  %v213 = vld [vmem:[%s13 + $0x60] sm:$0xff]
  %v214 = vld [vmem:[%s13 + $0x68] sm:$0xff]
  %v215 = vld [vmem:[%s13 + $0x70] sm:$0xff]
  %v216 = vld [vmem:[%s13 + $0x78] sm:$0xff]
  %v217 = vld [vmem:[%s15] sm:$0x3]
  %v218 = vld [vmem:[%s17] sm:$0xff]
  %v219 = vld [vmem:[%s17 + $0x8] sm:$0xff]
  %v220 = vld [vmem:[%s17 + $0x10] sm:$0xff]
  %v221 = vld [vmem:[%s17 + $0x18] sm:$0xff]
  %v222 = vld [vmem:[%s17 + $0x20] sm:$0xff]
  %v223 = vld [vmem:[%s17 + $0x28] sm:$0xff]
  %v224 = vld [vmem:[%s17 + $0x30] sm:$0xff]
  %v225 = vld [vmem:[%s17 + $0x38] sm:$0xff]
  %v226 = vld [vmem:[%s19] sm:$0x1]
  %v227 = vld [vmem:[%s21] sm:$0x1]
  %v228 = vld [vmem:[%s23] sm:$0x1]
  %v229 = vld [vmem:[%s25] sm:$0xff]
  %v230 = vld [vmem:[%s25 + $0x8] sm:$0xff]
  %v231 = vld [vmem:[%s25 + $0x10] sm:$0xff]
  %v232 = vld [vmem:[%s25 + $0x18] sm:$0xff]
  %v233 = vld [vmem:[%s25 + $0x20] sm:$0xff]
  %v234 = vld [vmem:[%s25 + $0x28] sm:$0xff]
  %v235 = vld [vmem:[%s25 + $0x30] sm:$0xff]
  %v236 = vld [vmem:[%s25 + $0x38] sm:$0xff]
  %v237 = vld [vmem:[%s25 + $0x40] sm:$0xff]
  %v238 = vld [vmem:[%s25 + $0x48] sm:$0xff]
  %v239 = vld [vmem:[%s25 + $0x50] sm:$0xff]
  %v240 = vld [vmem:[%s25 + $0x58] sm:$0xff]
  %v241 = vld [vmem:[%s25 + $0x60] sm:$0xff]
  %v242 = vld [vmem:[%s25 + $0x68] sm:$0xff]
  %v243 = vld [vmem:[%s25 + $0x70] sm:$0xff]
  %v244 = vld [vmem:[%s25 + $0x78] sm:$0xff]
  %v245 = vld [vmem:[%s27] sm:$0x3]
  %v246 = vld [vmem:[%s29] sm:$0xff]
  %v247 = vld [vmem:[%s29 + $0x8] sm:$0xff]
  %v248 = vld [vmem:[%s29 + $0x10] sm:$0xff]
  %v249 = vld [vmem:[%s29 + $0x18] sm:$0xff]
  %v250 = vld [vmem:[%s29 + $0x20] sm:$0xff]
  %v251 = vld [vmem:[%s29 + $0x28] sm:$0xff]
  %v252 = vld [vmem:[%s29 + $0x30] sm:$0xff]
  %v253 = vld [vmem:[%s29 + $0x38] sm:$0xff]
  %v254 = vld [vmem:[%s29 + $0x40] sm:$0xff]
  %v255 = vld [vmem:[%s29 + $0x48] sm:$0xff]
  %v256 = vld [vmem:[%s29 + $0x50] sm:$0xff]
  %v257 = vld [vmem:[%s29 + $0x58] sm:$0xff]
  %v258 = vld [vmem:[%s29 + $0x60] sm:$0xff]
  %v259 = vld [vmem:[%s29 + $0x68] sm:$0xff]
  %v260 = vld [vmem:[%s29 + $0x70] sm:$0xff]
  %v261 = vld [vmem:[%s29 + $0x78] sm:$0xff]
  %v262 = vld [vmem:[%s29 + $0x80] sm:$0xff]
  %v263 = vld [vmem:[%s29 + $0x88] sm:$0xff]
  %v264 = vld [vmem:[%s29 + $0x90] sm:$0xff]
  %v265 = vld [vmem:[%s29 + $0x98] sm:$0xff]
  %v266 = vld [vmem:[%s29 + $0xa0] sm:$0xff]
  %v267 = vld [vmem:[%s29 + $0xa8] sm:$0xff]
  %v268 = vld [vmem:[%s29 + $0xb0] sm:$0xff]
  %v269 = vld [vmem:[%s29 + $0xb8] sm:$0xff]
  %v270 = vld [vmem:[%s29 + $0xc0] sm:$0xff]
  %v271 = vld [vmem:[%s29 + $0xc8] sm:$0xff]
  %v272 = vld [vmem:[%s29 + $0xd0] sm:$0xff]
  %v273 = vld [vmem:[%s29 + $0xd8] sm:$0xff]
  %v274 = vld [vmem:[%s29 + $0xe0] sm:$0xff]
  %v275 = vld [vmem:[%s29 + $0xe8] sm:$0xff]
  %v276 = vld [vmem:[%s29 + $0xf0] sm:$0xff]
  %v277 = vld [vmem:[%s29 + $0xf8] sm:$0xff]
  %v278 = vld [vmem:[%s31] sm:$0x1]
  %v279 = vsel %vm136, %v197, 0.0
  %280 = vadd.xlane.f32.xlu0 %v279
  %v281 = vpop.xlane.xlu0 %280
  %v282 = vsel %vm140, %v198, 0.0
  %283 = vadd.xlane.f32.xlu0 %v282
  %v284 = vpop.xlane.xlu0 %283
  %v285 = vmul.f32 %v281, %v150
  %v286 = vmul.f32 %v284, %v150
  %v287 = vsub.f32 %v197, %v285
  %v288 = vsub.f32 %v198, %v286
  %v289 = vmul.f32 %v287, %v287
  %v290 = vmul.f32 %v288, %v288
  %v291 = vsel %vm136, %v289, 0.0
  %292 = vadd.xlane.f32.xlu0 %v291
  %v293 = vpop.xlane.xlu0 %292
  %v294 = vsel %vm140, %v290, 0.0
  %295 = vadd.xlane.f32.xlu0 %v294
  %v296 = vpop.xlane.xlu0 %295
  %v297 = vmul.f32 %v293, %v150
  %v298 = vmul.f32 %v296, %v150
  %v299 = vadd.f32 %v297, 1e-05
  %v300 = vadd.f32 %v298, 1e-05
  %v301 = vrsqrt.pop %v299
  %v302 = vmul.f32 %v301, %v299
  %v303 = vmul.f32 %v302, %v301
  %v304 = vmul.f32 0.5, %v303
  %v305 = vsub.f32 1.5, %v304
  %v306 = vmul.f32 %v301, %v305
  %vm307 = vweird.f32 %v299
  %vm308 = vweird.f32 %v301
  %vm309 = vmor %vm307, %vm308
  %v310 = vsel %vm309, %v301, %v306
  %v311 = vrsqrt.pop %v300
  %v312 = vmul.f32 %v311, %v300
  %v313 = vmul.f32 %v312, %v311
  %v314 = vmul.f32 0.5, %v313
  %v315 = vsub.f32 1.5, %v314
  %v316 = vmul.f32 %v311, %v315
  %vm317 = vweird.f32 %v300
  %vm318 = vweird.f32 %v311
  %vm319 = vmor %vm317, %vm318
  %v320 = vsel %vm319, %v311, %v316
  %v321 = vmul.f32 %v287, %v310
  %v322 = vmul.f32 %v288, %v320
  %v324 = vperm.slane %v199, 0
  %v326 = vmul.f32 %v321, %v324
  %v327 = vmul.f32 %v322, %v324
  %v329 = vperm.slane %v200, 0
  %v331 = vadd.f32 %v326, %v329
  %v332 = vadd.f32 %v327, %v329
  %v334 = vperm.slane %v217, 0
  %v335 = vperm.slane %v217, 1
  %v339 = vsel %vm136, %v331, 0
  %v342 = vsel %vm136, %v332, 0
  %344 = vmatpush.msra.mxu0 0.0
  %345 = vmatpush.msra.mxu0 0.0
  %346 = vmatpush.msra.mxu0 0.0
  %347 = vmatpush.msra.mxu0 0.0
  %348 = vmatpush.msra.mxu0 0.0
  %349 = vmatpush.msra.mxu0 0.0
  %350 = vmatpush.msra.mxu0 0.0
  %351 = vmatpush.msra.mxu0 0.0
  %352 = vmatpush.msra.mxu0 %v215
  %353 = vmatpush.msra.mxu0 %v213
  %354 = vmatpush.msra.mxu0 %v211
  %355 = vmatpush.msra.mxu0 %v209
  %356 = vmatpush.msra.mxu0 %v207
  %357 = vmatpush.msra.mxu0 %v205
  %358 = vmatpush.msra.mxu0 %v203
  %359 = vmatpush.msra.mxu0 %v201
  %360 = vmatmul.f32.gmra.mxu0 %v339
  %v361 = vpop.f32.mrf.mxu0
  %v362 = vadd.f32 %v334, %v361
  %363 = vmatmul.f32.gmra.mxu0 %v342
  %v364 = vpop.f32.mrf.mxu0
  %v365 = vadd.f32 %v334, %v364
  %366 = vdwg.mxu0
  %367 = vmatpush.msra.mxu0 0.0
  %368 = vmatpush.msra.mxu0 0.0
  %369 = vmatpush.msra.mxu0 0.0
  %370 = vmatpush.msra.mxu0 0.0
  %371 = vmatpush.msra.mxu0 0.0
  %372 = vmatpush.msra.mxu0 0.0
  %373 = vmatpush.msra.mxu0 0.0
  %374 = vmatpush.msra.mxu0 0.0
  %375 = vmatpush.msra.mxu0 %v216
  %376 = vmatpush.msra.mxu0 %v214
  %377 = vmatpush.msra.mxu0 %v212
  %378 = vmatpush.msra.mxu0 %v210
  %379 = vmatpush.msra.mxu0 %v208
  %380 = vmatpush.msra.mxu0 %v206
  %381 = vmatpush.msra.mxu0 %v204
  %382 = vmatpush.msra.mxu0 %v202
  %383 = vmatmul.f32.gmra.mxu0 %v339
  %v384 = vpop.f32.mrf.mxu0
  %v385 = vadd.f32 %v335, %v384
  %386 = vmatmul.f32.gmra.mxu0 %v342
  %v387 = vpop.f32.mrf.mxu0
  %v388 = vadd.f32 %v335, %v387
  %389 = vdwg.mxu0
  %392 = vrot.lane.b32.xlu0 %v362, 64
  %v393 = vpop.permute.xlu0 %392
  %394 = vrot.lane.b32.xlu0 %v365, 64
  %v395 = vpop.permute.xlu0 %394
  %v396 = vsel %vm136, %v362, 0
  %v398 = vsel %vm136, %v365, 0
  %v400 = vsel %vm136, %v393, 0
  %v402 = vsel %vm136, %v395, 0
  %404 = vmatpush.xpose.msra.mxu0 0.0
  %405 = vmatpush.xpose.msra.mxu0 0.0
  %406 = vmatpush.xpose.msra.mxu0 0.0
  %407 = vmatpush.xpose.msra.mxu0 0.0
  %408 = vmatpush.xpose.msra.mxu0 0.0
  %409 = vmatpush.xpose.msra.mxu0 0.0
  %410 = vmatpush.xpose.msra.mxu0 0.0
  %411 = vmatpush.xpose.msra.mxu0 0.0
  %412 = vmatpush.xpose.msra.mxu0 0.0
  %413 = vmatpush.xpose.msra.mxu0 0.0
  %414 = vmatpush.xpose.msra.mxu0 0.0
  %415 = vmatpush.xpose.msra.mxu0 0.0
  %416 = vmatpush.xpose.msra.mxu0 0.0
  %417 = vmatpush.xpose.msra.mxu0 0.0
  %418 = vmatpush.xpose.msra.mxu0 %v402
  %419 = vmatpush.xpose.msra.mxu0 %v400
  %420 = vmatmul.f32.gmra.mxu0 %v396
  %v421 = vpop.f32.mrf.mxu0
  %v422 = vadd.f32 0.0, %v421
  %423 = vmatmul.f32.gmra.mxu0 %v398
  %v424 = vpop.f32.mrf.mxu0
  %v425 = vadd.f32 0.0, %v424
  %426 = vdwg.mxu0
  %v427 = vmul.f32 %v422, 0.125
  %v428 = vmul.f32 %v425, 0.125
  %v429 = vadd.f32 %v427, %v132
  %v430 = vadd.f32 %v428, %v133
  %vm431 = vcmask 80896
  %v432 = vsel %vm431, %v429, -inf
  %433 = vmax.xlane.f32.xlu0 %v432
  %v434 = vpop.xlane.xlu0 %433
  %vm435 = vcmask 74752
  %v436 = vsel %vm435, %v430, -inf
  %437 = vmax.xlane.f32.xlu0 %v436
  %v438 = vpop.xlane.xlu0 %437
  %v439 = vsub.f32 %v429, %v434
  %v440 = vsub.f32 %v430, %v438
  %v441 = vmul.f32 %v439, 1.442695
  %v442 = vpow.pop %v441
  %v443 = vmul.f32 %v440, 1.442695
  %v444 = vpow.pop %v443
  %v445 = vsel %vm431, %v442, 0.0
  %446 = vadd.xlane.f32.xlu0 %v445
  %v447 = vpop.xlane.xlu0 %446
  %v448 = vsel %vm435, %v444, 0.0
  %449 = vadd.xlane.f32.xlu0 %v448
  %v450 = vpop.xlane.xlu0 %449
  %v451 = vrcp.pop %v447
  %v452 = vrcp.pop %v450
  %v453 = vmul.f32 %v442, %v451
  %v454 = vmul.f32 %v444, %v452
  %v456 = vsel %vm431, %v453, 0
  %v459 = vsel %vm431, %v454, 0
  %vm461 = vcmask 1041408
  %v463 = vsel %vm461, %v388, 0
  %465 = vmatpush.msra.mxu0 0.0
  %466 = vmatpush.msra.mxu0 0.0
  %467 = vmatpush.msra.mxu0 0.0
  %468 = vmatpush.msra.mxu0 0.0
  %469 = vmatpush.msra.mxu0 0.0
  %470 = vmatpush.msra.mxu0 0.0
  %471 = vmatpush.msra.mxu0 0.0
  %472 = vmatpush.msra.mxu0 0.0
  %473 = vmatpush.msra.mxu0 0.0
  %474 = vmatpush.msra.mxu0 0.0
  %475 = vmatpush.msra.mxu0 0.0
  %476 = vmatpush.msra.mxu0 0.0
  %477 = vmatpush.msra.mxu0 0.0
  %478 = vmatpush.msra.mxu0 0.0
  %479 = vmatpush.msra.mxu0 %v463
  %480 = vmatpush.msra.mxu0 %v385
  %481 = vmatmul.f32.gmra.mxu0 %v456
  %v482 = vpop.f32.mrf.mxu0
  %v483 = vadd.f32 0.0, %v482
  %484 = vmatmul.f32.gmra.mxu0 %v459
  %v485 = vpop.f32.mrf.mxu0
  %v486 = vadd.f32 0.0, %v485
  %487 = vdwg.mxu0
  %v489 = vsel %vm136, %v483, 0
  %v492 = vsel %vm136, %v486, 0
  %494 = vmatpush.msra.mxu0 0.0
  %495 = vmatpush.msra.mxu0 0.0
  %496 = vmatpush.msra.mxu0 0.0
  %497 = vmatpush.msra.mxu0 0.0
  %498 = vmatpush.msra.mxu0 0.0
  %499 = vmatpush.msra.mxu0 0.0
  %500 = vmatpush.msra.mxu0 0.0
  %501 = vmatpush.msra.mxu0 0.0
  %502 = vmatpush.msra.mxu0 %v225
  %503 = vmatpush.msra.mxu0 %v224
  %504 = vmatpush.msra.mxu0 %v223
  %505 = vmatpush.msra.mxu0 %v222
  %506 = vmatpush.msra.mxu0 %v221
  %507 = vmatpush.msra.mxu0 %v220
  %508 = vmatpush.msra.mxu0 %v219
  %509 = vmatpush.msra.mxu0 %v218
  %510 = vmatmul.f32.gmra.mxu0 %v489
  %v511 = vpop.f32.mrf.mxu0
  %v512 = vadd.f32 0.0, %v511
  %513 = vmatmul.f32.gmra.mxu0 %v492
  %v514 = vpop.f32.mrf.mxu0
  %v515 = vadd.f32 0.0, %v514
  %516 = vdwg.mxu0
  %v517 = vadd.f32 %v197, %v512
  %v518 = vadd.f32 %v198, %v515
  %v520 = vperm.slane %v226, 0
  %v522 = vadd.f32 %v517, %v520
  %v523 = vadd.f32 %v518, %v520
  %v524 = vsel %vm136, %v522, 0.0
  %525 = vadd.xlane.f32.xlu0 %v524
  %v526 = vpop.xlane.xlu0 %525
  %v527 = vsel %vm140, %v523, 0.0
  %528 = vadd.xlane.f32.xlu0 %v527
  %v529 = vpop.xlane.xlu0 %528
  %v530 = vmul.f32 %v526, %v150
  %v531 = vmul.f32 %v529, %v150
  %v532 = vsub.f32 %v522, %v530
  %v533 = vsub.f32 %v523, %v531
  %v534 = vmul.f32 %v532, %v532
  %v535 = vmul.f32 %v533, %v533
  %v536 = vsel %vm136, %v534, 0.0
  %537 = vadd.xlane.f32.xlu0 %v536
  %v538 = vpop.xlane.xlu0 %537
  %v539 = vsel %vm140, %v535, 0.0
  %540 = vadd.xlane.f32.xlu0 %v539
  %v541 = vpop.xlane.xlu0 %540
  %v542 = vmul.f32 %v538, %v150
  %v543 = vmul.f32 %v541, %v150
  %v544 = vadd.f32 %v542, 1e-05
  %v545 = vadd.f32 %v543, 1e-05
  %v546 = vrsqrt.pop %v544
  %v547 = vmul.f32 %v546, %v544
  %v548 = vmul.f32 %v547, %v546
  %v549 = vmul.f32 0.5, %v548
  %v550 = vsub.f32 1.5, %v549
  %v551 = vmul.f32 %v546, %v550
  %vm552 = vweird.f32 %v544
  %vm553 = vweird.f32 %v546
  %vm554 = vmor %vm552, %vm553
  %v555 = vsel %vm554, %v546, %v551
  %v556 = vrsqrt.pop %v545
  %v557 = vmul.f32 %v556, %v545
  %v558 = vmul.f32 %v557, %v556
  %v559 = vmul.f32 0.5, %v558
  %v560 = vsub.f32 1.5, %v559
  %v561 = vmul.f32 %v556, %v560
  %vm562 = vweird.f32 %v545
  %vm563 = vweird.f32 %v556
  %vm564 = vmor %vm562, %vm563
  %v565 = vsel %vm564, %v556, %v561
  %v566 = vmul.f32 %v532, %v555
  %v567 = vmul.f32 %v533, %v565
  %v569 = vperm.slane %v227, 0
  %v571 = vmul.f32 %v566, %v569
  %v572 = vmul.f32 %v567, %v569
  %v574 = vperm.slane %v228, 0
  %v576 = vadd.f32 %v571, %v574
  %v577 = vadd.f32 %v572, %v574
  %v579 = vperm.slane %v245, 0
  %v580 = vperm.slane %v245, 1
  %v584 = vsel %vm136, %v576, 0
  %v587 = vsel %vm136, %v577, 0
  %589 = vmatpush.msra.mxu0 0.0
  %590 = vmatpush.msra.mxu0 0.0
  %591 = vmatpush.msra.mxu0 0.0
  %592 = vmatpush.msra.mxu0 0.0
  %593 = vmatpush.msra.mxu0 0.0
  %594 = vmatpush.msra.mxu0 0.0
  %595 = vmatpush.msra.mxu0 0.0
  %596 = vmatpush.msra.mxu0 0.0
  %597 = vmatpush.msra.mxu0 %v243
  %598 = vmatpush.msra.mxu0 %v241
  %599 = vmatpush.msra.mxu0 %v239
  %600 = vmatpush.msra.mxu0 %v237
  %601 = vmatpush.msra.mxu0 %v235
  %602 = vmatpush.msra.mxu0 %v233
  %603 = vmatpush.msra.mxu0 %v231
  %604 = vmatpush.msra.mxu0 %v229
  %605 = vmatmul.f32.gmra.mxu0 %v584
  %v606 = vpop.f32.mrf.mxu0
  %v607 = vadd.f32 %v579, %v606
  %608 = vmatmul.f32.gmra.mxu0 %v587
  %v609 = vpop.f32.mrf.mxu0
  %v610 = vadd.f32 %v579, %v609
  %611 = vdwg.mxu0
  %612 = vmatpush.msra.mxu0 0.0
  %613 = vmatpush.msra.mxu0 0.0
  %614 = vmatpush.msra.mxu0 0.0
  %615 = vmatpush.msra.mxu0 0.0
  %616 = vmatpush.msra.mxu0 0.0
  %617 = vmatpush.msra.mxu0 0.0
  %618 = vmatpush.msra.mxu0 0.0
  %619 = vmatpush.msra.mxu0 0.0
  %620 = vmatpush.msra.mxu0 %v244
  %621 = vmatpush.msra.mxu0 %v242
  %622 = vmatpush.msra.mxu0 %v240
  %623 = vmatpush.msra.mxu0 %v238
  %624 = vmatpush.msra.mxu0 %v236
  %625 = vmatpush.msra.mxu0 %v234
  %626 = vmatpush.msra.mxu0 %v232
  %627 = vmatpush.msra.mxu0 %v230
  %628 = vmatmul.f32.gmra.mxu0 %v584
  %v629 = vpop.f32.mrf.mxu0
  %v630 = vadd.f32 %v580, %v629
  %631 = vmatmul.f32.gmra.mxu0 %v587
  %v632 = vpop.f32.mrf.mxu0
  %v633 = vadd.f32 %v580, %v632
  %634 = vdwg.mxu0
  %v635 = vmul.f32 %v607, -1.702
  %v636 = vmul.f32 %v630, -1.702
  %v637 = vmul.f32 %v610, -1.702
  %v638 = vmul.f32 %v633, -1.702
  %v639 = vmul.f32 %v635, 1.442695
  %v640 = vpow.pop %v639
  %v641 = vmul.f32 %v636, 1.442695
  %v642 = vpow.pop %v641
  %v643 = vmul.f32 %v637, 1.442695
  %v644 = vpow.pop %v643
  %v645 = vmul.f32 %v638, 1.442695
  %v646 = vpow.pop %v645
  %v647 = vadd.f32 %v640, 1.0
  %v648 = vadd.f32 %v642, 1.0
  %v649 = vadd.f32 %v644, 1.0
  %v650 = vadd.f32 %v646, 1.0
  %v651 = vrcp.pop %v647
  %v652 = vmul.f32 %v647, %v651
  %v653 = vsub.f32 1.0, %v652
  %v654 = vmul.f32 %v651, %v653
  %v655 = vadd.f32 %v651, %v654
  %vm656 = vweird.f32 %v647
  %vm657 = vweird.f32 %v651
  %vm658 = vmor %vm656, %vm657
  %v659 = vsel %vm658, %v651, %v655
  %v660 = vand.u32 2147483647, %v647
  %vm661 = vcmp.eq.f32.partialorder %v660, 8.507059e+37
  %v662 = vand.u32 %v647, 2147483648
  %v663 = vor.u32 1.1754944e-38, %v662
  %v664 = vsel %vm661, %v663, %v659
  %v665 = vmul.f32 1.0, %v664
  %v666 = vrcp.pop %v648
  %v667 = vmul.f32 %v648, %v666
  %v668 = vsub.f32 1.0, %v667
  %v669 = vmul.f32 %v666, %v668
  %v670 = vadd.f32 %v666, %v669
  %vm671 = vweird.f32 %v648
  %vm672 = vweird.f32 %v666
  %vm673 = vmor %vm671, %vm672
  %v674 = vsel %vm673, %v666, %v670
  %v675 = vand.u32 2147483647, %v648
  %vm676 = vcmp.eq.f32.partialorder %v675, 8.507059e+37
  %v677 = vand.u32 %v648, 2147483648
  %v678 = vor.u32 1.1754944e-38, %v677
  %v679 = vsel %vm676, %v678, %v674
  %v680 = vmul.f32 1.0, %v679
  %v681 = vrcp.pop %v649
  %v682 = vmul.f32 %v649, %v681
  %v683 = vsub.f32 1.0, %v682
  %v684 = vmul.f32 %v681, %v683
  %v685 = vadd.f32 %v681, %v684
  %vm686 = vweird.f32 %v649
  %vm687 = vweird.f32 %v681
  %vm688 = vmor %vm686, %vm687
  %v689 = vsel %vm688, %v681, %v685
  %v690 = vand.u32 2147483647, %v649
  %vm691 = vcmp.eq.f32.partialorder %v690, 8.507059e+37
  %v692 = vand.u32 %v649, 2147483648
  %v693 = vor.u32 1.1754944e-38, %v692
  %v694 = vsel %vm691, %v693, %v689
  %v695 = vmul.f32 1.0, %v694
  %v696 = vrcp.pop %v650
  %v697 = vmul.f32 %v650, %v696
  %v698 = vsub.f32 1.0, %v697
  %v699 = vmul.f32 %v696, %v698
  %v700 = vadd.f32 %v696, %v699
  %vm701 = vweird.f32 %v650
  %vm702 = vweird.f32 %v696
  %vm703 = vmor %vm701, %vm702
  %v704 = vsel %vm703, %v696, %v700
  %v705 = vand.u32 2147483647, %v650
  %vm706 = vcmp.eq.f32.partialorder %v705, 8.507059e+37
  %v707 = vand.u32 %v650, 2147483648
  %v708 = vor.u32 1.1754944e-38, %v707
  %v709 = vsel %vm706, %v708, %v704
  %v710 = vmul.f32 1.0, %v709
  %v711 = vmul.f32 %v607, %v665
  %v712 = vmul.f32 %v630, %v680
  %v713 = vmul.f32 %v610, %v695
  %v714 = vmul.f32 %v633, %v710
  %715 = vmatpush.msra.mxu0 %v261
  %716 = vmatpush.msra.mxu0 %v260
  %717 = vmatpush.msra.mxu0 %v259
  %718 = vmatpush.msra.mxu0 %v258
  %719 = vmatpush.msra.mxu0 %v257
  %720 = vmatpush.msra.mxu0 %v256
  %721 = vmatpush.msra.mxu0 %v255
  %722 = vmatpush.msra.mxu0 %v254
  %723 = vmatpush.msra.mxu0 %v253
  %724 = vmatpush.msra.mxu0 %v252
  %725 = vmatpush.msra.mxu0 %v251
  %726 = vmatpush.msra.mxu0 %v250
  %727 = vmatpush.msra.mxu0 %v249
  %728 = vmatpush.msra.mxu0 %v248
  %729 = vmatpush.msra.mxu0 %v247
  %730 = vmatpush.msra.mxu0 %v246
  %731 = vmatmul.f32.gmra.mxu0 %v711
  %v732 = vpop.f32.mrf.mxu0
  %v733 = vadd.f32 0.0, %v732
  %734 = vmatmul.f32.gmra.mxu0 %v713
  %v735 = vpop.f32.mrf.mxu0
  %v736 = vadd.f32 0.0, %v735
  %737 = vdwg.mxu0
  %738 = vmatpush.msra.mxu0 %v277
  %739 = vmatpush.msra.mxu0 %v276
  %740 = vmatpush.msra.mxu0 %v275
  %741 = vmatpush.msra.mxu0 %v274
  %742 = vmatpush.msra.mxu0 %v273
  %743 = vmatpush.msra.mxu0 %v272
  %744 = vmatpush.msra.mxu0 %v271
  %745 = vmatpush.msra.mxu0 %v270
  %746 = vmatpush.msra.mxu0 %v269
  %747 = vmatpush.msra.mxu0 %v268
  %748 = vmatpush.msra.mxu0 %v267
  %749 = vmatpush.msra.mxu0 %v266
  %750 = vmatpush.msra.mxu0 %v265
  %751 = vmatpush.msra.mxu0 %v264
  %752 = vmatpush.msra.mxu0 %v263
  %753 = vmatpush.msra.mxu0 %v262
  %754 = vmatmul.f32.gmra.mxu0 %v712
  %v755 = vpop.f32.mrf.mxu0
  %v756 = vadd.f32 %v733, %v755
  %757 = vmatmul.f32.gmra.mxu0 %v714
  %v758 = vpop.f32.mrf.mxu0
  %v759 = vadd.f32 %v736, %v758
  %760 = vdwg.mxu0
  %v761 = vadd.f32 %v522, %v756
  %v762 = vadd.f32 %v523, %v759
  %v764 = vperm.slane %v278, 0
  %v766 = vadd.f32 %v761, %v764
  %v767 = vadd.f32 %v762, %v764
  %v768 = vld [vmem:[%s33] sm:$0x1]
  %v769 = vld [vmem:[%s35] sm:$0x1]
  %v770 = vld [vmem:[%s37] sm:$0xff]
  %v771 = vld [vmem:[%s37 + $0x8] sm:$0xff]
  %v772 = vld [vmem:[%s37 + $0x10] sm:$0xff]
  %v773 = vld [vmem:[%s37 + $0x18] sm:$0xff]
  %v774 = vld [vmem:[%s37 + $0x20] sm:$0xff]
  %v775 = vld [vmem:[%s37 + $0x28] sm:$0xff]
  %v776 = vld [vmem:[%s37 + $0x30] sm:$0xff]
  %v777 = vld [vmem:[%s37 + $0x38] sm:$0xff]
  %v778 = vld [vmem:[%s37 + $0x40] sm:$0xff]
  %v779 = vld [vmem:[%s37 + $0x48] sm:$0xff]
  %v780 = vld [vmem:[%s37 + $0x50] sm:$0xff]
  %v781 = vld [vmem:[%s37 + $0x58] sm:$0xff]
  %v782 = vld [vmem:[%s37 + $0x60] sm:$0xff]
  %v783 = vld [vmem:[%s37 + $0x68] sm:$0xff]
  %v784 = vld [vmem:[%s37 + $0x70] sm:$0xff]
  %v785 = vld [vmem:[%s37 + $0x78] sm:$0xff]
  %v786 = vld [vmem:[%s39] sm:$0x3]
  %v787 = vld [vmem:[%s41] sm:$0xff]
  %v788 = vld [vmem:[%s41 + $0x8] sm:$0xff]
  %v789 = vld [vmem:[%s41 + $0x10] sm:$0xff]
  %v790 = vld [vmem:[%s41 + $0x18] sm:$0xff]
  %v791 = vld [vmem:[%s41 + $0x20] sm:$0xff]
  %v792 = vld [vmem:[%s41 + $0x28] sm:$0xff]
  %v793 = vld [vmem:[%s41 + $0x30] sm:$0xff]
  %v794 = vld [vmem:[%s41 + $0x38] sm:$0xff]
  %v795 = vld [vmem:[%s43] sm:$0x1]
  %v796 = vld [vmem:[%s45] sm:$0x1]
  %v797 = vld [vmem:[%s47] sm:$0x1]
  %v798 = vld [vmem:[%s49] sm:$0xff]
  %v799 = vld [vmem:[%s49 + $0x8] sm:$0xff]
  %v800 = vld [vmem:[%s49 + $0x10] sm:$0xff]
  %v801 = vld [vmem:[%s49 + $0x18] sm:$0xff]
  %v802 = vld [vmem:[%s49 + $0x20] sm:$0xff]
  %v803 = vld [vmem:[%s49 + $0x28] sm:$0xff]
  %v804 = vld [vmem:[%s49 + $0x30] sm:$0xff]
  %v805 = vld [vmem:[%s49 + $0x38] sm:$0xff]
  %v806 = vld [vmem:[%s49 + $0x40] sm:$0xff]
  %v807 = vld [vmem:[%s49 + $0x48] sm:$0xff]
  %v808 = vld [vmem:[%s49 + $0x50] sm:$0xff]
  %v809 = vld [vmem:[%s49 + $0x58] sm:$0xff]
  %v810 = vld [vmem:[%s49 + $0x60] sm:$0xff]
  %v811 = vld [vmem:[%s49 + $0x68] sm:$0xff]
  %v812 = vld [vmem:[%s49 + $0x70] sm:$0xff]
  %v813 = vld [vmem:[%s49 + $0x78] sm:$0xff]
  %v814 = vld [vmem:[%s51] sm:$0x3]
  %v815 = vld [vmem:[%s53] sm:$0xff]
  %v816 = vld [vmem:[%s53 + $0x8] sm:$0xff]
  %v817 = vld [vmem:[%s53 + $0x10] sm:$0xff]
  %v818 = vld [vmem:[%s53 + $0x18] sm:$0xff]
  %v819 = vld [vmem:[%s53 + $0x20] sm:$0xff]
  %v820 = vld [vmem:[%s53 + $0x28] sm:$0xff]
  %v821 = vld [vmem:[%s53 + $0x30] sm:$0xff]
  %v822 = vld [vmem:[%s53 + $0x38] sm:$0xff]
  %v823 = vld [vmem:[%s53 + $0x40] sm:$0xff]
  %v824 = vld [vmem:[%s53 + $0x48] sm:$0xff]
  %v825 = vld [vmem:[%s53 + $0x50] sm:$0xff]
  %v826 = vld [vmem:[%s53 + $0x58] sm:$0xff]
  %v827 = vld [vmem:[%s53 + $0x60] sm:$0xff]
  %v828 = vld [vmem:[%s53 + $0x68] sm:$0xff]
  %v829 = vld [vmem:[%s53 + $0x70] sm:$0xff]
  %v830 = vld [vmem:[%s53 + $0x78] sm:$0xff]
  %v831 = vld [vmem:[%s53 + $0x80] sm:$0xff]
  %v832 = vld [vmem:[%s53 + $0x88] sm:$0xff]
  %v833 = vld [vmem:[%s53 + $0x90] sm:$0xff]
  %v834 = vld [vmem:[%s53 + $0x98] sm:$0xff]
  %v835 = vld [vmem:[%s53 + $0xa0] sm:$0xff]
  %v836 = vld [vmem:[%s53 + $0xa8] sm:$0xff]
  %v837 = vld [vmem:[%s53 + $0xb0] sm:$0xff]
  %v838 = vld [vmem:[%s53 + $0xb8] sm:$0xff]
  %v839 = vld [vmem:[%s53 + $0xc0] sm:$0xff]
  %v840 = vld [vmem:[%s53 + $0xc8] sm:$0xff]
  %v841 = vld [vmem:[%s53 + $0xd0] sm:$0xff]
  %v842 = vld [vmem:[%s53 + $0xd8] sm:$0xff]
  %v843 = vld [vmem:[%s53 + $0xe0] sm:$0xff]
  %v844 = vld [vmem:[%s53 + $0xe8] sm:$0xff]
  %v845 = vld [vmem:[%s53 + $0xf0] sm:$0xff]
  %v846 = vld [vmem:[%s53 + $0xf8] sm:$0xff]
  %v847 = vld [vmem:[%s55] sm:$0x1]
  %v848 = vsel %vm136, %v766, 0.0
  %849 = vadd.xlane.f32.xlu0 %v848
  %v850 = vpop.xlane.xlu0 %849
  %v851 = vsel %vm140, %v767, 0.0
  %852 = vadd.xlane.f32.xlu0 %v851
  %v853 = vpop.xlane.xlu0 %852
  %v854 = vmul.f32 %v850, %v150
  %v855 = vmul.f32 %v853, %v150
  %v856 = vsub.f32 %v766, %v854
  %v857 = vsub.f32 %v767, %v855
  %v858 = vmul.f32 %v856, %v856
  %v859 = vmul.f32 %v857, %v857
  %v860 = vsel %vm136, %v858, 0.0
  %861 = vadd.xlane.f32.xlu0 %v860
  %v862 = vpop.xlane.xlu0 %861
  %v863 = vsel %vm140, %v859, 0.0
  %864 = vadd.xlane.f32.xlu0 %v863
  %v865 = vpop.xlane.xlu0 %864
  %v866 = vmul.f32 %v862, %v150
  %v867 = vmul.f32 %v865, %v150
  %v868 = vadd.f32 %v866, 1e-05
  %v869 = vadd.f32 %v867, 1e-05
  %v870 = vrsqrt.pop %v868
  %v871 = vmul.f32 %v870, %v868
  %v872 = vmul.f32 %v871, %v870
  %v873 = vmul.f32 0.5, %v872
  %v874 = vsub.f32 1.5, %v873
  %v875 = vmul.f32 %v870, %v874
  %vm876 = vweird.f32 %v868
  %vm877 = vweird.f32 %v870
  %vm878 = vmor %vm876, %vm877
  %v879 = vsel %vm878, %v870, %v875
  %v880 = vrsqrt.pop %v869
  %v881 = vmul.f32 %v880, %v869
  %v882 = vmul.f32 %v881, %v880
  %v883 = vmul.f32 0.5, %v882
  %v884 = vsub.f32 1.5, %v883
  %v885 = vmul.f32 %v880, %v884
  %vm886 = vweird.f32 %v869
  %vm887 = vweird.f32 %v880
  %vm888 = vmor %vm886, %vm887
  %v889 = vsel %vm888, %v880, %v885
  %v890 = vmul.f32 %v856, %v879
  %v891 = vmul.f32 %v857, %v889
  %v893 = vperm.slane %v768, 0
  %v895 = vmul.f32 %v890, %v893
  %v896 = vmul.f32 %v891, %v893
  %v898 = vperm.slane %v769, 0
  %v900 = vadd.f32 %v895, %v898
  %v901 = vadd.f32 %v896, %v898
  %v903 = vperm.slane %v786, 0
  %v904 = vperm.slane %v786, 1
  %v908 = vsel %vm136, %v900, 0
  %v911 = vsel %vm136, %v901, 0
  %913 = vmatpush.msra.mxu0 0.0
  %914 = vmatpush.msra.mxu0 0.0
  %915 = vmatpush.msra.mxu0 0.0
  %916 = vmatpush.msra.mxu0 0.0
  %917 = vmatpush.msra.mxu0 0.0
  %918 = vmatpush.msra.mxu0 0.0
  %919 = vmatpush.msra.mxu0 0.0
  %920 = vmatpush.msra.mxu0 0.0
  %921 = vmatpush.msra.mxu0 %v784
  %922 = vmatpush.msra.mxu0 %v782
  %923 = vmatpush.msra.mxu0 %v780
  %924 = vmatpush.msra.mxu0 %v778
  %925 = vmatpush.msra.mxu0 %v776
  %926 = vmatpush.msra.mxu0 %v774
  %927 = vmatpush.msra.mxu0 %v772
  %928 = vmatpush.msra.mxu0 %v770
  %929 = vmatmul.f32.gmra.mxu0 %v908
  %v930 = vpop.f32.mrf.mxu0
  %v931 = vadd.f32 %v903, %v930
  %932 = vmatmul.f32.gmra.mxu0 %v911
  %v933 = vpop.f32.mrf.mxu0
  %v934 = vadd.f32 %v903, %v933
  %935 = vdwg.mxu0
  %936 = vmatpush.msra.mxu0 0.0
  %937 = vmatpush.msra.mxu0 0.0
  %938 = vmatpush.msra.mxu0 0.0
  %939 = vmatpush.msra.mxu0 0.0
  %940 = vmatpush.msra.mxu0 0.0
  %941 = vmatpush.msra.mxu0 0.0
  %942 = vmatpush.msra.mxu0 0.0
  %943 = vmatpush.msra.mxu0 0.0
  %944 = vmatpush.msra.mxu0 %v785
  %945 = vmatpush.msra.mxu0 %v783
  %946 = vmatpush.msra.mxu0 %v781
  %947 = vmatpush.msra.mxu0 %v779
  %948 = vmatpush.msra.mxu0 %v777
  %949 = vmatpush.msra.mxu0 %v775
  %950 = vmatpush.msra.mxu0 %v773
  %951 = vmatpush.msra.mxu0 %v771
  %952 = vmatmul.f32.gmra.mxu0 %v908
  %v953 = vpop.f32.mrf.mxu0
  %v954 = vadd.f32 %v904, %v953
  %955 = vmatmul.f32.gmra.mxu0 %v911
  %v956 = vpop.f32.mrf.mxu0
  %v957 = vadd.f32 %v904, %v956
  %958 = vdwg.mxu0
  %961 = vrot.lane.b32.xlu0 %v931, 64
  %v962 = vpop.permute.xlu0 %961
  %963 = vrot.lane.b32.xlu0 %v934, 64
  %v964 = vpop.permute.xlu0 %963
  %v965 = vsel %vm136, %v931, 0
  %v967 = vsel %vm136, %v934, 0
  %v969 = vsel %vm136, %v962, 0
  %v971 = vsel %vm136, %v964, 0
  %973 = vmatpush.xpose.msra.mxu0 0.0
  %974 = vmatpush.xpose.msra.mxu0 0.0
  %975 = vmatpush.xpose.msra.mxu0 0.0
  %976 = vmatpush.xpose.msra.mxu0 0.0
  %977 = vmatpush.xpose.msra.mxu0 0.0
  %978 = vmatpush.xpose.msra.mxu0 0.0
  %979 = vmatpush.xpose.msra.mxu0 0.0
  %980 = vmatpush.xpose.msra.mxu0 0.0
  %981 = vmatpush.xpose.msra.mxu0 0.0
  %982 = vmatpush.xpose.msra.mxu0 0.0
  %983 = vmatpush.xpose.msra.mxu0 0.0
  %984 = vmatpush.xpose.msra.mxu0 0.0
  %985 = vmatpush.xpose.msra.mxu0 0.0
  %986 = vmatpush.xpose.msra.mxu0 0.0
  %987 = vmatpush.xpose.msra.mxu0 %v971
  %988 = vmatpush.xpose.msra.mxu0 %v969
  %989 = vmatmul.f32.gmra.mxu0 %v965
  %v990 = vpop.f32.mrf.mxu0
  %v991 = vadd.f32 0.0, %v990
  %992 = vmatmul.f32.gmra.mxu0 %v967
  %v993 = vpop.f32.mrf.mxu0
  %v994 = vadd.f32 0.0, %v993
  %995 = vdwg.mxu0
  %v996 = vmul.f32 %v991, 0.125
  %v997 = vmul.f32 %v994, 0.125
  %v998 = vadd.f32 %v996, %v132
  %v999 = vadd.f32 %v997, %v133
  %v1000 = vsel %vm431, %v998, -inf
  %1001 = vmax.xlane.f32.xlu0 %v1000
  %v1002 = vpop.xlane.xlu0 %1001
  %v1003 = vsel %vm435, %v999, -inf
  %1004 = vmax.xlane.f32.xlu0 %v1003
  %v1005 = vpop.xlane.xlu0 %1004
  %v1006 = vsub.f32 %v998, %v1002
  %v1007 = vsub.f32 %v999, %v1005
  %v1008 = vmul.f32 %v1006, 1.442695
  %v1009 = vpow.pop %v1008
  %v1010 = vmul.f32 %v1007, 1.442695
  %v1011 = vpow.pop %v1010
  %v1012 = vsel %vm431, %v1009, 0.0
  %1013 = vadd.xlane.f32.xlu0 %v1012
  %v1014 = vpop.xlane.xlu0 %1013
  %v1015 = vsel %vm435, %v1011, 0.0
  %1016 = vadd.xlane.f32.xlu0 %v1015
  %v1017 = vpop.xlane.xlu0 %1016
  %v1018 = vrcp.pop %v1014
  %v1019 = vrcp.pop %v1017
  %v1020 = vmul.f32 %v1009, %v1018
  %v1021 = vmul.f32 %v1011, %v1019
  %v1023 = vsel %vm431, %v1020, 0
  %v1026 = vsel %vm431, %v1021, 0
  %v1029 = vsel %vm461, %v957, 0
  %1031 = vmatpush.msra.mxu0 0.0
  %1032 = vmatpush.msra.mxu0 0.0
  %1033 = vmatpush.msra.mxu0 0.0
  %1034 = vmatpush.msra.mxu0 0.0
  %1035 = vmatpush.msra.mxu0 0.0
  %1036 = vmatpush.msra.mxu0 0.0
  %1037 = vmatpush.msra.mxu0 0.0
  %1038 = vmatpush.msra.mxu0 0.0
  %1039 = vmatpush.msra.mxu0 0.0
  %1040 = vmatpush.msra.mxu0 0.0
  %1041 = vmatpush.msra.mxu0 0.0
  %1042 = vmatpush.msra.mxu0 0.0
  %1043 = vmatpush.msra.mxu0 0.0
  %1044 = vmatpush.msra.mxu0 0.0
  %1045 = vmatpush.msra.mxu0 %v1029
  %1046 = vmatpush.msra.mxu0 %v954
  %1047 = vmatmul.f32.gmra.mxu0 %v1023
  %v1048 = vpop.f32.mrf.mxu0
  %v1049 = vadd.f32 0.0, %v1048
  %1050 = vmatmul.f32.gmra.mxu0 %v1026
  %v1051 = vpop.f32.mrf.mxu0
  %v1052 = vadd.f32 0.0, %v1051
  %1053 = vdwg.mxu0
  %v1055 = vsel %vm136, %v1049, 0
  %v1058 = vsel %vm136, %v1052, 0
  %1060 = vmatpush.msra.mxu0 0.0
  %1061 = vmatpush.msra.mxu0 0.0
  %1062 = vmatpush.msra.mxu0 0.0
  %1063 = vmatpush.msra.mxu0 0.0
  %1064 = vmatpush.msra.mxu0 0.0
  %1065 = vmatpush.msra.mxu0 0.0
  %1066 = vmatpush.msra.mxu0 0.0
  %1067 = vmatpush.msra.mxu0 0.0
  %1068 = vmatpush.msra.mxu0 %v794
  %1069 = vmatpush.msra.mxu0 %v793
  %1070 = vmatpush.msra.mxu0 %v792
  %1071 = vmatpush.msra.mxu0 %v791
  %1072 = vmatpush.msra.mxu0 %v790
  %1073 = vmatpush.msra.mxu0 %v789
  %1074 = vmatpush.msra.mxu0 %v788
  %1075 = vmatpush.msra.mxu0 %v787
  %1076 = vmatmul.f32.gmra.mxu0 %v1055
  %v1077 = vpop.f32.mrf.mxu0
  %v1078 = vadd.f32 0.0, %v1077
  %1079 = vmatmul.f32.gmra.mxu0 %v1058
  %v1080 = vpop.f32.mrf.mxu0
  %v1081 = vadd.f32 0.0, %v1080
  %1082 = vdwg.mxu0
  %v1083 = vadd.f32 %v766, %v1078
  %v1084 = vadd.f32 %v767, %v1081
  %v1086 = vperm.slane %v795, 0
  %v1088 = vadd.f32 %v1083, %v1086
  %v1089 = vadd.f32 %v1084, %v1086
  %v1090 = vsel %vm136, %v1088, 0.0
  %1091 = vadd.xlane.f32.xlu0 %v1090
  %v1092 = vpop.xlane.xlu0 %1091
  %v1093 = vsel %vm140, %v1089, 0.0
  %1094 = vadd.xlane.f32.xlu0 %v1093
  %v1095 = vpop.xlane.xlu0 %1094
  %v1096 = vmul.f32 %v1092, %v150
  %v1097 = vmul.f32 %v1095, %v150
  %v1098 = vsub.f32 %v1088, %v1096
  %v1099 = vsub.f32 %v1089, %v1097
  %v1100 = vmul.f32 %v1098, %v1098
  %v1101 = vmul.f32 %v1099, %v1099
  %v1102 = vsel %vm136, %v1100, 0.0
  %1103 = vadd.xlane.f32.xlu0 %v1102
  %v1104 = vpop.xlane.xlu0 %1103
  %v1105 = vsel %vm140, %v1101, 0.0
  %1106 = vadd.xlane.f32.xlu0 %v1105
  %v1107 = vpop.xlane.xlu0 %1106
  %v1108 = vmul.f32 %v1104, %v150
  %v1109 = vmul.f32 %v1107, %v150
  %v1110 = vadd.f32 %v1108, 1e-05
  %v1111 = vadd.f32 %v1109, 1e-05
  %v1112 = vrsqrt.pop %v1110
  %v1113 = vmul.f32 %v1112, %v1110
  %v1114 = vmul.f32 %v1113, %v1112
  %v1115 = vmul.f32 0.5, %v1114
  %v1116 = vsub.f32 1.5, %v1115
  %v1117 = vmul.f32 %v1112, %v1116
  %vm1118 = vweird.f32 %v1110
  %vm1119 = vweird.f32 %v1112
  %vm1120 = vmor %vm1118, %vm1119
  %v1121 = vsel %vm1120, %v1112, %v1117
  %v1122 = vrsqrt.pop %v1111
  %v1123 = vmul.f32 %v1122, %v1111
  %v1124 = vmul.f32 %v1123, %v1122
  %v1125 = vmul.f32 0.5, %v1124
  %v1126 = vsub.f32 1.5, %v1125
  %v1127 = vmul.f32 %v1122, %v1126
  %vm1128 = vweird.f32 %v1111
  %vm1129 = vweird.f32 %v1122
  %vm1130 = vmor %vm1128, %vm1129
  %v1131 = vsel %vm1130, %v1122, %v1127
  %v1132 = vmul.f32 %v1098, %v1121
  %v1133 = vmul.f32 %v1099, %v1131
  %v1135 = vperm.slane %v796, 0
  %v1137 = vmul.f32 %v1132, %v1135
  %v1138 = vmul.f32 %v1133, %v1135
  %v1140 = vperm.slane %v797, 0
  %v1142 = vadd.f32 %v1137, %v1140
  %v1143 = vadd.f32 %v1138, %v1140
  %v1145 = vperm.slane %v814, 0
  %v1146 = vperm.slane %v814, 1
  %v1150 = vsel %vm136, %v1142, 0
  %v1153 = vsel %vm136, %v1143, 0
  %1155 = vmatpush.msra.mxu0 0.0
  %1156 = vmatpush.msra.mxu0 0.0
  %1157 = vmatpush.msra.mxu0 0.0
  %1158 = vmatpush.msra.mxu0 0.0
  %1159 = vmatpush.msra.mxu0 0.0
  %1160 = vmatpush.msra.mxu0 0.0
  %1161 = vmatpush.msra.mxu0 0.0
  %1162 = vmatpush.msra.mxu0 0.0
  %1163 = vmatpush.msra.mxu0 %v812
  %1164 = vmatpush.msra.mxu0 %v810
  %1165 = vmatpush.msra.mxu0 %v808
  %1166 = vmatpush.msra.mxu0 %v806
  %1167 = vmatpush.msra.mxu0 %v804
  %1168 = vmatpush.msra.mxu0 %v802
  %1169 = vmatpush.msra.mxu0 %v800
  %1170 = vmatpush.msra.mxu0 %v798
  %1171 = vmatmul.f32.gmra.mxu0 %v1150
  %v1172 = vpop.f32.mrf.mxu0
  %v1173 = vadd.f32 %v1145, %v1172
  %1174 = vmatmul.f32.gmra.mxu0 %v1153
  %v1175 = vpop.f32.mrf.mxu0
  %v1176 = vadd.f32 %v1145, %v1175
  %1177 = vdwg.mxu0
  %1178 = vmatpush.msra.mxu0 0.0
  %1179 = vmatpush.msra.mxu0 0.0
  %1180 = vmatpush.msra.mxu0 0.0
  %1181 = vmatpush.msra.mxu0 0.0
  %1182 = vmatpush.msra.mxu0 0.0
  %1183 = vmatpush.msra.mxu0 0.0
  %1184 = vmatpush.msra.mxu0 0.0
  %1185 = vmatpush.msra.mxu0 0.0
  %1186 = vmatpush.msra.mxu0 %v813
  %1187 = vmatpush.msra.mxu0 %v811
  %1188 = vmatpush.msra.mxu0 %v809
  %1189 = vmatpush.msra.mxu0 %v807
  %1190 = vmatpush.msra.mxu0 %v805
  %1191 = vmatpush.msra.mxu0 %v803
  %1192 = vmatpush.msra.mxu0 %v801
  %1193 = vmatpush.msra.mxu0 %v799
  %1194 = vmatmul.f32.gmra.mxu0 %v1150
  %v1195 = vpop.f32.mrf.mxu0
  %v1196 = vadd.f32 %v1146, %v1195
  %1197 = vmatmul.f32.gmra.mxu0 %v1153
  %v1198 = vpop.f32.mrf.mxu0
  %v1199 = vadd.f32 %v1146, %v1198
  %1200 = vdwg.mxu0
  %v1201 = vmul.f32 %v1173, -1.702
  %v1202 = vmul.f32 %v1196, -1.702
  %v1203 = vmul.f32 %v1176, -1.702
  %v1204 = vmul.f32 %v1199, -1.702
  %v1205 = vmul.f32 %v1201, 1.442695
  %v1206 = vpow.pop %v1205
  %v1207 = vmul.f32 %v1202, 1.442695
  %v1208 = vpow.pop %v1207
  %v1209 = vmul.f32 %v1203, 1.442695
  %v1210 = vpow.pop %v1209
  %v1211 = vmul.f32 %v1204, 1.442695
  %v1212 = vpow.pop %v1211
  %v1213 = vadd.f32 %v1206, 1.0
  %v1214 = vadd.f32 %v1208, 1.0
  %v1215 = vadd.f32 %v1210, 1.0
  %v1216 = vadd.f32 %v1212, 1.0
  %v1217 = vrcp.pop %v1213
  %v1218 = vmul.f32 %v1213, %v1217
  %v1219 = vsub.f32 1.0, %v1218
  %v1220 = vmul.f32 %v1217, %v1219
  %v1221 = vadd.f32 %v1217, %v1220
  %vm1222 = vweird.f32 %v1213
  %vm1223 = vweird.f32 %v1217
  %vm1224 = vmor %vm1222, %vm1223
  %v1225 = vsel %vm1224, %v1217, %v1221
  %v1226 = vand.u32 2147483647, %v1213
  %vm1227 = vcmp.eq.f32.partialorder %v1226, 8.507059e+37
  %v1228 = vand.u32 %v1213, 2147483648
  %v1229 = vor.u32 1.1754944e-38, %v1228
  %v1230 = vsel %vm1227, %v1229, %v1225
  %v1231 = vmul.f32 1.0, %v1230
  %v1232 = vrcp.pop %v1214
  %v1233 = vmul.f32 %v1214, %v1232
  %v1234 = vsub.f32 1.0, %v1233
  %v1235 = vmul.f32 %v1232, %v1234
  %v1236 = vadd.f32 %v1232, %v1235
  %vm1237 = vweird.f32 %v1214
  %vm1238 = vweird.f32 %v1232
  %vm1239 = vmor %vm1237, %vm1238
  %v1240 = vsel %vm1239, %v1232, %v1236
  %v1241 = vand.u32 2147483647, %v1214
  %vm1242 = vcmp.eq.f32.partialorder %v1241, 8.507059e+37
  %v1243 = vand.u32 %v1214, 2147483648
  %v1244 = vor.u32 1.1754944e-38, %v1243
  %v1245 = vsel %vm1242, %v1244, %v1240
  %v1246 = vmul.f32 1.0, %v1245
  %v1247 = vrcp.pop %v1215
  %v1248 = vmul.f32 %v1215, %v1247
  %v1249 = vsub.f32 1.0, %v1248
  %v1250 = vmul.f32 %v1247, %v1249
  %v1251 = vadd.f32 %v1247, %v1250
  %vm1252 = vweird.f32 %v1215
  %vm1253 = vweird.f32 %v1247
  %vm1254 = vmor %vm1252, %vm1253
  %v1255 = vsel %vm1254, %v1247, %v1251
  %v1256 = vand.u32 2147483647, %v1215
  %vm1257 = vcmp.eq.f32.partialorder %v1256, 8.507059e+37
  %v1258 = vand.u32 %v1215, 2147483648
  %v1259 = vor.u32 1.1754944e-38, %v1258
  %v1260 = vsel %vm1257, %v1259, %v1255
  %v1261 = vmul.f32 1.0, %v1260
  %v1262 = vrcp.pop %v1216
  %v1263 = vmul.f32 %v1216, %v1262
  %v1264 = vsub.f32 1.0, %v1263
  %v1265 = vmul.f32 %v1262, %v1264
  %v1266 = vadd.f32 %v1262, %v1265
  %vm1267 = vweird.f32 %v1216
  %vm1268 = vweird.f32 %v1262
  %vm1269 = vmor %vm1267, %vm1268
  %v1270 = vsel %vm1269, %v1262, %v1266
  %v1271 = vand.u32 2147483647, %v1216
  %vm1272 = vcmp.eq.f32.partialorder %v1271, 8.507059e+37
  %v1273 = vand.u32 %v1216, 2147483648
  %v1274 = vor.u32 1.1754944e-38, %v1273
  %v1275 = vsel %vm1272, %v1274, %v1270
  %v1276 = vmul.f32 1.0, %v1275
  %v1277 = vmul.f32 %v1173, %v1231
  %v1278 = vmul.f32 %v1196, %v1246
  %v1279 = vmul.f32 %v1176, %v1261
  %v1280 = vmul.f32 %v1199, %v1276
  %1281 = vmatpush.msra.mxu0 %v830
  %1282 = vmatpush.msra.mxu0 %v829
  %1283 = vmatpush.msra.mxu0 %v828
  %1284 = vmatpush.msra.mxu0 %v827
  %1285 = vmatpush.msra.mxu0 %v826
  %1286 = vmatpush.msra.mxu0 %v825
  %1287 = vmatpush.msra.mxu0 %v824
  %1288 = vmatpush.msra.mxu0 %v823
  %1289 = vmatpush.msra.mxu0 %v822
  %1290 = vmatpush.msra.mxu0 %v821
  %1291 = vmatpush.msra.mxu0 %v820
  %1292 = vmatpush.msra.mxu0 %v819
  %1293 = vmatpush.msra.mxu0 %v818
  %1294 = vmatpush.msra.mxu0 %v817
  %1295 = vmatpush.msra.mxu0 %v816
  %1296 = vmatpush.msra.mxu0 %v815
  %1297 = vmatmul.f32.gmra.mxu0 %v1277
  %v1298 = vpop.f32.mrf.mxu0
  %v1299 = vadd.f32 0.0, %v1298
  %1300 = vmatmul.f32.gmra.mxu0 %v1279
  %v1301 = vpop.f32.mrf.mxu0
  %v1302 = vadd.f32 0.0, %v1301
  %1303 = vdwg.mxu0
  %1304 = vmatpush.msra.mxu0 %v846
  %1305 = vmatpush.msra.mxu0 %v845
  %1306 = vmatpush.msra.mxu0 %v844
  %1307 = vmatpush.msra.mxu0 %v843
  %1308 = vmatpush.msra.mxu0 %v842
  %1309 = vmatpush.msra.mxu0 %v841
  %1310 = vmatpush.msra.mxu0 %v840
  %1311 = vmatpush.msra.mxu0 %v839
  %1312 = vmatpush.msra.mxu0 %v838
  %1313 = vmatpush.msra.mxu0 %v837
  %1314 = vmatpush.msra.mxu0 %v836
  %1315 = vmatpush.msra.mxu0 %v835
  %1316 = vmatpush.msra.mxu0 %v834
  %1317 = vmatpush.msra.mxu0 %v833
  %1318 = vmatpush.msra.mxu0 %v832
  %1319 = vmatpush.msra.mxu0 %v831
  %1320 = vmatmul.f32.gmra.mxu0 %v1278
  %v1321 = vpop.f32.mrf.mxu0
  %v1322 = vadd.f32 %v1299, %v1321
  %1323 = vmatmul.f32.gmra.mxu0 %v1280
  %v1324 = vpop.f32.mrf.mxu0
  %v1325 = vadd.f32 %v1302, %v1324
  %1326 = vdwg.mxu0
  %v1327 = vadd.f32 %v1088, %v1322
  %v1328 = vadd.f32 %v1089, %v1325
  %v1330 = vperm.slane %v847, 0
  %v1332 = vadd.f32 %v1327, %v1330
  %v1333 = vadd.f32 %v1328, %v1330
  %v1334 = vld [vmem:[%s57] sm:$0x1]
  %v1335 = vld [vmem:[%s59] sm:$0x1]
  %v1336 = vld [vmem:[%s61] sm:$0xff]
  %v1337 = vld [vmem:[%s61 + $0x8] sm:$0xff]
  %v1338 = vld [vmem:[%s61 + $0x10] sm:$0xff]
  %v1339 = vld [vmem:[%s61 + $0x18] sm:$0xff]
  %v1340 = vld [vmem:[%s61 + $0x20] sm:$0xff]
  %v1341 = vld [vmem:[%s61 + $0x28] sm:$0xff]
  %v1342 = vld [vmem:[%s61 + $0x30] sm:$0xff]
  %v1343 = vld [vmem:[%s61 + $0x38] sm:$0xff]
  %v1344 = vsel %vm136, %v1332, 0.0
  %1345 = vadd.xlane.f32.xlu0 %v1344
  %v1346 = vpop.xlane.xlu0 %1345
  %v1347 = vsel %vm140, %v1333, 0.0
  %1348 = vadd.xlane.f32.xlu0 %v1347
  %v1349 = vpop.xlane.xlu0 %1348
  %v1350 = vmul.f32 %v1346, %v150
  %v1351 = vmul.f32 %v1349, %v150
  %v1352 = vsub.f32 %v1332, %v1350
  %v1353 = vsub.f32 %v1333, %v1351
  %v1354 = vmul.f32 %v1352, %v1352
  %v1355 = vmul.f32 %v1353, %v1353
  %v1356 = vsel %vm136, %v1354, 0.0
  %1357 = vadd.xlane.f32.xlu0 %v1356
  %v1358 = vpop.xlane.xlu0 %1357
  %v1359 = vsel %vm140, %v1355, 0.0
  %1360 = vadd.xlane.f32.xlu0 %v1359
  %v1361 = vpop.xlane.xlu0 %1360
  %v1362 = vmul.f32 %v1358, %v150
  %v1363 = vmul.f32 %v1361, %v150
  %v1364 = vadd.f32 %v1362, 1e-05
  %v1365 = vadd.f32 %v1363, 1e-05
  %v1366 = vrsqrt.pop %v1364
  %v1367 = vmul.f32 %v1366, %v1364
  %v1368 = vmul.f32 %v1367, %v1366
  %v1369 = vmul.f32 0.5, %v1368
  %v1370 = vsub.f32 1.5, %v1369
  %v1371 = vmul.f32 %v1366, %v1370
  %vm1372 = vweird.f32 %v1364
  %vm1373 = vweird.f32 %v1366
  %vm1374 = vmor %vm1372, %vm1373
  %v1375 = vsel %vm1374, %v1366, %v1371
  %v1376 = vrsqrt.pop %v1365
  %v1377 = vmul.f32 %v1376, %v1365
  %v1378 = vmul.f32 %v1377, %v1376
  %v1379 = vmul.f32 0.5, %v1378
  %v1380 = vsub.f32 1.5, %v1379
  %v1381 = vmul.f32 %v1376, %v1380
  %vm1382 = vweird.f32 %v1365
  %vm1383 = vweird.f32 %v1376
  %vm1384 = vmor %vm1382, %vm1383
  %v1385 = vsel %vm1384, %v1376, %v1381
  %v1386 = vmul.f32 %v1352, %v1375
  %v1387 = vmul.f32 %v1353, %v1385
  %v1389 = vperm.slane %v1334, 0
  %v1391 = vmul.f32 %v1386, %v1389
  %v1392 = vmul.f32 %v1387, %v1389
  %v1394 = vperm.slane %v1335, 0
  %v1396 = vadd.f32 %v1391, %v1394
  %v1397 = vadd.f32 %v1392, %v1394
  %v1399 = vsel %vm136, %v1396, 0
  %v1402 = vsel %vm136, %v1397, 0
  %1404 = vmatpush.msra.mxu0 0.0
  %1405 = vmatpush.msra.mxu0 0.0
  %1406 = vmatpush.msra.mxu0 0.0
  %1407 = vmatpush.msra.mxu0 0.0
  %1408 = vmatpush.msra.mxu0 0.0
  %1409 = vmatpush.msra.mxu0 0.0
  %1410 = vmatpush.msra.mxu0 0.0
  %1411 = vmatpush.msra.mxu0 0.0
  %1412 = vmatpush.msra.mxu0 %v1343
  %1413 = vmatpush.msra.mxu0 %v1342
  %1414 = vmatpush.msra.mxu0 %v1341
  %1415 = vmatpush.msra.mxu0 %v1340
  %1416 = vmatpush.msra.mxu0 %v1339
  %1417 = vmatpush.msra.mxu0 %v1338
  %1418 = vmatpush.msra.mxu0 %v1337
  %1419 = vmatpush.msra.mxu0 %v1336
  %1420 = vmatmul.f32.gmra.mxu0 %v1399
  %v1421 = vpop.f32.mrf.mxu0
  %v1422 = vadd.f32 0.0, %v1421
  %1423 = vmatmul.f32.gmra.mxu0 %v1402
  %v1424 = vpop.f32.mrf.mxu0
  %v1425 = vadd.f32 0.0, %v1424
  %1426 = vdwg.mxu0
  %vm1427 = vcmask 261120
  %1428 = vst.msk [vmem:[%s63] sm:$0xff] %vm1427, %v1422
  %vm1429 = vcmask 254976
  %1430 = vst.msk [vmem:[%s63 + $0x8] sm:$0x3] %vm1429, %v1425
  // Predicated region
  $region126: #{clip_forward.5} parent=0 // pred_check
    _
  $region127: #{clip_forward.5} parent=0 // pred_check_branch
    %1432 = sbr.rel (0) target = $region129
  $region128: #{clip_forward.5} parent=0 // pred_region
    _
  $region129: #{clip_forward.5} parent=0 // pred_fallthru
    _
  // Predicated region
  $region130: #{clip_forward.5} parent=0 // pred_check
    _
  $region131: #{clip_forward.5} parent=0 // pred_check_branch
    %1434 = sbr.rel (0) target = $region133
  $region132: #{clip_forward.5} parent=0 // pred_region
    _
  $region133: #{clip_forward.5} parent=0 // pred_fallthru
    _

</llo_original>
